<compile_context>
chip_gen: v7x
topology: tpu7x:2x2x1
jax: 0.10.0
libtpu: 0.0.40
codegen_flags: <defaults>
</compile_context>

<pallas_src>
import jax
import jax.numpy as jnp
from jax.experimental import pallas as pl
from jax.experimental.pallas import tpu as pltpu

# Small, self-consistent shapes (embed_size == hidden_size is required by the
# original module: decoder1.attn expects cat(embed, hidden) of size 2*hidden).
S = 8          # encoder sequence length
B = 4          # batch size
H = 32         # embed_size == hidden_size
L = 2          # num LSTM layers
VOCAB = 50     # encoder vocab size
TGT = 6        # target_size for the pretraining decoder loop


# ---------------------------------------------------------------------------
# In-kernel multi-layer LSTM step.  h, c are Python lists of (B, H) values
# (mutated in place); w, b are lists of per-layer weight / bias values.
# ---------------------------------------------------------------------------
def _lstm_stack_step(inp, h, c, xh_buf, w, b):
    for l in range(L):
        # Build [x | h_l] in a (B, 2H) VMEM buffer -> one fused gate matmul.
        xh_buf[:, 0:H] = inp
        xh_buf[:, H:2 * H] = h[l]
        gates = (jnp.dot(xh_buf[...], w[l], preferred_element_type=jnp.float32)
                 + b[l])                                   # (B, 4H) == one vreg width
        sig = jax.nn.sigmoid(gates)                        # full-block EUP pass
        tnh = jnp.tanh(gates)                              # full-block EUP pass
        i_g = sig[:, 0 * H:1 * H]
        f_g = sig[:, 1 * H:2 * H]
        g_g = tnh[:, 2 * H:3 * H]
        o_g = sig[:, 3 * H:4 * H]
        c_new = f_g * c[l] + i_g * g_g
        h_new = o_g * jnp.tanh(c_new)
        h[l] = h_new
        c[l] = c_new
        inp = h_new
    return inp


# ---------------------------------------------------------------------------
# Single fused kernel: encoder (S steps) + decoder1 (TGT-1 steps), no grid.
# ---------------------------------------------------------------------------
def seq2seq_kernel(xemb_ref, h0_ref, c0_ref, enc_w_ref, enc_b_ref,
                   x0_ref, cwx_ref, cwa_ref, cb_ref, dec_w_ref, dec_b_ref,
                   pred_ref, xh_buf):
    # ----- encoder: state carried as values, outputs reduced on the fly -----
    h = [h0_ref[l] for l in range(L)]
    c = [c0_ref[l] for l in range(L)]
    enc_w = [enc_w_ref[l] for l in range(L)]
    enc_b = [enc_b_ref[l] for l in range(L)]

    enc_sum = jnp.zeros((B, H), jnp.float32)
    for n in range(S):
        top = _lstm_stack_step(xemb_ref[n], h, c, xh_buf, enc_w, enc_b)
        enc_sum = enc_sum + top          # running sum of encoder outputs

    # Decoder initial state: hidden = cell = hiddens[-1].  Initializing the cell
    # from the *hidden* state intentionally replicates the original PyTorch code
    # (`cell = encoder_hidden[-1]`).
    c = list(h)

    # Degenerate attention: decoder1.attn is Linear(2H, 1) followed by a softmax
    # over the size-1 last dim, so attn_weights == 1.0 and
    # attn_applied == sum_s enc_out[s], constant across decoder steps.
    # Hoist it (and its attn_combine half + bias) out of the loop -- exact.
    attn_term = (jnp.dot(enc_sum, cwa_ref[...],
                         preferred_element_type=jnp.float32)
                 + cb_ref[...])                            # (B, H)

    dec_w = [dec_w_ref[l] for l in range(L)]
    dec_b = [dec_b_ref[l] for l in range(L)]

    # ----- decoder1: TGT-1 steps, fully unrolled -----
    pred_ref[0] = jnp.zeros((B, H), jnp.float32)           # predictions[0] stays zero
    x = x0_ref[...]                                        # (B, H)
    for i in range(1, TGT):
        comb = (jnp.dot(x, cwx_ref[...], preferred_element_type=jnp.float32)
                + attn_term)                               # attn_combine(cat(x, attn))
        rnn_in = jnp.maximum(comb, 0.0)                    # relu
        x = _lstm_stack_step(rnn_in, h, c, xh_buf, dec_w, dec_b)
        pred_ref[i] = x


def run_seq2seq(x_emb, h0, c0, enc_w, enc_b, x0, cwx, cwa, cb, dec_w, dec_b):
    # No grid: every operand is a single full block resident in VMEM; one
    # writeback DMA for the whole (TGT, B, H) prediction tensor.
    return pl.pallas_call(
        seq2seq_kernel,
        out_shape=jax.ShapeDtypeStruct((TGT, B, H), jnp.float32),
        scratch_shapes=[pltpu.VMEM((B, 2 * H), jnp.float32)],   # [x | h] staging
    )(x_emb, h0, c0, enc_w, enc_b, x0, cwx, cwa, cb, dec_w, dec_b)


# ---------------------------------------------------------------------------
# Parameters + full forward (glue in plain JAX, hot path in Pallas).
# ---------------------------------------------------------------------------
def init_params(key):
    ks = list(jax.random.split(key, 13))
    u = lambda k, shape, s: jax.random.uniform(k, shape, jnp.float32, -s, s)
    sh = 1.0 / jnp.sqrt(H)
    s2h = 1.0 / jnp.sqrt(2.0 * H)
    return dict(
        emb=jax.random.normal(ks[0], (VOCAB, H), jnp.float32),       # nn.Embedding
        # LSTM weights pre-stacked as [W_ih; W_hh] -> (L, 2H, 4H); bias b_ih+b_hh.
        enc_w=u(ks[1], (L, 2 * H, 4 * H), sh),
        enc_b=u(ks[2], (L, 1, 4 * H), sh) + u(ks[3], (L, 1, 4 * H), sh),
        dec_w=u(ks[4], (L, 2 * H, 4 * H), sh),
        dec_b=u(ks[5], (L, 1, 4 * H), sh) + u(ks[6], (L, 1, 4 * H), sh),
        # decoder1.attn (Linear(2H,1)).  Its softmax is over a size-1 dim, so the
        # output is identically 1.0 and these weights cannot affect the forward
        # pass; kept only for the faithful pure-JAX reference below.
        attn_w=u(ks[7], (2 * H, 1), s2h),
        attn_b=u(ks[8], (1, 1), s2h),
        # decoder1.attn_combine (Linear(2H,H)) split into embedding / attn halves.
        comb_wx=u(ks[9], (H, H), s2h),
        comb_wa=u(ks[10], (H, H), s2h),
        comb_b=u(ks[11], (1, H), s2h),
        concepts0=jax.random.normal(ks[12], (H,), jnp.float32),      # dataset.concepts[0][0]
    )


@jax.jit
def seq2seq_forward(p, source, h0, c0):
    """Pretraining forward pass.  Returns predictions (TGT, 1, B, H)."""
    x_emb = jnp.take(p["emb"], source, axis=0)                 # (S, B, H); dropout = id
    # x = concepts[0][0].view(-1,1) @ ones(1,B) ; x = x.T  -> (B, H)
    x0 = jnp.broadcast_to(p["concepts0"][None, :], (B, H)).astype(jnp.float32)
    preds = run_seq2seq(x_emb, h0, c0,
                        p["enc_w"], p["enc_b"], x0,
                        p["comb_wx"], p["comb_wa"], p["comb_b"],
                        p["dec_w"], p["dec_b"])                # (TGT, B, H)
    return preds[:, None, :, :]                                # (TGT, 1, B, H)


# ---------------------------------------------------------------------------
# Pure-JAX reference (faithful math, incl. the per-step degenerate softmax
# attention) for a correctness check of the hoisted/fused kernel.
# ---------------------------------------------------------------------------
def _ref_lstm_step(x, h, c, w, b):
    hs, cs = [], []
    inp = x
    for l in range(L):
        g = jnp.concatenate([inp, h[l]], axis=-1) @ w[l] + b[l]
        i_g = jax.nn.sigmoid(g[:, :H])
        f_g = jax.nn.sigmoid(g[:, H:2 * H])
        g_g = jnp.tanh(g[:, 2 * H:3 * H])
        o_g = jax.nn.sigmoid(g[:, 3 * H:])
        c_new = f_g * c[l] + i_g * g_g
        h_new = o_g * jnp.tanh(c_new)
        hs.append(h_new)
        cs.append(c_new)
        inp = h_new
    return inp, jnp.stack(hs), jnp.stack(cs)


def ref_forward(p, source, h0, c0):
    emb = jnp.take(p["emb"], source, axis=0)
    h, c = h0, c0
    outs = []
    for n in range(S):
        top, h, c = _ref_lstm_step(emb[n], h, c, p["enc_w"], p["enc_b"])
        outs.append(top)
    enc_out = jnp.stack(outs)                 # (S, B, H)
    enc_hidden = h[-1]                        # (B, H)
    dec_h = h
    dec_c = h                                 # replicates `cell = encoder_hidden[-1]`
    x = jnp.broadcast_to(p["concepts0"][None, :], (B, H))
    preds = [jnp.zeros((B, H), jnp.float32)]
    for _ in range(1, TGT):
        logit = jnp.concatenate([x, enc_hidden], axis=-1) @ p["attn_w"] + p["attn_b"]
        attn_w = jax.nn.softmax(logit, axis=-1)               # size-1 dim -> all ones
        attn_applied = jnp.sum(attn_w[None] * enc_out, axis=0)
        rnn_in = jnp.maximum(
            x @ p["comb_wx"] + attn_applied @ p["comb_wa"] + p["comb_b"], 0.0)
        top, dec_h, dec_c = _ref_lstm_step(rnn_in, dec_h, dec_c,
                                           p["dec_w"], p["dec_b"])
        x = top
        preds.append(top)
    return jnp.stack(preds)[:, None, :, :]


if __name__ == "__main__":
    key = jax.random.PRNGKey(0)
    k_param, k_src, k_h, k_c = jax.random.split(key, 4)
    params = init_params(k_param)
    source = jax.random.randint(k_src, (S, B), 0, VOCAB, dtype=jnp.int32)
    # torch.randn initial encoder state, made deterministic:
    h0 = jax.random.normal(k_h, (L, B, H), jnp.float32)
    c0 = jax.random.normal(k_c, (L, B, H), jnp.float32)

    predictions = jax.block_until_ready(seq2seq_forward(params, source, h0, c0))
    assert predictions.shape == (TGT, 1, B, H), predictions.shape

    ref = jax.block_until_ready(ref_forward(params, source, h0, c0))
    assert jnp.allclose(predictions, ref, atol=2e-3, rtol=2e-3), (
        float(jnp.max(jnp.abs(predictions - ref))))

    print("KERNEL_OK")
</pallas_src>

<mosaic_0001>
module attributes {stable_mosaic.version = 11 : i64} {
  func.func @seq2seq_kernel(%arg0: memref<8x4x32xf32, #tpu.memory_space<vmem>>, %arg1: memref<2x4x32xf32, #tpu.memory_space<vmem>>, %arg2: memref<2x4x32xf32, #tpu.memory_space<vmem>>, %arg3: memref<2x64x128xf32, #tpu.memory_space<vmem>>, %arg4: memref<2x1x128xf32, #tpu.memory_space<vmem>>, %arg5: memref<4x32xf32, #tpu.memory_space<vmem>>, %arg6: memref<32x32xf32, #tpu.memory_space<vmem>>, %arg7: memref<32x32xf32, #tpu.memory_space<vmem>>, %arg8: memref<1x32xf32, #tpu.memory_space<vmem>>, %arg9: memref<2x64x128xf32, #tpu.memory_space<vmem>>, %arg10: memref<2x1x128xf32, #tpu.memory_space<vmem>>, %arg11: memref<6x4x32xf32, #tpu.memory_space<vmem>>, %arg12: memref<4x64xf32, #tpu.memory_space<vmem>>) attributes {dimension_semantics = [], scalar_prefetch = 0 : i64, scratch_operands = 1 : i64, tpu.core_type = #tpu.core_type<tc>} {
    %c0 = arith.constant 0 : index
    %c0_0 = arith.constant 0 : index
    %c0_1 = arith.constant 0 : index
    %0 = vector.load %arg1[%c0, %c0_0, %c0_1] : memref<2x4x32xf32, #tpu.memory_space<vmem>>, vector<1x4x32xf32>
    %1 = vector.shape_cast %0 : vector<1x4x32xf32> to vector<4x32xf32>
    %c1 = arith.constant 1 : index
    %c0_2 = arith.constant 0 : index
    %c0_3 = arith.constant 0 : index
    %2 = vector.load %arg1[%c1, %c0_2, %c0_3] : memref<2x4x32xf32, #tpu.memory_space<vmem>>, vector<1x4x32xf32>
    %3 = vector.shape_cast %2 : vector<1x4x32xf32> to vector<4x32xf32>
    %c0_4 = arith.constant 0 : index
    %c0_5 = arith.constant 0 : index
    %c0_6 = arith.constant 0 : index
    %4 = vector.load %arg2[%c0_4, %c0_5, %c0_6] : memref<2x4x32xf32, #tpu.memory_space<vmem>>, vector<1x4x32xf32>
    %5 = vector.shape_cast %4 : vector<1x4x32xf32> to vector<4x32xf32>
    %c1_7 = arith.constant 1 : index
    %c0_8 = arith.constant 0 : index
    %c0_9 = arith.constant 0 : index
    %6 = vector.load %arg2[%c1_7, %c0_8, %c0_9] : memref<2x4x32xf32, #tpu.memory_space<vmem>>, vector<1x4x32xf32>
    %7 = vector.shape_cast %6 : vector<1x4x32xf32> to vector<4x32xf32>
    %c0_10 = arith.constant 0 : index
    %c0_11 = arith.constant 0 : index
    %c0_12 = arith.constant 0 : index
    %8 = vector.load %arg3[%c0_10, %c0_11, %c0_12] : memref<2x64x128xf32, #tpu.memory_space<vmem>>, vector<1x64x128xf32>
    %9 = vector.shape_cast %8 : vector<1x64x128xf32> to vector<64x128xf32>
    %c1_13 = arith.constant 1 : index
    %c0_14 = arith.constant 0 : index
    %c0_15 = arith.constant 0 : index
    %10 = vector.load %arg3[%c1_13, %c0_14, %c0_15] : memref<2x64x128xf32, #tpu.memory_space<vmem>>, vector<1x64x128xf32>
    %11 = vector.shape_cast %10 : vector<1x64x128xf32> to vector<64x128xf32>
    %c0_16 = arith.constant 0 : index
    %c0_17 = arith.constant 0 : index
    %c0_18 = arith.constant 0 : index
    %12 = vector.load %arg4[%c0_16, %c0_17, %c0_18] : memref<2x1x128xf32, #tpu.memory_space<vmem>>, vector<1x1x128xf32>
    %13 = vector.shape_cast %12 : vector<1x1x128xf32> to vector<1x128xf32>
    %c1_19 = arith.constant 1 : index
    %c0_20 = arith.constant 0 : index
    %c0_21 = arith.constant 0 : index
    %14 = vector.load %arg4[%c1_19, %c0_20, %c0_21] : memref<2x1x128xf32, #tpu.memory_space<vmem>>, vector<1x1x128xf32>
    %15 = vector.shape_cast %14 : vector<1x1x128xf32> to vector<1x128xf32>
    %cst = arith.constant 0.000000e+00 : f32
    %16 = vector.broadcast %cst : f32 to vector<4x32xf32>
    %c0_22 = arith.constant 0 : index
    %c0_23 = arith.constant 0 : index
    %c0_24 = arith.constant 0 : index
    %17 = vector.load %arg0[%c0_22, %c0_23, %c0_24] : memref<8x4x32xf32, #tpu.memory_space<vmem>>, vector<1x4x32xf32>
    %18 = vector.shape_cast %17 : vector<1x4x32xf32> to vector<4x32xf32>
    %c0_25 = arith.constant 0 : index
    %c0_26 = arith.constant 0 : index
    %19 = vector.load %arg12[%c0_25, %c0_26] : memref<4x64xf32, #tpu.memory_space<vmem>>, vector<4x32xf32>
    tpu.vector_store %arg12[%c0_25, %c0_26], %18 {strides = array<i32>} : memref<4x64xf32, #tpu.memory_space<vmem>>, vector<4x32xf32>,
    %c0_27 = arith.constant 0 : index
    %c32 = arith.constant 32 : index
    %20 = vector.load %arg12[%c0_27, %c32] : memref<4x64xf32, #tpu.memory_space<vmem>>, vector<4x32xf32>
    tpu.vector_store %arg12[%c0_27, %c32], %1 {strides = array<i32>} : memref<4x64xf32, #tpu.memory_space<vmem>>, vector<4x32xf32>,
    %c0_28 = arith.constant 0 : index
    %c0_29 = arith.constant 0 : index
    %21 = vector.load %arg12[%c0_28, %c0_29] : memref<4x64xf32, #tpu.memory_space<vmem>>, vector<4x64xf32>
    %cst_30 = arith.constant dense<0.000000e+00> : vector<4x128xf32>
    %22 = tpu.matmul %21, %9, %cst_30 {dimension_numbers = #tpu.dot_dimension_numbers<[1], [0], [0], [1], [0, 0, 1, 1], [], []>} : vector<4x64xf32>, vector<64x128xf32>, vector<4x128xf32> -> vector<4x128xf32>
    %23 = vector.broadcast %13 : vector<1x128xf32> to vector<4x128xf32>
    %24 = arith.addf %22, %23 : vector<4x128xf32>
    %25 = arith.negf %24 : vector<4x128xf32>
    %26 = math.exp %25 : vector<4x128xf32>
    %cst_31 = arith.constant 1.000000e+00 : f32
    %27 = vector.broadcast %cst_31 : f32 to vector<4x128xf32>
    %28 = arith.addf %27, %26 : vector<4x128xf32>
    %29 = arith.divf %27, %28 : vector<4x128xf32>
    %30 = math.tanh %24 : vector<4x128xf32>
    %31 = vector.extract_strided_slice %29 {offsets = [0, 0], sizes = [4, 32], strides = [1, 1]} : vector<4x128xf32> to vector<4x32xf32>
    %32 = vector.extract_strided_slice %29 {offsets = [0, 32], sizes = [4, 32], strides = [1, 1]} : vector<4x128xf32> to vector<4x32xf32>
    %33 = vector.extract_strided_slice %30 {offsets = [0, 64], sizes = [4, 32], strides = [1, 1]} : vector<4x128xf32> to vector<4x32xf32>
    %34 = vector.extract_strided_slice %29 {offsets = [0, 96], sizes = [4, 32], strides = [1, 1]} : vector<4x128xf32> to vector<4x32xf32>
    %35 = arith.mulf %32, %5 : vector<4x32xf32>
    %36 = arith.mulf %31, %33 : vector<4x32xf32>
    %37 = arith.addf %35, %36 : vector<4x32xf32>
    %38 = math.tanh %37 : vector<4x32xf32>
    %39 = arith.mulf %34, %38 : vector<4x32xf32>
    %c0_32 = arith.constant 0 : index
    %c0_33 = arith.constant 0 : index
    %40 = vector.load %arg12[%c0_32, %c0_33] : memref<4x64xf32, #tpu.memory_space<vmem>>, vector<4x32xf32>
    tpu.vector_store %arg12[%c0_32, %c0_33], %39 {strides = array<i32>} : memref<4x64xf32, #tpu.memory_space<vmem>>, vector<4x32xf32>,
    %c0_34 = arith.constant 0 : index
    %c32_35 = arith.constant 32 : index
    %41 = vector.load %arg12[%c0_34, %c32_35] : memref<4x64xf32, #tpu.memory_space<vmem>>, vector<4x32xf32>
    tpu.vector_store %arg12[%c0_34, %c32_35], %3 {strides = array<i32>} : memref<4x64xf32, #tpu.memory_space<vmem>>, vector<4x32xf32>,
    %c0_36 = arith.constant 0 : index
    %c0_37 = arith.constant 0 : index
    %42 = vector.load %arg12[%c0_36, %c0_37] : memref<4x64xf32, #tpu.memory_space<vmem>>, vector<4x64xf32>
    %cst_38 = arith.constant dense<0.000000e+00> : vector<4x128xf32>
    %43 = tpu.matmul %42, %11, %cst_38 {dimension_numbers = #tpu.dot_dimension_numbers<[1], [0], [0], [1], [0, 0, 1, 1], [], []>} : vector<4x64xf32>, vector<64x128xf32>, vector<4x128xf32> -> vector<4x128xf32>
    %44 = vector.broadcast %15 : vector<1x128xf32> to vector<4x128xf32>
    %45 = arith.addf %43, %44 : vector<4x128xf32>
    %46 = arith.negf %45 : vector<4x128xf32>
    %47 = math.exp %46 : vector<4x128xf32>
    %cst_39 = arith.constant 1.000000e+00 : f32
    %48 = vector.broadcast %cst_39 : f32 to vector<4x128xf32>
    %49 = arith.addf %48, %47 : vector<4x128xf32>
    %50 = arith.divf %48, %49 : vector<4x128xf32>
    %51 = math.tanh %45 : vector<4x128xf32>
    %52 = vector.extract_strided_slice %50 {offsets = [0, 0], sizes = [4, 32], strides = [1, 1]} : vector<4x128xf32> to vector<4x32xf32>
    %53 = vector.extract_strided_slice %50 {offsets = [0, 32], sizes = [4, 32], strides = [1, 1]} : vector<4x128xf32> to vector<4x32xf32>
    %54 = vector.extract_strided_slice %51 {offsets = [0, 64], sizes = [4, 32], strides = [1, 1]} : vector<4x128xf32> to vector<4x32xf32>
    %55 = vector.extract_strided_slice %50 {offsets = [0, 96], sizes = [4, 32], strides = [1, 1]} : vector<4x128xf32> to vector<4x32xf32>
    %56 = arith.mulf %53, %7 : vector<4x32xf32>
    %57 = arith.mulf %52, %54 : vector<4x32xf32>
    %58 = arith.addf %56, %57 : vector<4x32xf32>
    %59 = math.tanh %58 : vector<4x32xf32>
    %60 = arith.mulf %55, %59 : vector<4x32xf32>
    %61 = arith.addf %16, %60 : vector<4x32xf32>
    %c1_40 = arith.constant 1 : index
    %c0_41 = arith.constant 0 : index
    %c0_42 = arith.constant 0 : index
    %62 = vector.load %arg0[%c1_40, %c0_41, %c0_42] : memref<8x4x32xf32, #tpu.memory_space<vmem>>, vector<1x4x32xf32>
    %63 = vector.shape_cast %62 : vector<1x4x32xf32> to vector<4x32xf32>
    %c0_43 = arith.constant 0 : index
    %c0_44 = arith.constant 0 : index
    %64 = vector.load %arg12[%c0_43, %c0_44] : memref<4x64xf32, #tpu.memory_space<vmem>>, vector<4x32xf32>
    tpu.vector_store %arg12[%c0_43, %c0_44], %63 {strides = array<i32>} : memref<4x64xf32, #tpu.memory_space<vmem>>, vector<4x32xf32>,
    %c0_45 = arith.constant 0 : index
    %c32_46 = arith.constant 32 : index
    %65 = vector.load %arg12[%c0_45, %c32_46] : memref<4x64xf32, #tpu.memory_space<vmem>>, vector<4x32xf32>
    tpu.vector_store %arg12[%c0_45, %c32_46], %39 {strides = array<i32>} : memref<4x64xf32, #tpu.memory_space<vmem>>, vector<4x32xf32>,
    %c0_47 = arith.constant 0 : index
    %c0_48 = arith.constant 0 : index
    %66 = vector.load %arg12[%c0_47, %c0_48] : memref<4x64xf32, #tpu.memory_space<vmem>>, vector<4x64xf32>
    %cst_49 = arith.constant dense<0.000000e+00> : vector<4x128xf32>
    %67 = tpu.matmul %66, %9, %cst_49 {dimension_numbers = #tpu.dot_dimension_numbers<[1], [0], [0], [1], [0, 0, 1, 1], [], []>} : vector<4x64xf32>, vector<64x128xf32>, vector<4x128xf32> -> vector<4x128xf32>
    %68 = vector.broadcast %13 : vector<1x128xf32> to vector<4x128xf32>
    %69 = arith.addf %67, %68 : vector<4x128xf32>
    %70 = arith.negf %69 : vector<4x128xf32>
    %71 = math.exp %70 : vector<4x128xf32>
    %cst_50 = arith.constant 1.000000e+00 : f32
    %72 = vector.broadcast %cst_50 : f32 to vector<4x128xf32>
    %73 = arith.addf %72, %71 : vector<4x128xf32>
    %74 = arith.divf %72, %73 : vector<4x128xf32>
    %75 = math.tanh %69 : vector<4x128xf32>
    %76 = vector.extract_strided_slice %74 {offsets = [0, 0], sizes = [4, 32], strides = [1, 1]} : vector<4x128xf32> to vector<4x32xf32>
    %77 = vector.extract_strided_slice %74 {offsets = [0, 32], sizes = [4, 32], strides = [1, 1]} : vector<4x128xf32> to vector<4x32xf32>
    %78 = vector.extract_strided_slice %75 {offsets = [0, 64], sizes = [4, 32], strides = [1, 1]} : vector<4x128xf32> to vector<4x32xf32>
    %79 = vector.extract_strided_slice %74 {offsets = [0, 96], sizes = [4, 32], strides = [1, 1]} : vector<4x128xf32> to vector<4x32xf32>
    %80 = arith.mulf %77, %37 : vector<4x32xf32>
    %81 = arith.mulf %76, %78 : vector<4x32xf32>
    %82 = arith.addf %80, %81 : vector<4x32xf32>
    %83 = math.tanh %82 : vector<4x32xf32>
    %84 = arith.mulf %79, %83 : vector<4x32xf32>
    %c0_51 = arith.constant 0 : index
    %c0_52 = arith.constant 0 : index
    %85 = vector.load %arg12[%c0_51, %c0_52] : memref<4x64xf32, #tpu.memory_space<vmem>>, vector<4x32xf32>
    tpu.vector_store %arg12[%c0_51, %c0_52], %84 {strides = array<i32>} : memref<4x64xf32, #tpu.memory_space<vmem>>, vector<4x32xf32>,
    %c0_53 = arith.constant 0 : index
    %c32_54 = arith.constant 32 : index
    %86 = vector.load %arg12[%c0_53, %c32_54] : memref<4x64xf32, #tpu.memory_space<vmem>>, vector<4x32xf32>
    tpu.vector_store %arg12[%c0_53, %c32_54], %60 {strides = array<i32>} : memref<4x64xf32, #tpu.memory_space<vmem>>, vector<4x32xf32>,
    %c0_55 = arith.constant 0 : index
    %c0_56 = arith.constant 0 : index
    %87 = vector.load %arg12[%c0_55, %c0_56] : memref<4x64xf32, #tpu.memory_space<vmem>>, vector<4x64xf32>
    %cst_57 = arith.constant dense<0.000000e+00> : vector<4x128xf32>
    %88 = tpu.matmul %87, %11, %cst_57 {dimension_numbers = #tpu.dot_dimension_numbers<[1], [0], [0], [1], [0, 0, 1, 1], [], []>} : vector<4x64xf32>, vector<64x128xf32>, vector<4x128xf32> -> vector<4x128xf32>
    %89 = vector.broadcast %15 : vector<1x128xf32> to vector<4x128xf32>
    %90 = arith.addf %88, %89 : vector<4x128xf32>
    %91 = arith.negf %90 : vector<4x128xf32>
    %92 = math.exp %91 : vector<4x128xf32>
    %cst_58 = arith.constant 1.000000e+00 : f32
    %93 = vector.broadcast %cst_58 : f32 to vector<4x128xf32>
    %94 = arith.addf %93, %92 : vector<4x128xf32>
    %95 = arith.divf %93, %94 : vector<4x128xf32>
    %96 = math.tanh %90 : vector<4x128xf32>
    %97 = vector.extract_strided_slice %95 {offsets = [0, 0], sizes = [4, 32], strides = [1, 1]} : vector<4x128xf32> to vector<4x32xf32>
    %98 = vector.extract_strided_slice %95 {offsets = [0, 32], sizes = [4, 32], strides = [1, 1]} : vector<4x128xf32> to vector<4x32xf32>
    %99 = vector.extract_strided_slice %96 {offsets = [0, 64], sizes = [4, 32], strides = [1, 1]} : vector<4x128xf32> to vector<4x32xf32>
    %100 = vector.extract_strided_slice %95 {offsets = [0, 96], sizes = [4, 32], strides = [1, 1]} : vector<4x128xf32> to vector<4x32xf32>
    %101 = arith.mulf %98, %58 : vector<4x32xf32>
    %102 = arith.mulf %97, %99 : vector<4x32xf32>
    %103 = arith.addf %101, %102 : vector<4x32xf32>
    %104 = math.tanh %103 : vector<4x32xf32>
    %105 = arith.mulf %100, %104 : vector<4x32xf32>
    %106 = arith.addf %61, %105 : vector<4x32xf32>
    %c2 = arith.constant 2 : index
    %c0_59 = arith.constant 0 : index
    %c0_60 = arith.constant 0 : index
    %107 = vector.load %arg0[%c2, %c0_59, %c0_60] : memref<8x4x32xf32, #tpu.memory_space<vmem>>, vector<1x4x32xf32>
    %108 = vector.shape_cast %107 : vector<1x4x32xf32> to vector<4x32xf32>
    %c0_61 = arith.constant 0 : index
    %c0_62 = arith.constant 0 : index
    %109 = vector.load %arg12[%c0_61, %c0_62] : memref<4x64xf32, #tpu.memory_space<vmem>>, vector<4x32xf32>
    tpu.vector_store %arg12[%c0_61, %c0_62], %108 {strides = array<i32>} : memref<4x64xf32, #tpu.memory_space<vmem>>, vector<4x32xf32>,
    %c0_63 = arith.constant 0 : index
    %c32_64 = arith.constant 32 : index
    %110 = vector.load %arg12[%c0_63, %c32_64] : memref<4x64xf32, #tpu.memory_space<vmem>>, vector<4x32xf32>
    tpu.vector_store %arg12[%c0_63, %c32_64], %84 {strides = array<i32>} : memref<4x64xf32, #tpu.memory_space<vmem>>, vector<4x32xf32>,
    %c0_65 = arith.constant 0 : index
    %c0_66 = arith.constant 0 : index
    %111 = vector.load %arg12[%c0_65, %c0_66] : memref<4x64xf32, #tpu.memory_space<vmem>>, vector<4x64xf32>
    %cst_67 = arith.constant dense<0.000000e+00> : vector<4x128xf32>
    %112 = tpu.matmul %111, %9, %cst_67 {dimension_numbers = #tpu.dot_dimension_numbers<[1], [0], [0], [1], [0, 0, 1, 1], [], []>} : vector<4x64xf32>, vector<64x128xf32>, vector<4x128xf32> -> vector<4x128xf32>
    %113 = vector.broadcast %13 : vector<1x128xf32> to vector<4x128xf32>
    %114 = arith.addf %112, %113 : vector<4x128xf32>
    %115 = arith.negf %114 : vector<4x128xf32>
    %116 = math.exp %115 : vector<4x128xf32>
    %cst_68 = arith.constant 1.000000e+00 : f32
    %117 = vector.broadcast %cst_68 : f32 to vector<4x128xf32>
    %118 = arith.addf %117, %116 : vector<4x128xf32>
    %119 = arith.divf %117, %118 : vector<4x128xf32>
    %120 = math.tanh %114 : vector<4x128xf32>
    %121 = vector.extract_strided_slice %119 {offsets = [0, 0], sizes = [4, 32], strides = [1, 1]} : vector<4x128xf32> to vector<4x32xf32>
    %122 = vector.extract_strided_slice %119 {offsets = [0, 32], sizes = [4, 32], strides = [1, 1]} : vector<4x128xf32> to vector<4x32xf32>
    %123 = vector.extract_strided_slice %120 {offsets = [0, 64], sizes = [4, 32], strides = [1, 1]} : vector<4x128xf32> to vector<4x32xf32>
    %124 = vector.extract_strided_slice %119 {offsets = [0, 96], sizes = [4, 32], strides = [1, 1]} : vector<4x128xf32> to vector<4x32xf32>
    %125 = arith.mulf %122, %82 : vector<4x32xf32>
    %126 = arith.mulf %121, %123 : vector<4x32xf32>
    %127 = arith.addf %125, %126 : vector<4x32xf32>
    %128 = math.tanh %127 : vector<4x32xf32>
    %129 = arith.mulf %124, %128 : vector<4x32xf32>
    %c0_69 = arith.constant 0 : index
    %c0_70 = arith.constant 0 : index
    %130 = vector.load %arg12[%c0_69, %c0_70] : memref<4x64xf32, #tpu.memory_space<vmem>>, vector<4x32xf32>
    tpu.vector_store %arg12[%c0_69, %c0_70], %129 {strides = array<i32>} : memref<4x64xf32, #tpu.memory_space<vmem>>, vector<4x32xf32>,
    %c0_71 = arith.constant 0 : index
    %c32_72 = arith.constant 32 : index
    %131 = vector.load %arg12[%c0_71, %c32_72] : memref<4x64xf32, #tpu.memory_space<vmem>>, vector<4x32xf32>
    tpu.vector_store %arg12[%c0_71, %c32_72], %105 {strides = array<i32>} : memref<4x64xf32, #tpu.memory_space<vmem>>, vector<4x32xf32>,
    %c0_73 = arith.constant 0 : index
    %c0_74 = arith.constant 0 : index
    %132 = vector.load %arg12[%c0_73, %c0_74] : memref<4x64xf32, #tpu.memory_space<vmem>>, vector<4x64xf32>
    %cst_75 = arith.constant dense<0.000000e+00> : vector<4x128xf32>
    %133 = tpu.matmul %132, %11, %cst_75 {dimension_numbers = #tpu.dot_dimension_numbers<[1], [0], [0], [1], [0, 0, 1, 1], [], []>} : vector<4x64xf32>, vector<64x128xf32>, vector<4x128xf32> -> vector<4x128xf32>
    %134 = vector.broadcast %15 : vector<1x128xf32> to vector<4x128xf32>
    %135 = arith.addf %133, %134 : vector<4x128xf32>
    %136 = arith.negf %135 : vector<4x128xf32>
    %137 = math.exp %136 : vector<4x128xf32>
    %cst_76 = arith.constant 1.000000e+00 : f32
    %138 = vector.broadcast %cst_76 : f32 to vector<4x128xf32>
    %139 = arith.addf %138, %137 : vector<4x128xf32>
    %140 = arith.divf %138, %139 : vector<4x128xf32>
    %141 = math.tanh %135 : vector<4x128xf32>
    %142 = vector.extract_strided_slice %140 {offsets = [0, 0], sizes = [4, 32], strides = [1, 1]} : vector<4x128xf32> to vector<4x32xf32>
    %143 = vector.extract_strided_slice %140 {offsets = [0, 32], sizes = [4, 32], strides = [1, 1]} : vector<4x128xf32> to vector<4x32xf32>
    %144 = vector.extract_strided_slice %141 {offsets = [0, 64], sizes = [4, 32], strides = [1, 1]} : vector<4x128xf32> to vector<4x32xf32>
    %145 = vector.extract_strided_slice %140 {offsets = [0, 96], sizes = [4, 32], strides = [1, 1]} : vector<4x128xf32> to vector<4x32xf32>
    %146 = arith.mulf %143, %103 : vector<4x32xf32>
    %147 = arith.mulf %142, %144 : vector<4x32xf32>
    %148 = arith.addf %146, %147 : vector<4x32xf32>
    %149 = math.tanh %148 : vector<4x32xf32>
    %150 = arith.mulf %145, %149 : vector<4x32xf32>
    %151 = arith.addf %106, %150 : vector<4x32xf32>
    %c3 = arith.constant 3 : index
    %c0_77 = arith.constant 0 : index
    %c0_78 = arith.constant 0 : index
    %152 = vector.load %arg0[%c3, %c0_77, %c0_78] : memref<8x4x32xf32, #tpu.memory_space<vmem>>, vector<1x4x32xf32>
    %153 = vector.shape_cast %152 : vector<1x4x32xf32> to vector<4x32xf32>
    %c0_79 = arith.constant 0 : index
    %c0_80 = arith.constant 0 : index
    %154 = vector.load %arg12[%c0_79, %c0_80] : memref<4x64xf32, #tpu.memory_space<vmem>>, vector<4x32xf32>
    tpu.vector_store %arg12[%c0_79, %c0_80], %153 {strides = array<i32>} : memref<4x64xf32, #tpu.memory_space<vmem>>, vector<4x32xf32>,
    %c0_81 = arith.constant 0 : index
    %c32_82 = arith.constant 32 : index
    %155 = vector.load %arg12[%c0_81, %c32_82] : memref<4x64xf32, #tpu.memory_space<vmem>>, vector<4x32xf32>
    tpu.vector_store %arg12[%c0_81, %c32_82], %129 {strides = array<i32>} : memref<4x64xf32, #tpu.memory_space<vmem>>, vector<4x32xf32>,
    %c0_83 = arith.constant 0 : index
    %c0_84 = arith.constant 0 : index
    %156 = vector.load %arg12[%c0_83, %c0_84] : memref<4x64xf32, #tpu.memory_space<vmem>>, vector<4x64xf32>
    %cst_85 = arith.constant dense<0.000000e+00> : vector<4x128xf32>
    %157 = tpu.matmul %156, %9, %cst_85 {dimension_numbers = #tpu.dot_dimension_numbers<[1], [0], [0], [1], [0, 0, 1, 1], [], []>} : vector<4x64xf32>, vector<64x128xf32>, vector<4x128xf32> -> vector<4x128xf32>
    %158 = vector.broadcast %13 : vector<1x128xf32> to vector<4x128xf32>
    %159 = arith.addf %157, %158 : vector<4x128xf32>
    %160 = arith.negf %159 : vector<4x128xf32>
    %161 = math.exp %160 : vector<4x128xf32>
    %cst_86 = arith.constant 1.000000e+00 : f32
    %162 = vector.broadcast %cst_86 : f32 to vector<4x128xf32>
    %163 = arith.addf %162, %161 : vector<4x128xf32>
    %164 = arith.divf %162, %163 : vector<4x128xf32>
    %165 = math.tanh %159 : vector<4x128xf32>
    %166 = vector.extract_strided_slice %164 {offsets = [0, 0], sizes = [4, 32], strides = [1, 1]} : vector<4x128xf32> to vector<4x32xf32>
    %167 = vector.extract_strided_slice %164 {offsets = [0, 32], sizes = [4, 32], strides = [1, 1]} : vector<4x128xf32> to vector<4x32xf32>
    %168 = vector.extract_strided_slice %165 {offsets = [0, 64], sizes = [4, 32], strides = [1, 1]} : vector<4x128xf32> to vector<4x32xf32>
    %169 = vector.extract_strided_slice %164 {offsets = [0, 96], sizes = [4, 32], strides = [1, 1]} : vector<4x128xf32> to vector<4x32xf32>
    %170 = arith.mulf %167, %127 : vector<4x32xf32>
    %171 = arith.mulf %166, %168 : vector<4x32xf32>
    %172 = arith.addf %170, %171 : vector<4x32xf32>
    %173 = math.tanh %172 : vector<4x32xf32>
    %174 = arith.mulf %169, %173 : vector<4x32xf32>
    %c0_87 = arith.constant 0 : index
    %c0_88 = arith.constant 0 : index
    %175 = vector.load %arg12[%c0_87, %c0_88] : memref<4x64xf32, #tpu.memory_space<vmem>>, vector<4x32xf32>
    tpu.vector_store %arg12[%c0_87, %c0_88], %174 {strides = array<i32>} : memref<4x64xf32, #tpu.memory_space<vmem>>, vector<4x32xf32>,
    %c0_89 = arith.constant 0 : index
    %c32_90 = arith.constant 32 : index
    %176 = vector.load %arg12[%c0_89, %c32_90] : memref<4x64xf32, #tpu.memory_space<vmem>>, vector<4x32xf32>
    tpu.vector_store %arg12[%c0_89, %c32_90], %150 {strides = array<i32>} : memref<4x64xf32, #tpu.memory_space<vmem>>, vector<4x32xf32>,
    %c0_91 = arith.constant 0 : index
    %c0_92 = arith.constant 0 : index
    %177 = vector.load %arg12[%c0_91, %c0_92] : memref<4x64xf32, #tpu.memory_space<vmem>>, vector<4x64xf32>
    %cst_93 = arith.constant dense<0.000000e+00> : vector<4x128xf32>
    %178 = tpu.matmul %177, %11, %cst_93 {dimension_numbers = #tpu.dot_dimension_numbers<[1], [0], [0], [1], [0, 0, 1, 1], [], []>} : vector<4x64xf32>, vector<64x128xf32>, vector<4x128xf32> -> vector<4x128xf32>
    %179 = vector.broadcast %15 : vector<1x128xf32> to vector<4x128xf32>
    %180 = arith.addf %178, %179 : vector<4x128xf32>
    %181 = arith.negf %180 : vector<4x128xf32>
    %182 = math.exp %181 : vector<4x128xf32>
    %cst_94 = arith.constant 1.000000e+00 : f32
    %183 = vector.broadcast %cst_94 : f32 to vector<4x128xf32>
    %184 = arith.addf %183, %182 : vector<4x128xf32>
    %185 = arith.divf %183, %184 : vector<4x128xf32>
    %186 = math.tanh %180 : vector<4x128xf32>
    %187 = vector.extract_strided_slice %185 {offsets = [0, 0], sizes = [4, 32], strides = [1, 1]} : vector<4x128xf32> to vector<4x32xf32>
    %188 = vector.extract_strided_slice %185 {offsets = [0, 32], sizes = [4, 32], strides = [1, 1]} : vector<4x128xf32> to vector<4x32xf32>
    %189 = vector.extract_strided_slice %186 {offsets = [0, 64], sizes = [4, 32], strides = [1, 1]} : vector<4x128xf32> to vector<4x32xf32>
    %190 = vector.extract_strided_slice %185 {offsets = [0, 96], sizes = [4, 32], strides = [1, 1]} : vector<4x128xf32> to vector<4x32xf32>
    %191 = arith.mulf %188, %148 : vector<4x32xf32>
    %192 = arith.mulf %187, %189 : vector<4x32xf32>
    %193 = arith.addf %191, %192 : vector<4x32xf32>
    %194 = math.tanh %193 : vector<4x32xf32>
    %195 = arith.mulf %190, %194 : vector<4x32xf32>
    %196 = arith.addf %151, %195 : vector<4x32xf32>
    %c4 = arith.constant 4 : index
    %c0_95 = arith.constant 0 : index
    %c0_96 = arith.constant 0 : index
    %197 = vector.load %arg0[%c4, %c0_95, %c0_96] : memref<8x4x32xf32, #tpu.memory_space<vmem>>, vector<1x4x32xf32>
    %198 = vector.shape_cast %197 : vector<1x4x32xf32> to vector<4x32xf32>
    %c0_97 = arith.constant 0 : index
    %c0_98 = arith.constant 0 : index
    %199 = vector.load %arg12[%c0_97, %c0_98] : memref<4x64xf32, #tpu.memory_space<vmem>>, vector<4x32xf32>
    tpu.vector_store %arg12[%c0_97, %c0_98], %198 {strides = array<i32>} : memref<4x64xf32, #tpu.memory_space<vmem>>, vector<4x32xf32>,
    %c0_99 = arith.constant 0 : index
    %c32_100 = arith.constant 32 : index
    %200 = vector.load %arg12[%c0_99, %c32_100] : memref<4x64xf32, #tpu.memory_space<vmem>>, vector<4x32xf32>
    tpu.vector_store %arg12[%c0_99, %c32_100], %174 {strides = array<i32>} : memref<4x64xf32, #tpu.memory_space<vmem>>, vector<4x32xf32>,
    %c0_101 = arith.constant 0 : index
    %c0_102 = arith.constant 0 : index
    %201 = vector.load %arg12[%c0_101, %c0_102] : memref<4x64xf32, #tpu.memory_space<vmem>>, vector<4x64xf32>
    %cst_103 = arith.constant dense<0.000000e+00> : vector<4x128xf32>
    %202 = tpu.matmul %201, %9, %cst_103 {dimension_numbers = #tpu.dot_dimension_numbers<[1], [0], [0], [1], [0, 0, 1, 1], [], []>} : vector<4x64xf32>, vector<64x128xf32>, vector<4x128xf32> -> vector<4x128xf32>
    %203 = vector.broadcast %13 : vector<1x128xf32> to vector<4x128xf32>
    %204 = arith.addf %202, %203 : vector<4x128xf32>
    %205 = arith.negf %204 : vector<4x128xf32>
    %206 = math.exp %205 : vector<4x128xf32>
    %cst_104 = arith.constant 1.000000e+00 : f32
    %207 = vector.broadcast %cst_104 : f32 to vector<4x128xf32>
    %208 = arith.addf %207, %206 : vector<4x128xf32>
    %209 = arith.divf %207, %208 : vector<4x128xf32>
    %210 = math.tanh %204 : vector<4x128xf32>
    %211 = vector.extract_strided_slice %209 {offsets = [0, 0], sizes = [4, 32], strides = [1, 1]} : vector<4x128xf32> to vector<4x32xf32>
    %212 = vector.extract_strided_slice %209 {offsets = [0, 32], sizes = [4, 32], strides = [1, 1]} : vector<4x128xf32> to vector<4x32xf32>
    %213 = vector.extract_strided_slice %210 {offsets = [0, 64], sizes = [4, 32], strides = [1, 1]} : vector<4x128xf32> to vector<4x32xf32>
    %214 = vector.extract_strided_slice %209 {offsets = [0, 96], sizes = [4, 32], strides = [1, 1]} : vector<4x128xf32> to vector<4x32xf32>
    %215 = arith.mulf %212, %172 : vector<4x32xf32>
    %216 = arith.mulf %211, %213 : vector<4x32xf32>
    %217 = arith.addf %215, %216 : vector<4x32xf32>
    %218 = math.tanh %217 : vector<4x32xf32>
    %219 = arith.mulf %214, %218 : vector<4x32xf32>
    %c0_105 = arith.constant 0 : index
    %c0_106 = arith.constant 0 : index
    %220 = vector.load %arg12[%c0_105, %c0_106] : memref<4x64xf32, #tpu.memory_space<vmem>>, vector<4x32xf32>
    tpu.vector_store %arg12[%c0_105, %c0_106], %219 {strides = array<i32>} : memref<4x64xf32, #tpu.memory_space<vmem>>, vector<4x32xf32>,
    %c0_107 = arith.constant 0 : index
    %c32_108 = arith.constant 32 : index
    %221 = vector.load %arg12[%c0_107, %c32_108] : memref<4x64xf32, #tpu.memory_space<vmem>>, vector<4x32xf32>
    tpu.vector_store %arg12[%c0_107, %c32_108], %195 {strides = array<i32>} : memref<4x64xf32, #tpu.memory_space<vmem>>, vector<4x32xf32>,
    %c0_109 = arith.constant 0 : index
    %c0_110 = arith.constant 0 : index
    %222 = vector.load %arg12[%c0_109, %c0_110] : memref<4x64xf32, #tpu.memory_space<vmem>>, vector<4x64xf32>
    %cst_111 = arith.constant dense<0.000000e+00> : vector<4x128xf32>
    %223 = tpu.matmul %222, %11, %cst_111 {dimension_numbers = #tpu.dot_dimension_numbers<[1], [0], [0], [1], [0, 0, 1, 1], [], []>} : vector<4x64xf32>, vector<64x128xf32>, vector<4x128xf32> -> vector<4x128xf32>
    %224 = vector.broadcast %15 : vector<1x128xf32> to vector<4x128xf32>
    %225 = arith.addf %223, %224 : vector<4x128xf32>
    %226 = arith.negf %225 : vector<4x128xf32>
    %227 = math.exp %226 : vector<4x128xf32>
    %cst_112 = arith.constant 1.000000e+00 : f32
    %228 = vector.broadcast %cst_112 : f32 to vector<4x128xf32>
    %229 = arith.addf %228, %227 : vector<4x128xf32>
    %230 = arith.divf %228, %229 : vector<4x128xf32>
    %231 = math.tanh %225 : vector<4x128xf32>
    %232 = vector.extract_strided_slice %230 {offsets = [0, 0], sizes = [4, 32], strides = [1, 1]} : vector<4x128xf32> to vector<4x32xf32>
    %233 = vector.extract_strided_slice %230 {offsets = [0, 32], sizes = [4, 32], strides = [1, 1]} : vector<4x128xf32> to vector<4x32xf32>
    %234 = vector.extract_strided_slice %231 {offsets = [0, 64], sizes = [4, 32], strides = [1, 1]} : vector<4x128xf32> to vector<4x32xf32>
    %235 = vector.extract_strided_slice %230 {offsets = [0, 96], sizes = [4, 32], strides = [1, 1]} : vector<4x128xf32> to vector<4x32xf32>
    %236 = arith.mulf %233, %193 : vector<4x32xf32>
    %237 = arith.mulf %232, %234 : vector<4x32xf32>
    %238 = arith.addf %236, %237 : vector<4x32xf32>
    %239 = math.tanh %238 : vector<4x32xf32>
    %240 = arith.mulf %235, %239 : vector<4x32xf32>
    %241 = arith.addf %196, %240 : vector<4x32xf32>
    %c5 = arith.constant 5 : index
    %c0_113 = arith.constant 0 : index
    %c0_114 = arith.constant 0 : index
    %242 = vector.load %arg0[%c5, %c0_113, %c0_114] : memref<8x4x32xf32, #tpu.memory_space<vmem>>, vector<1x4x32xf32>
    %243 = vector.shape_cast %242 : vector<1x4x32xf32> to vector<4x32xf32>
    %c0_115 = arith.constant 0 : index
    %c0_116 = arith.constant 0 : index
    %244 = vector.load %arg12[%c0_115, %c0_116] : memref<4x64xf32, #tpu.memory_space<vmem>>, vector<4x32xf32>
    tpu.vector_store %arg12[%c0_115, %c0_116], %243 {strides = array<i32>} : memref<4x64xf32, #tpu.memory_space<vmem>>, vector<4x32xf32>,
    %c0_117 = arith.constant 0 : index
    %c32_118 = arith.constant 32 : index
    %245 = vector.load %arg12[%c0_117, %c32_118] : memref<4x64xf32, #tpu.memory_space<vmem>>, vector<4x32xf32>
    tpu.vector_store %arg12[%c0_117, %c32_118], %219 {strides = array<i32>} : memref<4x64xf32, #tpu.memory_space<vmem>>, vector<4x32xf32>,
    %c0_119 = arith.constant 0 : index
    %c0_120 = arith.constant 0 : index
    %246 = vector.load %arg12[%c0_119, %c0_120] : memref<4x64xf32, #tpu.memory_space<vmem>>, vector<4x64xf32>
    %cst_121 = arith.constant dense<0.000000e+00> : vector<4x128xf32>
    %247 = tpu.matmul %246, %9, %cst_121 {dimension_numbers = #tpu.dot_dimension_numbers<[1], [0], [0], [1], [0, 0, 1, 1], [], []>} : vector<4x64xf32>, vector<64x128xf32>, vector<4x128xf32> -> vector<4x128xf32>
    %248 = vector.broadcast %13 : vector<1x128xf32> to vector<4x128xf32>
    %249 = arith.addf %247, %248 : vector<4x128xf32>
    %250 = arith.negf %249 : vector<4x128xf32>
    %251 = math.exp %250 : vector<4x128xf32>
    %cst_122 = arith.constant 1.000000e+00 : f32
    %252 = vector.broadcast %cst_122 : f32 to vector<4x128xf32>
    %253 = arith.addf %252, %251 : vector<4x128xf32>
    %254 = arith.divf %252, %253 : vector<4x128xf32>
    %255 = math.tanh %249 : vector<4x128xf32>
    %256 = vector.extract_strided_slice %254 {offsets = [0, 0], sizes = [4, 32], strides = [1, 1]} : vector<4x128xf32> to vector<4x32xf32>
    %257 = vector.extract_strided_slice %254 {offsets = [0, 32], sizes = [4, 32], strides = [1, 1]} : vector<4x128xf32> to vector<4x32xf32>
    %258 = vector.extract_strided_slice %255 {offsets = [0, 64], sizes = [4, 32], strides = [1, 1]} : vector<4x128xf32> to vector<4x32xf32>
    %259 = vector.extract_strided_slice %254 {offsets = [0, 96], sizes = [4, 32], strides = [1, 1]} : vector<4x128xf32> to vector<4x32xf32>
    %260 = arith.mulf %257, %217 : vector<4x32xf32>
    %261 = arith.mulf %256, %258 : vector<4x32xf32>
    %262 = arith.addf %260, %261 : vector<4x32xf32>
    %263 = math.tanh %262 : vector<4x32xf32>
    %264 = arith.mulf %259, %263 : vector<4x32xf32>
    %c0_123 = arith.constant 0 : index
    %c0_124 = arith.constant 0 : index
    %265 = vector.load %arg12[%c0_123, %c0_124] : memref<4x64xf32, #tpu.memory_space<vmem>>, vector<4x32xf32>
    tpu.vector_store %arg12[%c0_123, %c0_124], %264 {strides = array<i32>} : memref<4x64xf32, #tpu.memory_space<vmem>>, vector<4x32xf32>,
    %c0_125 = arith.constant 0 : index
    %c32_126 = arith.constant 32 : index
    %266 = vector.load %arg12[%c0_125, %c32_126] : memref<4x64xf32, #tpu.memory_space<vmem>>, vector<4x32xf32>
    tpu.vector_store %arg12[%c0_125, %c32_126], %240 {strides = array<i32>} : memref<4x64xf32, #tpu.memory_space<vmem>>, vector<4x32xf32>,
    %c0_127 = arith.constant 0 : index
    %c0_128 = arith.constant 0 : index
    %267 = vector.load %arg12[%c0_127, %c0_128] : memref<4x64xf32, #tpu.memory_space<vmem>>, vector<4x64xf32>
    %cst_129 = arith.constant dense<0.000000e+00> : vector<4x128xf32>
    %268 = tpu.matmul %267, %11, %cst_129 {dimension_numbers = #tpu.dot_dimension_numbers<[1], [0], [0], [1], [0, 0, 1, 1], [], []>} : vector<4x64xf32>, vector<64x128xf32>, vector<4x128xf32> -> vector<4x128xf32>
    %269 = vector.broadcast %15 : vector<1x128xf32> to vector<4x128xf32>
    %270 = arith.addf %268, %269 : vector<4x128xf32>
    %271 = arith.negf %270 : vector<4x128xf32>
    %272 = math.exp %271 : vector<4x128xf32>
    %cst_130 = arith.constant 1.000000e+00 : f32
    %273 = vector.broadcast %cst_130 : f32 to vector<4x128xf32>
    %274 = arith.addf %273, %272 : vector<4x128xf32>
    %275 = arith.divf %273, %274 : vector<4x128xf32>
    %276 = math.tanh %270 : vector<4x128xf32>
    %277 = vector.extract_strided_slice %275 {offsets = [0, 0], sizes = [4, 32], strides = [1, 1]} : vector<4x128xf32> to vector<4x32xf32>
    %278 = vector.extract_strided_slice %275 {offsets = [0, 32], sizes = [4, 32], strides = [1, 1]} : vector<4x128xf32> to vector<4x32xf32>
    %279 = vector.extract_strided_slice %276 {offsets = [0, 64], sizes = [4, 32], strides = [1, 1]} : vector<4x128xf32> to vector<4x32xf32>
    %280 = vector.extract_strided_slice %275 {offsets = [0, 96], sizes = [4, 32], strides = [1, 1]} : vector<4x128xf32> to vector<4x32xf32>
    %281 = arith.mulf %278, %238 : vector<4x32xf32>
    %282 = arith.mulf %277, %279 : vector<4x32xf32>
    %283 = arith.addf %281, %282 : vector<4x32xf32>
    %284 = math.tanh %283 : vector<4x32xf32>
    %285 = arith.mulf %280, %284 : vector<4x32xf32>
    %286 = arith.addf %241, %285 : vector<4x32xf32>
    %c6 = arith.constant 6 : index
    %c0_131 = arith.constant 0 : index
    %c0_132 = arith.constant 0 : index
    %287 = vector.load %arg0[%c6, %c0_131, %c0_132] : memref<8x4x32xf32, #tpu.memory_space<vmem>>, vector<1x4x32xf32>
    %288 = vector.shape_cast %287 : vector<1x4x32xf32> to vector<4x32xf32>
    %c0_133 = arith.constant 0 : index
    %c0_134 = arith.constant 0 : index
    %289 = vector.load %arg12[%c0_133, %c0_134] : memref<4x64xf32, #tpu.memory_space<vmem>>, vector<4x32xf32>
    tpu.vector_store %arg12[%c0_133, %c0_134], %288 {strides = array<i32>} : memref<4x64xf32, #tpu.memory_space<vmem>>, vector<4x32xf32>,
    %c0_135 = arith.constant 0 : index
    %c32_136 = arith.constant 32 : index
    %290 = vector.load %arg12[%c0_135, %c32_136] : memref<4x64xf32, #tpu.memory_space<vmem>>, vector<4x32xf32>
    tpu.vector_store %arg12[%c0_135, %c32_136], %264 {strides = array<i32>} : memref<4x64xf32, #tpu.memory_space<vmem>>, vector<4x32xf32>,
    %c0_137 = arith.constant 0 : index
    %c0_138 = arith.constant 0 : index
    %291 = vector.load %arg12[%c0_137, %c0_138] : memref<4x64xf32, #tpu.memory_space<vmem>>, vector<4x64xf32>
    %cst_139 = arith.constant dense<0.000000e+00> : vector<4x128xf32>
    %292 = tpu.matmul %291, %9, %cst_139 {dimension_numbers = #tpu.dot_dimension_numbers<[1], [0], [0], [1], [0, 0, 1, 1], [], []>} : vector<4x64xf32>, vector<64x128xf32>, vector<4x128xf32> -> vector<4x128xf32>
    %293 = vector.broadcast %13 : vector<1x128xf32> to vector<4x128xf32>
    %294 = arith.addf %292, %293 : vector<4x128xf32>
    %295 = arith.negf %294 : vector<4x128xf32>
    %296 = math.exp %295 : vector<4x128xf32>
    %cst_140 = arith.constant 1.000000e+00 : f32
    %297 = vector.broadcast %cst_140 : f32 to vector<4x128xf32>
    %298 = arith.addf %297, %296 : vector<4x128xf32>
    %299 = arith.divf %297, %298 : vector<4x128xf32>
    %300 = math.tanh %294 : vector<4x128xf32>
    %301 = vector.extract_strided_slice %299 {offsets = [0, 0], sizes = [4, 32], strides = [1, 1]} : vector<4x128xf32> to vector<4x32xf32>
    %302 = vector.extract_strided_slice %299 {offsets = [0, 32], sizes = [4, 32], strides = [1, 1]} : vector<4x128xf32> to vector<4x32xf32>
    %303 = vector.extract_strided_slice %300 {offsets = [0, 64], sizes = [4, 32], strides = [1, 1]} : vector<4x128xf32> to vector<4x32xf32>
    %304 = vector.extract_strided_slice %299 {offsets = [0, 96], sizes = [4, 32], strides = [1, 1]} : vector<4x128xf32> to vector<4x32xf32>
    %305 = arith.mulf %302, %262 : vector<4x32xf32>
    %306 = arith.mulf %301, %303 : vector<4x32xf32>
    %307 = arith.addf %305, %306 : vector<4x32xf32>
    %308 = math.tanh %307 : vector<4x32xf32>
    %309 = arith.mulf %304, %308 : vector<4x32xf32>
    %c0_141 = arith.constant 0 : index
    %c0_142 = arith.constant 0 : index
    %310 = vector.load %arg12[%c0_141, %c0_142] : memref<4x64xf32, #tpu.memory_space<vmem>>, vector<4x32xf32>
    tpu.vector_store %arg12[%c0_141, %c0_142], %309 {strides = array<i32>} : memref<4x64xf32, #tpu.memory_space<vmem>>, vector<4x32xf32>,
    %c0_143 = arith.constant 0 : index
    %c32_144 = arith.constant 32 : index
    %311 = vector.load %arg12[%c0_143, %c32_144] : memref<4x64xf32, #tpu.memory_space<vmem>>, vector<4x32xf32>
    tpu.vector_store %arg12[%c0_143, %c32_144], %285 {strides = array<i32>} : memref<4x64xf32, #tpu.memory_space<vmem>>, vector<4x32xf32>,
    %c0_145 = arith.constant 0 : index
    %c0_146 = arith.constant 0 : index
    %312 = vector.load %arg12[%c0_145, %c0_146] : memref<4x64xf32, #tpu.memory_space<vmem>>, vector<4x64xf32>
    %cst_147 = arith.constant dense<0.000000e+00> : vector<4x128xf32>
    %313 = tpu.matmul %312, %11, %cst_147 {dimension_numbers = #tpu.dot_dimension_numbers<[1], [0], [0], [1], [0, 0, 1, 1], [], []>} : vector<4x64xf32>, vector<64x128xf32>, vector<4x128xf32> -> vector<4x128xf32>
    %314 = vector.broadcast %15 : vector<1x128xf32> to vector<4x128xf32>
    %315 = arith.addf %313, %314 : vector<4x128xf32>
    %316 = arith.negf %315 : vector<4x128xf32>
    %317 = math.exp %316 : vector<4x128xf32>
    %cst_148 = arith.constant 1.000000e+00 : f32
    %318 = vector.broadcast %cst_148 : f32 to vector<4x128xf32>
    %319 = arith.addf %318, %317 : vector<4x128xf32>
    %320 = arith.divf %318, %319 : vector<4x128xf32>
    %321 = math.tanh %315 : vector<4x128xf32>
    %322 = vector.extract_strided_slice %320 {offsets = [0, 0], sizes = [4, 32], strides = [1, 1]} : vector<4x128xf32> to vector<4x32xf32>
    %323 = vector.extract_strided_slice %320 {offsets = [0, 32], sizes = [4, 32], strides = [1, 1]} : vector<4x128xf32> to vector<4x32xf32>
    %324 = vector.extract_strided_slice %321 {offsets = [0, 64], sizes = [4, 32], strides = [1, 1]} : vector<4x128xf32> to vector<4x32xf32>
    %325 = vector.extract_strided_slice %320 {offsets = [0, 96], sizes = [4, 32], strides = [1, 1]} : vector<4x128xf32> to vector<4x32xf32>
    %326 = arith.mulf %323, %283 : vector<4x32xf32>
    %327 = arith.mulf %322, %324 : vector<4x32xf32>
    %328 = arith.addf %326, %327 : vector<4x32xf32>
    %329 = math.tanh %328 : vector<4x32xf32>
    %330 = arith.mulf %325, %329 : vector<4x32xf32>
    %331 = arith.addf %286, %330 : vector<4x32xf32>
    %c7 = arith.constant 7 : index
    %c0_149 = arith.constant 0 : index
    %c0_150 = arith.constant 0 : index
    %332 = vector.load %arg0[%c7, %c0_149, %c0_150] : memref<8x4x32xf32, #tpu.memory_space<vmem>>, vector<1x4x32xf32>
    %333 = vector.shape_cast %332 : vector<1x4x32xf32> to vector<4x32xf32>
    %c0_151 = arith.constant 0 : index
    %c0_152 = arith.constant 0 : index
    %334 = vector.load %arg12[%c0_151, %c0_152] : memref<4x64xf32, #tpu.memory_space<vmem>>, vector<4x32xf32>
    tpu.vector_store %arg12[%c0_151, %c0_152], %333 {strides = array<i32>} : memref<4x64xf32, #tpu.memory_space<vmem>>, vector<4x32xf32>,
    %c0_153 = arith.constant 0 : index
    %c32_154 = arith.constant 32 : index
    %335 = vector.load %arg12[%c0_153, %c32_154] : memref<4x64xf32, #tpu.memory_space<vmem>>, vector<4x32xf32>
    tpu.vector_store %arg12[%c0_153, %c32_154], %309 {strides = array<i32>} : memref<4x64xf32, #tpu.memory_space<vmem>>, vector<4x32xf32>,
    %c0_155 = arith.constant 0 : index
    %c0_156 = arith.constant 0 : index
    %336 = vector.load %arg12[%c0_155, %c0_156] : memref<4x64xf32, #tpu.memory_space<vmem>>, vector<4x64xf32>
    %cst_157 = arith.constant dense<0.000000e+00> : vector<4x128xf32>
    %337 = tpu.matmul %336, %9, %cst_157 {dimension_numbers = #tpu.dot_dimension_numbers<[1], [0], [0], [1], [0, 0, 1, 1], [], []>} : vector<4x64xf32>, vector<64x128xf32>, vector<4x128xf32> -> vector<4x128xf32>
    %338 = vector.broadcast %13 : vector<1x128xf32> to vector<4x128xf32>
    %339 = arith.addf %337, %338 : vector<4x128xf32>
    %340 = arith.negf %339 : vector<4x128xf32>
    %341 = math.exp %340 : vector<4x128xf32>
    %cst_158 = arith.constant 1.000000e+00 : f32
    %342 = vector.broadcast %cst_158 : f32 to vector<4x128xf32>
    %343 = arith.addf %342, %341 : vector<4x128xf32>
    %344 = arith.divf %342, %343 : vector<4x128xf32>
    %345 = math.tanh %339 : vector<4x128xf32>
    %346 = vector.extract_strided_slice %344 {offsets = [0, 0], sizes = [4, 32], strides = [1, 1]} : vector<4x128xf32> to vector<4x32xf32>
    %347 = vector.extract_strided_slice %344 {offsets = [0, 32], sizes = [4, 32], strides = [1, 1]} : vector<4x128xf32> to vector<4x32xf32>
    %348 = vector.extract_strided_slice %345 {offsets = [0, 64], sizes = [4, 32], strides = [1, 1]} : vector<4x128xf32> to vector<4x32xf32>
    %349 = vector.extract_strided_slice %344 {offsets = [0, 96], sizes = [4, 32], strides = [1, 1]} : vector<4x128xf32> to vector<4x32xf32>
    %350 = arith.mulf %347, %307 : vector<4x32xf32>
    %351 = arith.mulf %346, %348 : vector<4x32xf32>
    %352 = arith.addf %350, %351 : vector<4x32xf32>
    %353 = math.tanh %352 : vector<4x32xf32>
    %354 = arith.mulf %349, %353 : vector<4x32xf32>
    %c0_159 = arith.constant 0 : index
    %c0_160 = arith.constant 0 : index
    %355 = vector.load %arg12[%c0_159, %c0_160] : memref<4x64xf32, #tpu.memory_space<vmem>>, vector<4x32xf32>
    tpu.vector_store %arg12[%c0_159, %c0_160], %354 {strides = array<i32>} : memref<4x64xf32, #tpu.memory_space<vmem>>, vector<4x32xf32>,
    %c0_161 = arith.constant 0 : index
    %c32_162 = arith.constant 32 : index
    %356 = vector.load %arg12[%c0_161, %c32_162] : memref<4x64xf32, #tpu.memory_space<vmem>>, vector<4x32xf32>
    tpu.vector_store %arg12[%c0_161, %c32_162], %330 {strides = array<i32>} : memref<4x64xf32, #tpu.memory_space<vmem>>, vector<4x32xf32>,
    %c0_163 = arith.constant 0 : index
    %c0_164 = arith.constant 0 : index
    %357 = vector.load %arg12[%c0_163, %c0_164] : memref<4x64xf32, #tpu.memory_space<vmem>>, vector<4x64xf32>
    %cst_165 = arith.constant dense<0.000000e+00> : vector<4x128xf32>
    %358 = tpu.matmul %357, %11, %cst_165 {dimension_numbers = #tpu.dot_dimension_numbers<[1], [0], [0], [1], [0, 0, 1, 1], [], []>} : vector<4x64xf32>, vector<64x128xf32>, vector<4x128xf32> -> vector<4x128xf32>
    %359 = vector.broadcast %15 : vector<1x128xf32> to vector<4x128xf32>
    %360 = arith.addf %358, %359 : vector<4x128xf32>
    %361 = arith.negf %360 : vector<4x128xf32>
    %362 = math.exp %361 : vector<4x128xf32>
    %cst_166 = arith.constant 1.000000e+00 : f32
    %363 = vector.broadcast %cst_166 : f32 to vector<4x128xf32>
    %364 = arith.addf %363, %362 : vector<4x128xf32>
    %365 = arith.divf %363, %364 : vector<4x128xf32>
    %366 = math.tanh %360 : vector<4x128xf32>
    %367 = vector.extract_strided_slice %365 {offsets = [0, 0], sizes = [4, 32], strides = [1, 1]} : vector<4x128xf32> to vector<4x32xf32>
    %368 = vector.extract_strided_slice %365 {offsets = [0, 32], sizes = [4, 32], strides = [1, 1]} : vector<4x128xf32> to vector<4x32xf32>
    %369 = vector.extract_strided_slice %366 {offsets = [0, 64], sizes = [4, 32], strides = [1, 1]} : vector<4x128xf32> to vector<4x32xf32>
    %370 = vector.extract_strided_slice %365 {offsets = [0, 96], sizes = [4, 32], strides = [1, 1]} : vector<4x128xf32> to vector<4x32xf32>
    %371 = arith.mulf %368, %328 : vector<4x32xf32>
    %372 = arith.mulf %367, %369 : vector<4x32xf32>
    %373 = arith.addf %371, %372 : vector<4x32xf32>
    %374 = math.tanh %373 : vector<4x32xf32>
    %375 = arith.mulf %370, %374 : vector<4x32xf32>
    %376 = arith.addf %331, %375 : vector<4x32xf32>
    %c0_167 = arith.constant 0 : index
    %c0_168 = arith.constant 0 : index
    %377 = vector.load %arg7[%c0_167, %c0_168] : memref<32x32xf32, #tpu.memory_space<vmem>>, vector<32x32xf32>
    %cst_169 = arith.constant dense<0.000000e+00> : vector<4x32xf32>
    %378 = tpu.matmul %376, %377, %cst_169 {dimension_numbers = #tpu.dot_dimension_numbers<[1], [0], [0], [1], [0, 0, 1, 1], [], []>} : vector<4x32xf32>, vector<32x32xf32>, vector<4x32xf32> -> vector<4x32xf32>
    %c0_170 = arith.constant 0 : index
    %c0_171 = arith.constant 0 : index
    %379 = vector.load %arg8[%c0_170, %c0_171] : memref<1x32xf32, #tpu.memory_space<vmem>>, vector<1x32xf32>
    %380 = vector.broadcast %379 : vector<1x32xf32> to vector<4x32xf32>
    %381 = arith.addf %378, %380 : vector<4x32xf32>
    %c0_172 = arith.constant 0 : index
    %c0_173 = arith.constant 0 : index
    %c0_174 = arith.constant 0 : index
    %382 = vector.load %arg9[%c0_172, %c0_173, %c0_174] : memref<2x64x128xf32, #tpu.memory_space<vmem>>, vector<1x64x128xf32>
    %383 = vector.shape_cast %382 : vector<1x64x128xf32> to vector<64x128xf32>
    %c1_175 = arith.constant 1 : index
    %c0_176 = arith.constant 0 : index
    %c0_177 = arith.constant 0 : index
    %384 = vector.load %arg9[%c1_175, %c0_176, %c0_177] : memref<2x64x128xf32, #tpu.memory_space<vmem>>, vector<1x64x128xf32>
    %385 = vector.shape_cast %384 : vector<1x64x128xf32> to vector<64x128xf32>
    %c0_178 = arith.constant 0 : index
    %c0_179 = arith.constant 0 : index
    %c0_180 = arith.constant 0 : index
    %386 = vector.load %arg10[%c0_178, %c0_179, %c0_180] : memref<2x1x128xf32, #tpu.memory_space<vmem>>, vector<1x1x128xf32>
    %387 = vector.shape_cast %386 : vector<1x1x128xf32> to vector<1x128xf32>
    %c1_181 = arith.constant 1 : index
    %c0_182 = arith.constant 0 : index
    %c0_183 = arith.constant 0 : index
    %388 = vector.load %arg10[%c1_181, %c0_182, %c0_183] : memref<2x1x128xf32, #tpu.memory_space<vmem>>, vector<1x1x128xf32>
    %389 = vector.shape_cast %388 : vector<1x1x128xf32> to vector<1x128xf32>
    %cst_184 = arith.constant 0.000000e+00 : f32
    %390 = vector.broadcast %cst_184 : f32 to vector<4x32xf32>
    %c0_185 = arith.constant 0 : index
    %c0_186 = arith.constant 0 : index
    %c0_187 = arith.constant 0 : index
    %391 = vector.load %arg11[%c0_185, %c0_186, %c0_187] : memref<6x4x32xf32, #tpu.memory_space<vmem>>, vector<1x4x32xf32>
    %392 = vector.shape_cast %391 : vector<1x4x32xf32> to vector<4x32xf32>
    %393 = vector.shape_cast %390 : vector<4x32xf32> to vector<1x4x32xf32>
    tpu.vector_store %arg11[%c0_185, %c0_186, %c0_187], %393 {strides = array<i32>} : memref<6x4x32xf32, #tpu.memory_space<vmem>>, vector<1x4x32xf32>,
    %c0_188 = arith.constant 0 : index
    %c0_189 = arith.constant 0 : index
    %394 = vector.load %arg5[%c0_188, %c0_189] : memref<4x32xf32, #tpu.memory_space<vmem>>, vector<4x32xf32>
    %c0_190 = arith.constant 0 : index
    %c0_191 = arith.constant 0 : index
    %395 = vector.load %arg6[%c0_190, %c0_191] : memref<32x32xf32, #tpu.memory_space<vmem>>, vector<32x32xf32>
    %cst_192 = arith.constant dense<0.000000e+00> : vector<4x32xf32>
    %396 = tpu.matmul %394, %395, %cst_192 {dimension_numbers = #tpu.dot_dimension_numbers<[1], [0], [0], [1], [0, 0, 1, 1], [], []>} : vector<4x32xf32>, vector<32x32xf32>, vector<4x32xf32> -> vector<4x32xf32>
    %397 = arith.addf %396, %381 : vector<4x32xf32>
    %cst_193 = arith.constant 0.000000e+00 : f32
    %398 = vector.broadcast %cst_193 : f32 to vector<4x32xf32>
    %399 = arith.maximumf %397, %398 : vector<4x32xf32>
    %c0_194 = arith.constant 0 : index
    %c0_195 = arith.constant 0 : index
    %400 = vector.load %arg12[%c0_194, %c0_195] : memref<4x64xf32, #tpu.memory_space<vmem>>, vector<4x32xf32>
    tpu.vector_store %arg12[%c0_194, %c0_195], %399 {strides = array<i32>} : memref<4x64xf32, #tpu.memory_space<vmem>>, vector<4x32xf32>,
    %c0_196 = arith.constant 0 : index
    %c32_197 = arith.constant 32 : index
    %401 = vector.load %arg12[%c0_196, %c32_197] : memref<4x64xf32, #tpu.memory_space<vmem>>, vector<4x32xf32>
    tpu.vector_store %arg12[%c0_196, %c32_197], %354 {strides = array<i32>} : memref<4x64xf32, #tpu.memory_space<vmem>>, vector<4x32xf32>,
    %c0_198 = arith.constant 0 : index
    %c0_199 = arith.constant 0 : index
    %402 = vector.load %arg12[%c0_198, %c0_199] : memref<4x64xf32, #tpu.memory_space<vmem>>, vector<4x64xf32>
    %cst_200 = arith.constant dense<0.000000e+00> : vector<4x128xf32>
    %403 = tpu.matmul %402, %383, %cst_200 {dimension_numbers = #tpu.dot_dimension_numbers<[1], [0], [0], [1], [0, 0, 1, 1], [], []>} : vector<4x64xf32>, vector<64x128xf32>, vector<4x128xf32> -> vector<4x128xf32>
    %404 = vector.broadcast %387 : vector<1x128xf32> to vector<4x128xf32>
    %405 = arith.addf %403, %404 : vector<4x128xf32>
    %406 = arith.negf %405 : vector<4x128xf32>
    %407 = math.exp %406 : vector<4x128xf32>
    %cst_201 = arith.constant 1.000000e+00 : f32
    %408 = vector.broadcast %cst_201 : f32 to vector<4x128xf32>
    %409 = arith.addf %408, %407 : vector<4x128xf32>
    %410 = arith.divf %408, %409 : vector<4x128xf32>
    %411 = math.tanh %405 : vector<4x128xf32>
    %412 = vector.extract_strided_slice %410 {offsets = [0, 0], sizes = [4, 32], strides = [1, 1]} : vector<4x128xf32> to vector<4x32xf32>
    %413 = vector.extract_strided_slice %410 {offsets = [0, 32], sizes = [4, 32], strides = [1, 1]} : vector<4x128xf32> to vector<4x32xf32>
    %414 = vector.extract_strided_slice %411 {offsets = [0, 64], sizes = [4, 32], strides = [1, 1]} : vector<4x128xf32> to vector<4x32xf32>
    %415 = vector.extract_strided_slice %410 {offsets = [0, 96], sizes = [4, 32], strides = [1, 1]} : vector<4x128xf32> to vector<4x32xf32>
    %416 = arith.mulf %413, %354 : vector<4x32xf32>
    %417 = arith.mulf %412, %414 : vector<4x32xf32>
    %418 = arith.addf %416, %417 : vector<4x32xf32>
    %419 = math.tanh %418 : vector<4x32xf32>
    %420 = arith.mulf %415, %419 : vector<4x32xf32>
    %c0_202 = arith.constant 0 : index
    %c0_203 = arith.constant 0 : index
    %421 = vector.load %arg12[%c0_202, %c0_203] : memref<4x64xf32, #tpu.memory_space<vmem>>, vector<4x32xf32>
    tpu.vector_store %arg12[%c0_202, %c0_203], %420 {strides = array<i32>} : memref<4x64xf32, #tpu.memory_space<vmem>>, vector<4x32xf32>,
    %c0_204 = arith.constant 0 : index
    %c32_205 = arith.constant 32 : index
    %422 = vector.load %arg12[%c0_204, %c32_205] : memref<4x64xf32, #tpu.memory_space<vmem>>, vector<4x32xf32>
    tpu.vector_store %arg12[%c0_204, %c32_205], %375 {strides = array<i32>} : memref<4x64xf32, #tpu.memory_space<vmem>>, vector<4x32xf32>,
    %c0_206 = arith.constant 0 : index
    %c0_207 = arith.constant 0 : index
    %423 = vector.load %arg12[%c0_206, %c0_207] : memref<4x64xf32, #tpu.memory_space<vmem>>, vector<4x64xf32>
    %cst_208 = arith.constant dense<0.000000e+00> : vector<4x128xf32>
    %424 = tpu.matmul %423, %385, %cst_208 {dimension_numbers = #tpu.dot_dimension_numbers<[1], [0], [0], [1], [0, 0, 1, 1], [], []>} : vector<4x64xf32>, vector<64x128xf32>, vector<4x128xf32> -> vector<4x128xf32>
    %425 = vector.broadcast %389 : vector<1x128xf32> to vector<4x128xf32>
    %426 = arith.addf %424, %425 : vector<4x128xf32>
    %427 = arith.negf %426 : vector<4x128xf32>
    %428 = math.exp %427 : vector<4x128xf32>
    %cst_209 = arith.constant 1.000000e+00 : f32
    %429 = vector.broadcast %cst_209 : f32 to vector<4x128xf32>
    %430 = arith.addf %429, %428 : vector<4x128xf32>
    %431 = arith.divf %429, %430 : vector<4x128xf32>
    %432 = math.tanh %426 : vector<4x128xf32>
    %433 = vector.extract_strided_slice %431 {offsets = [0, 0], sizes = [4, 32], strides = [1, 1]} : vector<4x128xf32> to vector<4x32xf32>
    %434 = vector.extract_strided_slice %431 {offsets = [0, 32], sizes = [4, 32], strides = [1, 1]} : vector<4x128xf32> to vector<4x32xf32>
    %435 = vector.extract_strided_slice %432 {offsets = [0, 64], sizes = [4, 32], strides = [1, 1]} : vector<4x128xf32> to vector<4x32xf32>
    %436 = vector.extract_strided_slice %431 {offsets = [0, 96], sizes = [4, 32], strides = [1, 1]} : vector<4x128xf32> to vector<4x32xf32>
    %437 = arith.mulf %434, %375 : vector<4x32xf32>
    %438 = arith.mulf %433, %435 : vector<4x32xf32>
    %439 = arith.addf %437, %438 : vector<4x32xf32>
    %440 = math.tanh %439 : vector<4x32xf32>
    %441 = arith.mulf %436, %440 : vector<4x32xf32>
    %c1_210 = arith.constant 1 : index
    %c0_211 = arith.constant 0 : index
    %c0_212 = arith.constant 0 : index
    %442 = vector.load %arg11[%c1_210, %c0_211, %c0_212] : memref<6x4x32xf32, #tpu.memory_space<vmem>>, vector<1x4x32xf32>
    %443 = vector.shape_cast %442 : vector<1x4x32xf32> to vector<4x32xf32>
    %444 = vector.shape_cast %441 : vector<4x32xf32> to vector<1x4x32xf32>
    tpu.vector_store %arg11[%c1_210, %c0_211, %c0_212], %444 {strides = array<i32>} : memref<6x4x32xf32, #tpu.memory_space<vmem>>, vector<1x4x32xf32>,
    %c0_213 = arith.constant 0 : index
    %c0_214 = arith.constant 0 : index
    %445 = vector.load %arg6[%c0_213, %c0_214] : memref<32x32xf32, #tpu.memory_space<vmem>>, vector<32x32xf32>
    %cst_215 = arith.constant dense<0.000000e+00> : vector<4x32xf32>
    %446 = tpu.matmul %441, %445, %cst_215 {dimension_numbers = #tpu.dot_dimension_numbers<[1], [0], [0], [1], [0, 0, 1, 1], [], []>} : vector<4x32xf32>, vector<32x32xf32>, vector<4x32xf32> -> vector<4x32xf32>
    %447 = arith.addf %446, %381 : vector<4x32xf32>
    %cst_216 = arith.constant 0.000000e+00 : f32
    %448 = vector.broadcast %cst_216 : f32 to vector<4x32xf32>
    %449 = arith.maximumf %447, %448 : vector<4x32xf32>
    %c0_217 = arith.constant 0 : index
    %c0_218 = arith.constant 0 : index
    %450 = vector.load %arg12[%c0_217, %c0_218] : memref<4x64xf32, #tpu.memory_space<vmem>>, vector<4x32xf32>
    tpu.vector_store %arg12[%c0_217, %c0_218], %449 {strides = array<i32>} : memref<4x64xf32, #tpu.memory_space<vmem>>, vector<4x32xf32>,
    %c0_219 = arith.constant 0 : index
    %c32_220 = arith.constant 32 : index
    %451 = vector.load %arg12[%c0_219, %c32_220] : memref<4x64xf32, #tpu.memory_space<vmem>>, vector<4x32xf32>
    tpu.vector_store %arg12[%c0_219, %c32_220], %420 {strides = array<i32>} : memref<4x64xf32, #tpu.memory_space<vmem>>, vector<4x32xf32>,
    %c0_221 = arith.constant 0 : index
    %c0_222 = arith.constant 0 : index
    %452 = vector.load %arg12[%c0_221, %c0_222] : memref<4x64xf32, #tpu.memory_space<vmem>>, vector<4x64xf32>
    %cst_223 = arith.constant dense<0.000000e+00> : vector<4x128xf32>
    %453 = tpu.matmul %452, %383, %cst_223 {dimension_numbers = #tpu.dot_dimension_numbers<[1], [0], [0], [1], [0, 0, 1, 1], [], []>} : vector<4x64xf32>, vector<64x128xf32>, vector<4x128xf32> -> vector<4x128xf32>
    %454 = vector.broadcast %387 : vector<1x128xf32> to vector<4x128xf32>
    %455 = arith.addf %453, %454 : vector<4x128xf32>
    %456 = arith.negf %455 : vector<4x128xf32>
    %457 = math.exp %456 : vector<4x128xf32>
    %cst_224 = arith.constant 1.000000e+00 : f32
    %458 = vector.broadcast %cst_224 : f32 to vector<4x128xf32>
    %459 = arith.addf %458, %457 : vector<4x128xf32>
    %460 = arith.divf %458, %459 : vector<4x128xf32>
    %461 = math.tanh %455 : vector<4x128xf32>
    %462 = vector.extract_strided_slice %460 {offsets = [0, 0], sizes = [4, 32], strides = [1, 1]} : vector<4x128xf32> to vector<4x32xf32>
    %463 = vector.extract_strided_slice %460 {offsets = [0, 32], sizes = [4, 32], strides = [1, 1]} : vector<4x128xf32> to vector<4x32xf32>
    %464 = vector.extract_strided_slice %461 {offsets = [0, 64], sizes = [4, 32], strides = [1, 1]} : vector<4x128xf32> to vector<4x32xf32>
    %465 = vector.extract_strided_slice %460 {offsets = [0, 96], sizes = [4, 32], strides = [1, 1]} : vector<4x128xf32> to vector<4x32xf32>
    %466 = arith.mulf %463, %418 : vector<4x32xf32>
    %467 = arith.mulf %462, %464 : vector<4x32xf32>
    %468 = arith.addf %466, %467 : vector<4x32xf32>
    %469 = math.tanh %468 : vector<4x32xf32>
    %470 = arith.mulf %465, %469 : vector<4x32xf32>
    %c0_225 = arith.constant 0 : index
    %c0_226 = arith.constant 0 : index
    %471 = vector.load %arg12[%c0_225, %c0_226] : memref<4x64xf32, #tpu.memory_space<vmem>>, vector<4x32xf32>
    tpu.vector_store %arg12[%c0_225, %c0_226], %470 {strides = array<i32>} : memref<4x64xf32, #tpu.memory_space<vmem>>, vector<4x32xf32>,
    %c0_227 = arith.constant 0 : index
    %c32_228 = arith.constant 32 : index
    %472 = vector.load %arg12[%c0_227, %c32_228] : memref<4x64xf32, #tpu.memory_space<vmem>>, vector<4x32xf32>
    tpu.vector_store %arg12[%c0_227, %c32_228], %441 {strides = array<i32>} : memref<4x64xf32, #tpu.memory_space<vmem>>, vector<4x32xf32>,
    %c0_229 = arith.constant 0 : index
    %c0_230 = arith.constant 0 : index
    %473 = vector.load %arg12[%c0_229, %c0_230] : memref<4x64xf32, #tpu.memory_space<vmem>>, vector<4x64xf32>
    %cst_231 = arith.constant dense<0.000000e+00> : vector<4x128xf32>
    %474 = tpu.matmul %473, %385, %cst_231 {dimension_numbers = #tpu.dot_dimension_numbers<[1], [0], [0], [1], [0, 0, 1, 1], [], []>} : vector<4x64xf32>, vector<64x128xf32>, vector<4x128xf32> -> vector<4x128xf32>
    %475 = vector.broadcast %389 : vector<1x128xf32> to vector<4x128xf32>
    %476 = arith.addf %474, %475 : vector<4x128xf32>
    %477 = arith.negf %476 : vector<4x128xf32>
    %478 = math.exp %477 : vector<4x128xf32>
    %cst_232 = arith.constant 1.000000e+00 : f32
    %479 = vector.broadcast %cst_232 : f32 to vector<4x128xf32>
    %480 = arith.addf %479, %478 : vector<4x128xf32>
    %481 = arith.divf %479, %480 : vector<4x128xf32>
    %482 = math.tanh %476 : vector<4x128xf32>
    %483 = vector.extract_strided_slice %481 {offsets = [0, 0], sizes = [4, 32], strides = [1, 1]} : vector<4x128xf32> to vector<4x32xf32>
    %484 = vector.extract_strided_slice %481 {offsets = [0, 32], sizes = [4, 32], strides = [1, 1]} : vector<4x128xf32> to vector<4x32xf32>
    %485 = vector.extract_strided_slice %482 {offsets = [0, 64], sizes = [4, 32], strides = [1, 1]} : vector<4x128xf32> to vector<4x32xf32>
    %486 = vector.extract_strided_slice %481 {offsets = [0, 96], sizes = [4, 32], strides = [1, 1]} : vector<4x128xf32> to vector<4x32xf32>
    %487 = arith.mulf %484, %439 : vector<4x32xf32>
    %488 = arith.mulf %483, %485 : vector<4x32xf32>
    %489 = arith.addf %487, %488 : vector<4x32xf32>
    %490 = math.tanh %489 : vector<4x32xf32>
    %491 = arith.mulf %486, %490 : vector<4x32xf32>
    %c2_233 = arith.constant 2 : index
    %c0_234 = arith.constant 0 : index
    %c0_235 = arith.constant 0 : index
    %492 = vector.load %arg11[%c2_233, %c0_234, %c0_235] : memref<6x4x32xf32, #tpu.memory_space<vmem>>, vector<1x4x32xf32>
    %493 = vector.shape_cast %492 : vector<1x4x32xf32> to vector<4x32xf32>
    %494 = vector.shape_cast %491 : vector<4x32xf32> to vector<1x4x32xf32>
    tpu.vector_store %arg11[%c2_233, %c0_234, %c0_235], %494 {strides = array<i32>} : memref<6x4x32xf32, #tpu.memory_space<vmem>>, vector<1x4x32xf32>,
    %c0_236 = arith.constant 0 : index
    %c0_237 = arith.constant 0 : index
    %495 = vector.load %arg6[%c0_236, %c0_237] : memref<32x32xf32, #tpu.memory_space<vmem>>, vector<32x32xf32>
    %cst_238 = arith.constant dense<0.000000e+00> : vector<4x32xf32>
    %496 = tpu.matmul %491, %495, %cst_238 {dimension_numbers = #tpu.dot_dimension_numbers<[1], [0], [0], [1], [0, 0, 1, 1], [], []>} : vector<4x32xf32>, vector<32x32xf32>, vector<4x32xf32> -> vector<4x32xf32>
    %497 = arith.addf %496, %381 : vector<4x32xf32>
    %cst_239 = arith.constant 0.000000e+00 : f32
    %498 = vector.broadcast %cst_239 : f32 to vector<4x32xf32>
    %499 = arith.maximumf %497, %498 : vector<4x32xf32>
    %c0_240 = arith.constant 0 : index
    %c0_241 = arith.constant 0 : index
    %500 = vector.load %arg12[%c0_240, %c0_241] : memref<4x64xf32, #tpu.memory_space<vmem>>, vector<4x32xf32>
    tpu.vector_store %arg12[%c0_240, %c0_241], %499 {strides = array<i32>} : memref<4x64xf32, #tpu.memory_space<vmem>>, vector<4x32xf32>,
    %c0_242 = arith.constant 0 : index
    %c32_243 = arith.constant 32 : index
    %501 = vector.load %arg12[%c0_242, %c32_243] : memref<4x64xf32, #tpu.memory_space<vmem>>, vector<4x32xf32>
    tpu.vector_store %arg12[%c0_242, %c32_243], %470 {strides = array<i32>} : memref<4x64xf32, #tpu.memory_space<vmem>>, vector<4x32xf32>,
    %c0_244 = arith.constant 0 : index
    %c0_245 = arith.constant 0 : index
    %502 = vector.load %arg12[%c0_244, %c0_245] : memref<4x64xf32, #tpu.memory_space<vmem>>, vector<4x64xf32>
    %cst_246 = arith.constant dense<0.000000e+00> : vector<4x128xf32>
    %503 = tpu.matmul %502, %383, %cst_246 {dimension_numbers = #tpu.dot_dimension_numbers<[1], [0], [0], [1], [0, 0, 1, 1], [], []>} : vector<4x64xf32>, vector<64x128xf32>, vector<4x128xf32> -> vector<4x128xf32>
    %504 = vector.broadcast %387 : vector<1x128xf32> to vector<4x128xf32>
    %505 = arith.addf %503, %504 : vector<4x128xf32>
    %506 = arith.negf %505 : vector<4x128xf32>
    %507 = math.exp %506 : vector<4x128xf32>
    %cst_247 = arith.constant 1.000000e+00 : f32
    %508 = vector.broadcast %cst_247 : f32 to vector<4x128xf32>
    %509 = arith.addf %508, %507 : vector<4x128xf32>
    %510 = arith.divf %508, %509 : vector<4x128xf32>
    %511 = math.tanh %505 : vector<4x128xf32>
    %512 = vector.extract_strided_slice %510 {offsets = [0, 0], sizes = [4, 32], strides = [1, 1]} : vector<4x128xf32> to vector<4x32xf32>
    %513 = vector.extract_strided_slice %510 {offsets = [0, 32], sizes = [4, 32], strides = [1, 1]} : vector<4x128xf32> to vector<4x32xf32>
    %514 = vector.extract_strided_slice %511 {offsets = [0, 64], sizes = [4, 32], strides = [1, 1]} : vector<4x128xf32> to vector<4x32xf32>
    %515 = vector.extract_strided_slice %510 {offsets = [0, 96], sizes = [4, 32], strides = [1, 1]} : vector<4x128xf32> to vector<4x32xf32>
    %516 = arith.mulf %513, %468 : vector<4x32xf32>
    %517 = arith.mulf %512, %514 : vector<4x32xf32>
    %518 = arith.addf %516, %517 : vector<4x32xf32>
    %519 = math.tanh %518 : vector<4x32xf32>
    %520 = arith.mulf %515, %519 : vector<4x32xf32>
    %c0_248 = arith.constant 0 : index
    %c0_249 = arith.constant 0 : index
    %521 = vector.load %arg12[%c0_248, %c0_249] : memref<4x64xf32, #tpu.memory_space<vmem>>, vector<4x32xf32>
    tpu.vector_store %arg12[%c0_248, %c0_249], %520 {strides = array<i32>} : memref<4x64xf32, #tpu.memory_space<vmem>>, vector<4x32xf32>,
    %c0_250 = arith.constant 0 : index
    %c32_251 = arith.constant 32 : index
    %522 = vector.load %arg12[%c0_250, %c32_251] : memref<4x64xf32, #tpu.memory_space<vmem>>, vector<4x32xf32>
    tpu.vector_store %arg12[%c0_250, %c32_251], %491 {strides = array<i32>} : memref<4x64xf32, #tpu.memory_space<vmem>>, vector<4x32xf32>,
    %c0_252 = arith.constant 0 : index
    %c0_253 = arith.constant 0 : index
    %523 = vector.load %arg12[%c0_252, %c0_253] : memref<4x64xf32, #tpu.memory_space<vmem>>, vector<4x64xf32>
    %cst_254 = arith.constant dense<0.000000e+00> : vector<4x128xf32>
    %524 = tpu.matmul %523, %385, %cst_254 {dimension_numbers = #tpu.dot_dimension_numbers<[1], [0], [0], [1], [0, 0, 1, 1], [], []>} : vector<4x64xf32>, vector<64x128xf32>, vector<4x128xf32> -> vector<4x128xf32>
    %525 = vector.broadcast %389 : vector<1x128xf32> to vector<4x128xf32>
    %526 = arith.addf %524, %525 : vector<4x128xf32>
    %527 = arith.negf %526 : vector<4x128xf32>
    %528 = math.exp %527 : vector<4x128xf32>
    %cst_255 = arith.constant 1.000000e+00 : f32
    %529 = vector.broadcast %cst_255 : f32 to vector<4x128xf32>
    %530 = arith.addf %529, %528 : vector<4x128xf32>
    %531 = arith.divf %529, %530 : vector<4x128xf32>
    %532 = math.tanh %526 : vector<4x128xf32>
    %533 = vector.extract_strided_slice %531 {offsets = [0, 0], sizes = [4, 32], strides = [1, 1]} : vector<4x128xf32> to vector<4x32xf32>
    %534 = vector.extract_strided_slice %531 {offsets = [0, 32], sizes = [4, 32], strides = [1, 1]} : vector<4x128xf32> to vector<4x32xf32>
    %535 = vector.extract_strided_slice %532 {offsets = [0, 64], sizes = [4, 32], strides = [1, 1]} : vector<4x128xf32> to vector<4x32xf32>
    %536 = vector.extract_strided_slice %531 {offsets = [0, 96], sizes = [4, 32], strides = [1, 1]} : vector<4x128xf32> to vector<4x32xf32>
    %537 = arith.mulf %534, %489 : vector<4x32xf32>
    %538 = arith.mulf %533, %535 : vector<4x32xf32>
    %539 = arith.addf %537, %538 : vector<4x32xf32>
    %540 = math.tanh %539 : vector<4x32xf32>
    %541 = arith.mulf %536, %540 : vector<4x32xf32>
    %c3_256 = arith.constant 3 : index
    %c0_257 = arith.constant 0 : index
    %c0_258 = arith.constant 0 : index
    %542 = vector.load %arg11[%c3_256, %c0_257, %c0_258] : memref<6x4x32xf32, #tpu.memory_space<vmem>>, vector<1x4x32xf32>
    %543 = vector.shape_cast %542 : vector<1x4x32xf32> to vector<4x32xf32>
    %544 = vector.shape_cast %541 : vector<4x32xf32> to vector<1x4x32xf32>
    tpu.vector_store %arg11[%c3_256, %c0_257, %c0_258], %544 {strides = array<i32>} : memref<6x4x32xf32, #tpu.memory_space<vmem>>, vector<1x4x32xf32>,
    %c0_259 = arith.constant 0 : index
    %c0_260 = arith.constant 0 : index
    %545 = vector.load %arg6[%c0_259, %c0_260] : memref<32x32xf32, #tpu.memory_space<vmem>>, vector<32x32xf32>
    %cst_261 = arith.constant dense<0.000000e+00> : vector<4x32xf32>
    %546 = tpu.matmul %541, %545, %cst_261 {dimension_numbers = #tpu.dot_dimension_numbers<[1], [0], [0], [1], [0, 0, 1, 1], [], []>} : vector<4x32xf32>, vector<32x32xf32>, vector<4x32xf32> -> vector<4x32xf32>
    %547 = arith.addf %546, %381 : vector<4x32xf32>
    %cst_262 = arith.constant 0.000000e+00 : f32
    %548 = vector.broadcast %cst_262 : f32 to vector<4x32xf32>
    %549 = arith.maximumf %547, %548 : vector<4x32xf32>
    %c0_263 = arith.constant 0 : index
    %c0_264 = arith.constant 0 : index
    %550 = vector.load %arg12[%c0_263, %c0_264] : memref<4x64xf32, #tpu.memory_space<vmem>>, vector<4x32xf32>
    tpu.vector_store %arg12[%c0_263, %c0_264], %549 {strides = array<i32>} : memref<4x64xf32, #tpu.memory_space<vmem>>, vector<4x32xf32>,
    %c0_265 = arith.constant 0 : index
    %c32_266 = arith.constant 32 : index
    %551 = vector.load %arg12[%c0_265, %c32_266] : memref<4x64xf32, #tpu.memory_space<vmem>>, vector<4x32xf32>
    tpu.vector_store %arg12[%c0_265, %c32_266], %520 {strides = array<i32>} : memref<4x64xf32, #tpu.memory_space<vmem>>, vector<4x32xf32>,
    %c0_267 = arith.constant 0 : index
    %c0_268 = arith.constant 0 : index
    %552 = vector.load %arg12[%c0_267, %c0_268] : memref<4x64xf32, #tpu.memory_space<vmem>>, vector<4x64xf32>
    %cst_269 = arith.constant dense<0.000000e+00> : vector<4x128xf32>
    %553 = tpu.matmul %552, %383, %cst_269 {dimension_numbers = #tpu.dot_dimension_numbers<[1], [0], [0], [1], [0, 0, 1, 1], [], []>} : vector<4x64xf32>, vector<64x128xf32>, vector<4x128xf32> -> vector<4x128xf32>
    %554 = vector.broadcast %387 : vector<1x128xf32> to vector<4x128xf32>
    %555 = arith.addf %553, %554 : vector<4x128xf32>
    %556 = arith.negf %555 : vector<4x128xf32>
    %557 = math.exp %556 : vector<4x128xf32>
    %cst_270 = arith.constant 1.000000e+00 : f32
    %558 = vector.broadcast %cst_270 : f32 to vector<4x128xf32>
    %559 = arith.addf %558, %557 : vector<4x128xf32>
    %560 = arith.divf %558, %559 : vector<4x128xf32>
    %561 = math.tanh %555 : vector<4x128xf32>
    %562 = vector.extract_strided_slice %560 {offsets = [0, 0], sizes = [4, 32], strides = [1, 1]} : vector<4x128xf32> to vector<4x32xf32>
    %563 = vector.extract_strided_slice %560 {offsets = [0, 32], sizes = [4, 32], strides = [1, 1]} : vector<4x128xf32> to vector<4x32xf32>
    %564 = vector.extract_strided_slice %561 {offsets = [0, 64], sizes = [4, 32], strides = [1, 1]} : vector<4x128xf32> to vector<4x32xf32>
    %565 = vector.extract_strided_slice %560 {offsets = [0, 96], sizes = [4, 32], strides = [1, 1]} : vector<4x128xf32> to vector<4x32xf32>
    %566 = arith.mulf %563, %518 : vector<4x32xf32>
    %567 = arith.mulf %562, %564 : vector<4x32xf32>
    %568 = arith.addf %566, %567 : vector<4x32xf32>
    %569 = math.tanh %568 : vector<4x32xf32>
    %570 = arith.mulf %565, %569 : vector<4x32xf32>
    %c0_271 = arith.constant 0 : index
    %c0_272 = arith.constant 0 : index
    %571 = vector.load %arg12[%c0_271, %c0_272] : memref<4x64xf32, #tpu.memory_space<vmem>>, vector<4x32xf32>
    tpu.vector_store %arg12[%c0_271, %c0_272], %570 {strides = array<i32>} : memref<4x64xf32, #tpu.memory_space<vmem>>, vector<4x32xf32>,
    %c0_273 = arith.constant 0 : index
    %c32_274 = arith.constant 32 : index
    %572 = vector.load %arg12[%c0_273, %c32_274] : memref<4x64xf32, #tpu.memory_space<vmem>>, vector<4x32xf32>
    tpu.vector_store %arg12[%c0_273, %c32_274], %541 {strides = array<i32>} : memref<4x64xf32, #tpu.memory_space<vmem>>, vector<4x32xf32>,
    %c0_275 = arith.constant 0 : index
    %c0_276 = arith.constant 0 : index
    %573 = vector.load %arg12[%c0_275, %c0_276] : memref<4x64xf32, #tpu.memory_space<vmem>>, vector<4x64xf32>
    %cst_277 = arith.constant dense<0.000000e+00> : vector<4x128xf32>
    %574 = tpu.matmul %573, %385, %cst_277 {dimension_numbers = #tpu.dot_dimension_numbers<[1], [0], [0], [1], [0, 0, 1, 1], [], []>} : vector<4x64xf32>, vector<64x128xf32>, vector<4x128xf32> -> vector<4x128xf32>
    %575 = vector.broadcast %389 : vector<1x128xf32> to vector<4x128xf32>
    %576 = arith.addf %574, %575 : vector<4x128xf32>
    %577 = arith.negf %576 : vector<4x128xf32>
    %578 = math.exp %577 : vector<4x128xf32>
    %cst_278 = arith.constant 1.000000e+00 : f32
    %579 = vector.broadcast %cst_278 : f32 to vector<4x128xf32>
    %580 = arith.addf %579, %578 : vector<4x128xf32>
    %581 = arith.divf %579, %580 : vector<4x128xf32>
    %582 = math.tanh %576 : vector<4x128xf32>
    %583 = vector.extract_strided_slice %581 {offsets = [0, 0], sizes = [4, 32], strides = [1, 1]} : vector<4x128xf32> to vector<4x32xf32>
    %584 = vector.extract_strided_slice %581 {offsets = [0, 32], sizes = [4, 32], strides = [1, 1]} : vector<4x128xf32> to vector<4x32xf32>
    %585 = vector.extract_strided_slice %582 {offsets = [0, 64], sizes = [4, 32], strides = [1, 1]} : vector<4x128xf32> to vector<4x32xf32>
    %586 = vector.extract_strided_slice %581 {offsets = [0, 96], sizes = [4, 32], strides = [1, 1]} : vector<4x128xf32> to vector<4x32xf32>
    %587 = arith.mulf %584, %539 : vector<4x32xf32>
    %588 = arith.mulf %583, %585 : vector<4x32xf32>
    %589 = arith.addf %587, %588 : vector<4x32xf32>
    %590 = math.tanh %589 : vector<4x32xf32>
    %591 = arith.mulf %586, %590 : vector<4x32xf32>
    %c4_279 = arith.constant 4 : index
    %c0_280 = arith.constant 0 : index
    %c0_281 = arith.constant 0 : index
    %592 = vector.load %arg11[%c4_279, %c0_280, %c0_281] : memref<6x4x32xf32, #tpu.memory_space<vmem>>, vector<1x4x32xf32>
    %593 = vector.shape_cast %592 : vector<1x4x32xf32> to vector<4x32xf32>
    %594 = vector.shape_cast %591 : vector<4x32xf32> to vector<1x4x32xf32>
    tpu.vector_store %arg11[%c4_279, %c0_280, %c0_281], %594 {strides = array<i32>} : memref<6x4x32xf32, #tpu.memory_space<vmem>>, vector<1x4x32xf32>,
    %c0_282 = arith.constant 0 : index
    %c0_283 = arith.constant 0 : index
    %595 = vector.load %arg6[%c0_282, %c0_283] : memref<32x32xf32, #tpu.memory_space<vmem>>, vector<32x32xf32>
    %cst_284 = arith.constant dense<0.000000e+00> : vector<4x32xf32>
    %596 = tpu.matmul %591, %595, %cst_284 {dimension_numbers = #tpu.dot_dimension_numbers<[1], [0], [0], [1], [0, 0, 1, 1], [], []>} : vector<4x32xf32>, vector<32x32xf32>, vector<4x32xf32> -> vector<4x32xf32>
    %597 = arith.addf %596, %381 : vector<4x32xf32>
    %cst_285 = arith.constant 0.000000e+00 : f32
    %598 = vector.broadcast %cst_285 : f32 to vector<4x32xf32>
    %599 = arith.maximumf %597, %598 : vector<4x32xf32>
    %c0_286 = arith.constant 0 : index
    %c0_287 = arith.constant 0 : index
    %600 = vector.load %arg12[%c0_286, %c0_287] : memref<4x64xf32, #tpu.memory_space<vmem>>, vector<4x32xf32>
    tpu.vector_store %arg12[%c0_286, %c0_287], %599 {strides = array<i32>} : memref<4x64xf32, #tpu.memory_space<vmem>>, vector<4x32xf32>,
    %c0_288 = arith.constant 0 : index
    %c32_289 = arith.constant 32 : index
    %601 = vector.load %arg12[%c0_288, %c32_289] : memref<4x64xf32, #tpu.memory_space<vmem>>, vector<4x32xf32>
    tpu.vector_store %arg12[%c0_288, %c32_289], %570 {strides = array<i32>} : memref<4x64xf32, #tpu.memory_space<vmem>>, vector<4x32xf32>,
    %c0_290 = arith.constant 0 : index
    %c0_291 = arith.constant 0 : index
    %602 = vector.load %arg12[%c0_290, %c0_291] : memref<4x64xf32, #tpu.memory_space<vmem>>, vector<4x64xf32>
    %cst_292 = arith.constant dense<0.000000e+00> : vector<4x128xf32>
    %603 = tpu.matmul %602, %383, %cst_292 {dimension_numbers = #tpu.dot_dimension_numbers<[1], [0], [0], [1], [0, 0, 1, 1], [], []>} : vector<4x64xf32>, vector<64x128xf32>, vector<4x128xf32> -> vector<4x128xf32>
    %604 = vector.broadcast %387 : vector<1x128xf32> to vector<4x128xf32>
    %605 = arith.addf %603, %604 : vector<4x128xf32>
    %606 = arith.negf %605 : vector<4x128xf32>
    %607 = math.exp %606 : vector<4x128xf32>
    %cst_293 = arith.constant 1.000000e+00 : f32
    %608 = vector.broadcast %cst_293 : f32 to vector<4x128xf32>
    %609 = arith.addf %608, %607 : vector<4x128xf32>
    %610 = arith.divf %608, %609 : vector<4x128xf32>
    %611 = math.tanh %605 : vector<4x128xf32>
    %612 = vector.extract_strided_slice %610 {offsets = [0, 0], sizes = [4, 32], strides = [1, 1]} : vector<4x128xf32> to vector<4x32xf32>
    %613 = vector.extract_strided_slice %610 {offsets = [0, 32], sizes = [4, 32], strides = [1, 1]} : vector<4x128xf32> to vector<4x32xf32>
    %614 = vector.extract_strided_slice %611 {offsets = [0, 64], sizes = [4, 32], strides = [1, 1]} : vector<4x128xf32> to vector<4x32xf32>
    %615 = vector.extract_strided_slice %610 {offsets = [0, 96], sizes = [4, 32], strides = [1, 1]} : vector<4x128xf32> to vector<4x32xf32>
    %616 = arith.mulf %613, %568 : vector<4x32xf32>
    %617 = arith.mulf %612, %614 : vector<4x32xf32>
    %618 = arith.addf %616, %617 : vector<4x32xf32>
    %619 = math.tanh %618 : vector<4x32xf32>
    %620 = arith.mulf %615, %619 : vector<4x32xf32>
    %c0_294 = arith.constant 0 : index
    %c0_295 = arith.constant 0 : index
    %621 = vector.load %arg12[%c0_294, %c0_295] : memref<4x64xf32, #tpu.memory_space<vmem>>, vector<4x32xf32>
    tpu.vector_store %arg12[%c0_294, %c0_295], %620 {strides = array<i32>} : memref<4x64xf32, #tpu.memory_space<vmem>>, vector<4x32xf32>,
    %c0_296 = arith.constant 0 : index
    %c32_297 = arith.constant 32 : index
    %622 = vector.load %arg12[%c0_296, %c32_297] : memref<4x64xf32, #tpu.memory_space<vmem>>, vector<4x32xf32>
    tpu.vector_store %arg12[%c0_296, %c32_297], %591 {strides = array<i32>} : memref<4x64xf32, #tpu.memory_space<vmem>>, vector<4x32xf32>,
    %c0_298 = arith.constant 0 : index
    %c0_299 = arith.constant 0 : index
    %623 = vector.load %arg12[%c0_298, %c0_299] : memref<4x64xf32, #tpu.memory_space<vmem>>, vector<4x64xf32>
    %cst_300 = arith.constant dense<0.000000e+00> : vector<4x128xf32>
    %624 = tpu.matmul %623, %385, %cst_300 {dimension_numbers = #tpu.dot_dimension_numbers<[1], [0], [0], [1], [0, 0, 1, 1], [], []>} : vector<4x64xf32>, vector<64x128xf32>, vector<4x128xf32> -> vector<4x128xf32>
    %625 = vector.broadcast %389 : vector<1x128xf32> to vector<4x128xf32>
    %626 = arith.addf %624, %625 : vector<4x128xf32>
    %627 = arith.negf %626 : vector<4x128xf32>
    %628 = math.exp %627 : vector<4x128xf32>
    %cst_301 = arith.constant 1.000000e+00 : f32
    %629 = vector.broadcast %cst_301 : f32 to vector<4x128xf32>
    %630 = arith.addf %629, %628 : vector<4x128xf32>
    %631 = arith.divf %629, %630 : vector<4x128xf32>
    %632 = math.tanh %626 : vector<4x128xf32>
    %633 = vector.extract_strided_slice %631 {offsets = [0, 0], sizes = [4, 32], strides = [1, 1]} : vector<4x128xf32> to vector<4x32xf32>
    %634 = vector.extract_strided_slice %631 {offsets = [0, 32], sizes = [4, 32], strides = [1, 1]} : vector<4x128xf32> to vector<4x32xf32>
    %635 = vector.extract_strided_slice %632 {offsets = [0, 64], sizes = [4, 32], strides = [1, 1]} : vector<4x128xf32> to vector<4x32xf32>
    %636 = vector.extract_strided_slice %631 {offsets = [0, 96], sizes = [4, 32], strides = [1, 1]} : vector<4x128xf32> to vector<4x32xf32>
    %637 = arith.mulf %634, %589 : vector<4x32xf32>
    %638 = arith.mulf %633, %635 : vector<4x32xf32>
    %639 = arith.addf %637, %638 : vector<4x32xf32>
    %640 = math.tanh %639 : vector<4x32xf32>
    %641 = arith.mulf %636, %640 : vector<4x32xf32>
    %c5_302 = arith.constant 5 : index
    %c0_303 = arith.constant 0 : index
    %c0_304 = arith.constant 0 : index
    %642 = vector.load %arg11[%c5_302, %c0_303, %c0_304] : memref<6x4x32xf32, #tpu.memory_space<vmem>>, vector<1x4x32xf32>
    %643 = vector.shape_cast %642 : vector<1x4x32xf32> to vector<4x32xf32>
    %644 = vector.shape_cast %641 : vector<4x32xf32> to vector<1x4x32xf32>
    tpu.vector_store %arg11[%c5_302, %c0_303, %c0_304], %644 {strides = array<i32>} : memref<6x4x32xf32, #tpu.memory_space<vmem>>, vector<1x4x32xf32>,
    return
  }
}

</mosaic_0001>

<llo_original>
// kernel: seq2seq_forward.1
$region0: #{seq2seq_forward.1}
  #allocation0 [shape = 'u32[]', space=smem, size = 0x4, offset = 0x4, fixed_abs, tag = 'smem constant byte address 0x4 - core index']
  #allocation1 [shape = 'u32[144,128]{1,0:T(1,128)}', space=vmem, size = 0x12000, scoped, tag = 'internal scratch']
  #allocation2 [shape = 'f32[4,64]{1,0:T(4,128)}', space=vmem, size = 0x800, scoped, tag = 'scratch operand']
  %s0 = inlined_call_operand.vmem [shape: f32[8,4,32], index: 0, kind: input, shape index: {}]
  %s1 = inlined_call_operand.vmem [shape: f32[2,4,32], index: 1, kind: input, shape index: {}]
  %s2 = inlined_call_operand.vmem [shape: f32[2,4,32], index: 2, kind: input, shape index: {}]
  %s3 = inlined_call_operand.vmem [shape: f32[2,64,128], index: 3, kind: input, shape index: {}]
  %s4 = inlined_call_operand.vmem [shape: f32[2,1,128], index: 4, kind: input, shape index: {}]
  %s5 = inlined_call_operand.vmem [shape: f32[4,32], index: 5, kind: input, shape index: {}]
  %s6 = inlined_call_operand.vmem [shape: f32[32,32], index: 6, kind: input, shape index: {}]
  %s7 = inlined_call_operand.vmem [shape: f32[32,32], index: 7, kind: input, shape index: {}]
  %s8 = inlined_call_operand.vmem [shape: f32[1,32], index: 8, kind: input, shape index: {}]
  %s9 = inlined_call_operand.vmem [shape: f32[2,64,128], index: 9, kind: input, shape index: {}]
  %s10 = inlined_call_operand.vmem [shape: f32[2,1,128], index: 10, kind: input, shape index: {}]
  %s11 = inlined_call_operand.hbm [shape: f32[6,4,32], index: 11, kind: output, shape index: {}]
  %s12 = sld [smem:[#allocation0]]
  $region54: #{seq2seq_forward.1} parent=0
    _
  %s14 = ssub.s32 1, %s12
  %s15 = scalar_select 0, %s14, %s12
  $region1: #{seq2seq_forward.1} parent=0
    #allocation3 [shape = 'u8[12288]{0}', space=vmem, size = 0x3000, scoped, tag = 'output window, operand 0, single buffered']
    #allocation4 [shape = 's32[1]{0}', space=sflag, size = 0x4, scoped, tag = 'scoped memory for seq2seq_forward.1']
    %16 = vsyncpa [#allocation4], 0
    // Predicated region
    $region2: #{seq2seq_forward.1} parent=1 // pred_check
      _
    $region3: #{seq2seq_forward.1} parent=1 // pred_check_branch
      %18 = sbr.rel (0) target = $region5
    $region4: #{seq2seq_forward.1} parent=1 // pred_region
      _
    $region5: #{seq2seq_forward.1} parent=1 // pred_fallthru
      _
    // Predicated region
    $region6: #{seq2seq_forward.1} parent=1 // pred_check
      _
    $region7: #{seq2seq_forward.1} parent=1 // pred_check_branch
      %20 = sbr.rel (0) target = $region9
    $region8: #{seq2seq_forward.1} parent=1 // pred_region
      _
    $region9: #{seq2seq_forward.1} parent=1 // pred_fallthru
      _
    // Predicated region
    $region10: #{seq2seq_forward.1} parent=1 // pred_check
      _
    $region11: #{seq2seq_forward.1} parent=1 // pred_check_branch
      %22 = sbr.rel (0) target = $region13
    $region12: #{seq2seq_forward.1} parent=1 // pred_region
      _
    $region13: #{seq2seq_forward.1} parent=1 // pred_fallthru
      _
    // Predicated region
    $region14: #{seq2seq_forward.1} parent=1 // pred_check
      _
    $region15: #{seq2seq_forward.1} parent=1 // pred_check_branch
      %24 = sbr.rel (0) target = $region17
    $region16: #{seq2seq_forward.1} parent=1 // pred_region
      _
    $region17: #{seq2seq_forward.1} parent=1 // pred_fallthru
      _
    // Predicated region
    $region18: #{seq2seq_forward.1} parent=1 // pred_check
      _
    $region19: #{seq2seq_forward.1} parent=1 // pred_check_branch
      %26 = sbr.rel (0) target = $region21
    $region20: #{seq2seq_forward.1} parent=1 // pred_region
      _
    $region21: #{seq2seq_forward.1} parent=1 // pred_fallthru
      _
    // Predicated region
    $region22: #{seq2seq_forward.1} parent=1 // pred_check
      _
    $region23: #{seq2seq_forward.1} parent=1 // pred_check_branch
      %28 = sbr.rel (0) target = $region25
    $region24: #{seq2seq_forward.1} parent=1 // pred_region
      _
    $region25: #{seq2seq_forward.1} parent=1 // pred_fallthru
      _
    // Predicated region
    $region26: #{seq2seq_forward.1} parent=1 // pred_check
      _
    $region27: #{seq2seq_forward.1} parent=1 // pred_check_branch
      %30 = sbr.rel (0) target = $region29
    $region28: #{seq2seq_forward.1} parent=1 // pred_region
      _
    $region29: #{seq2seq_forward.1} parent=1 // pred_fallthru
      _
    // Predicated region
    $region30: #{seq2seq_forward.1} parent=1 // pred_check
      _
    $region31: #{seq2seq_forward.1} parent=1 // pred_check_branch
      %32 = sbr.rel (0) target = $region33
    $region32: #{seq2seq_forward.1} parent=1 // pred_region
      _
    $region33: #{seq2seq_forward.1} parent=1 // pred_fallthru
      _
    // Predicated region
    $region34: #{seq2seq_forward.1} parent=1 // pred_check
      _
    $region35: #{seq2seq_forward.1} parent=1 // pred_check_branch
      %34 = sbr.rel (0) target = $region37
    $region36: #{seq2seq_forward.1} parent=1 // pred_region
      _
    $region37: #{seq2seq_forward.1} parent=1 // pred_fallthru
      _
    // Predicated region
    $region38: #{seq2seq_forward.1} parent=1 // pred_check
      _
    $region39: #{seq2seq_forward.1} parent=1 // pred_check_branch
      %36 = sbr.rel (0) target = $region41
    $region40: #{seq2seq_forward.1} parent=1 // pred_region
      _
    $region41: #{seq2seq_forward.1} parent=1 // pred_fallthru
      _
    // Predicated region
    $region42: #{seq2seq_forward.1} parent=1 // pred_check
      _
    $region43: #{seq2seq_forward.1} parent=1 // pred_check_branch
      %38 = sbr.rel (0) target = $region45
    $region44: #{seq2seq_forward.1} parent=1 // pred_region
      _
    $region45: #{seq2seq_forward.1} parent=1 // pred_fallthru
      _
    %v39 = vld [vmem:[%s1] sm:$0xf]
    %s40 = scalar_lea.vmem %s1, 4
    %v41 = vld [vmem:[%s40] sm:$0xf]
    %v42 = vld [vmem:[%s2] sm:$0xf]
    %s43 = scalar_lea.vmem %s2, 4
    %v44 = vld [vmem:[%s43] sm:$0xf]
    %v45 = vld [vmem:[%s3] sm:$0xff]
    %v46 = vld [vmem:[%s3 + $0x8] sm:$0xff]
    %v47 = vld [vmem:[%s3 + $0x10] sm:$0xff]
    %v48 = vld [vmem:[%s3 + $0x18] sm:$0xff]
    %v49 = vld [vmem:[%s3 + $0x20] sm:$0xff]
    %v50 = vld [vmem:[%s3 + $0x28] sm:$0xff]
    %v51 = vld [vmem:[%s3 + $0x30] sm:$0xff]
    %v52 = vld [vmem:[%s3 + $0x38] sm:$0xff]
    %s53 = scalar_lea.vmem %s3, 64
    %v54 = vld [vmem:[%s53] sm:$0xff]
    %v55 = vld [vmem:[%s53 + $0x8] sm:$0xff]
    %v56 = vld [vmem:[%s53 + $0x10] sm:$0xff]
    %v57 = vld [vmem:[%s53 + $0x18] sm:$0xff]
    %v58 = vld [vmem:[%s53 + $0x20] sm:$0xff]
    %v59 = vld [vmem:[%s53 + $0x28] sm:$0xff]
    %v60 = vld [vmem:[%s53 + $0x30] sm:$0xff]
    %v61 = vld [vmem:[%s53 + $0x38] sm:$0xff]
    %v62 = vld [vmem:[%s4] sm:$0x1]
    %s63 = scalar_lea.vmem %s4, 1
    %v64 = vld [vmem:[%s63] sm:$0x1]
    %v65 = vld [vmem:[%s0] sm:$0xf]
    %vm66 = vcmask 257024
    %67 = vst.msk [vmem:[#allocation2] sm:$0xf] %vm66, %v65
    %69 = vrot.lane.b32.xlu0 %v39, 32
    %v70 = vpop.permute.xlu0 %69
    %vm72 = vcmask 519424
    %73 = vst.msk [vmem:[#allocation2] sm:$0xf] %vm72, %v70
    %v74 = vld [vmem:[#allocation2] sm:$0xf]
    %v76 = vlaneseq
    %v77 = vshrl.u32 %v76, 7
    %v78 = vsub.s32 0, %v77
    %v79 = vrot.slane %v62, %v78
    %vm81 = vcmask 523264
    %v83 = vsel %vm81, %v74, 0
    %85 = vmatprep.subr.mxu0 0.0
    %86 = vmatpush1.msra.mxu0 %v45
    %87 = vmatprep.subr.mxu0 0.0
    %88 = vmatpush1.msra.mxu0 %v46
    %89 = vmatprep.subr.mxu0 0.0
    %90 = vmatpush1.msra.mxu0 %v47
    %91 = vmatprep.subr.mxu0 0.0
    %92 = vmatpush1.msra.mxu0 %v48
    %93 = vmatprep.subr.mxu0 0.0
    %94 = vmatpush1.msra.mxu0 %v49
    %95 = vmatprep.subr.mxu0 0.0
    %96 = vmatpush1.msra.mxu0 %v50
    %97 = vmatprep.subr.mxu0 0.0
    %98 = vmatpush1.msra.mxu0 %v51
    %99 = vmatprep.subr.mxu0 0.0
    %100 = vmatpush1.msra.mxu0 %v52
    %101 = vmatprep.subr.mxu0 0.0
    %102 = vmatpush1.msra.mxu0 0.0
    %103 = vmatprep.subr.mxu0 0.0
    %104 = vmatpush1.msra.mxu0 0.0
    %105 = vmatprep.subr.mxu0 0.0
    %106 = vmatpush1.msra.mxu0 0.0
    %107 = vmatprep.subr.mxu0 0.0
    %108 = vmatpush1.msra.mxu0 0.0
    %109 = vmatprep.subr.mxu0 0.0
    %110 = vmatpush1.msra.mxu0 0.0
    %111 = vmatprep.subr.mxu0 0.0
    %112 = vmatpush1.msra.mxu0 0.0
    %113 = vmatprep.subr.mxu0 0.0
    %114 = vmatpush1.msra.mxu0 0.0
    %115 = vmatprep.subr.mxu0 0.0
    %116 = vmatpush1.msra.mxu0 0.0
    %117 = vmatprep.subr.mxu0 0.0
    %118 = vmatpush1.msra.mxu0 0.0
    %119 = vmatprep.subr.mxu0 0.0
    %120 = vmatpush1.msra.mxu0 0.0
    %121 = vmatprep.subr.mxu0 0.0
    %122 = vmatpush1.msra.mxu0 0.0
    %123 = vmatprep.subr.mxu0 0.0
    %124 = vmatpush1.msra.mxu0 0.0
    %125 = vmatprep.subr.mxu0 0.0
    %126 = vmatpush1.msra.mxu0 0.0
    %127 = vmatprep.subr.mxu0 0.0
    %128 = vmatpush1.msra.mxu0 0.0
    %129 = vmatprep.subr.mxu0 0.0
    %130 = vmatpush1.msra.mxu0 0.0
    %131 = vmatprep.subr.mxu0 0.0
    %132 = vmatpush1.msra.mxu0 0.0
    %133 = vmatprep.subr.mxu0 0.0
    %134 = vmatpush1.msra.mxu0 0.0
    %135 = vmatprep.subr.mxu0 0.0
    %136 = vmatpush1.msra.mxu0 0.0
    %137 = vmatprep.subr.mxu0 0.0
    %138 = vmatpush1.msra.mxu0 0.0
    %139 = vmatprep.subr.mxu0 0.0
    %140 = vmatpush1.msra.mxu0 0.0
    %141 = vmatprep.subr.mxu0 0.0
    %142 = vmatpush1.msra.mxu0 0.0
    %143 = vmatprep.subr.mxu0 0.0
    %144 = vmatpush1.msra.mxu0 0.0
    %145 = vmatprep.subr.mxu0 0.0
    %146 = vmatpush1.msra.mxu0 0.0
    %147 = vmatprep.subr.mxu0 0.0
    %148 = vmatpush1.msra.mxu0 0.0
    %149 = vmatprep.mubr.f32.mxu0 0.0
    %150 = vmatmul.mubr.f32.gmra.mrb[0].mxu0 %v83
    %v151 = vpop.f32.mrb[0].mxu0
    %v152 = vadd.f32 %v79, %v151
    %v153 = vpop.f32.mrb[0].mxu0
    %154 = vdwg.mxu0
    %v155 = vxor.u32 %v152, 2147483648
    %v156 = vmul.f32 %v155, 1.442695
    %v157 = vpow.pop %v156
    %v158 = vadd.f32 %v157, 1.0
    %v159 = vrcp.pop %v158
    %v160 = vmul.f32 1.0, %v159
    %v161 = vtanh.pop %v152
    %163 = vrot.lane.b32.xlu0 %v42, 32
    %v164 = vpop.permute.xlu0 %163
    %v166 = vmul.f32 %v160, %v164
    %168 = vrot.lane.b32.xlu0 %v161, 64
    %v169 = vpop.permute.xlu0 %168
    %v171 = vmul.f32 %v160, %v169
    %173 = vrot.lane.b32.xlu0 %v171, 32
    %v174 = vpop.permute.xlu0 %173
    %v176 = vadd.f32 %v166, %v174
    %v177 = vtanh.pop %v176
    %179 = vrot.lane.b32.xlu0 %v177, 64
    %v180 = vpop.permute.xlu0 %179
    %v182 = vmul.f32 %v160, %v180
    %184 = vrot.lane.b32.xlu0 %v182, 32
    %v185 = vpop.permute.xlu0 %184
    %187 = vst.msk [vmem:[#allocation2] sm:$0xf] %vm66, %v185
    %189 = vrot.lane.b32.xlu0 %v41, 32
    %v190 = vpop.permute.xlu0 %189
    %192 = vst.msk [vmem:[#allocation2] sm:$0xf] %vm72, %v190
    %v193 = vld [vmem:[#allocation2] sm:$0xf]
    %v195 = vlaneseq
    %v196 = vshrl.u32 %v195, 7
    %v197 = vsub.s32 0, %v196
    %v198 = vrot.slane %v64, %v197
    %v201 = vsel %vm81, %v193, 0
    %203 = vmatprep.subr.mxu0 0.0
    %204 = vmatpush1.msra.mxu0 %v54
    %205 = vmatprep.subr.mxu0 0.0
    %206 = vmatpush1.msra.mxu0 %v55
    %207 = vmatprep.subr.mxu0 0.0
    %208 = vmatpush1.msra.mxu0 %v56
    %209 = vmatprep.subr.mxu0 0.0
    %210 = vmatpush1.msra.mxu0 %v57
    %211 = vmatprep.subr.mxu0 0.0
    %212 = vmatpush1.msra.mxu0 %v58
    %213 = vmatprep.subr.mxu0 0.0
    %214 = vmatpush1.msra.mxu0 %v59
    %215 = vmatprep.subr.mxu0 0.0
    %216 = vmatpush1.msra.mxu0 %v60
    %217 = vmatprep.subr.mxu0 0.0
    %218 = vmatpush1.msra.mxu0 %v61
    %219 = vmatprep.subr.mxu0 0.0
    %220 = vmatpush1.msra.mxu0 0.0
    %221 = vmatprep.subr.mxu0 0.0
    %222 = vmatpush1.msra.mxu0 0.0
    %223 = vmatprep.subr.mxu0 0.0
    %224 = vmatpush1.msra.mxu0 0.0
    %225 = vmatprep.subr.mxu0 0.0
    %226 = vmatpush1.msra.mxu0 0.0
    %227 = vmatprep.subr.mxu0 0.0
    %228 = vmatpush1.msra.mxu0 0.0
    %229 = vmatprep.subr.mxu0 0.0
    %230 = vmatpush1.msra.mxu0 0.0
    %231 = vmatprep.subr.mxu0 0.0
    %232 = vmatpush1.msra.mxu0 0.0
    %233 = vmatprep.subr.mxu0 0.0
    %234 = vmatpush1.msra.mxu0 0.0
    %235 = vmatprep.subr.mxu0 0.0
    %236 = vmatpush1.msra.mxu0 0.0
    %237 = vmatprep.subr.mxu0 0.0
    %238 = vmatpush1.msra.mxu0 0.0
    %239 = vmatprep.subr.mxu0 0.0
    %240 = vmatpush1.msra.mxu0 0.0
    %241 = vmatprep.subr.mxu0 0.0
    %242 = vmatpush1.msra.mxu0 0.0
    %243 = vmatprep.subr.mxu0 0.0
    %244 = vmatpush1.msra.mxu0 0.0
    %245 = vmatprep.subr.mxu0 0.0
    %246 = vmatpush1.msra.mxu0 0.0
    %247 = vmatprep.subr.mxu0 0.0
    %248 = vmatpush1.msra.mxu0 0.0
    %249 = vmatprep.subr.mxu0 0.0
    %250 = vmatpush1.msra.mxu0 0.0
    %251 = vmatprep.subr.mxu0 0.0
    %252 = vmatpush1.msra.mxu0 0.0
    %253 = vmatprep.subr.mxu0 0.0
    %254 = vmatpush1.msra.mxu0 0.0
    %255 = vmatprep.subr.mxu0 0.0
    %256 = vmatpush1.msra.mxu0 0.0
    %257 = vmatprep.subr.mxu0 0.0
    %258 = vmatpush1.msra.mxu0 0.0
    %259 = vmatprep.subr.mxu0 0.0
    %260 = vmatpush1.msra.mxu0 0.0
    %261 = vmatprep.subr.mxu0 0.0
    %262 = vmatpush1.msra.mxu0 0.0
    %263 = vmatprep.subr.mxu0 0.0
    %264 = vmatpush1.msra.mxu0 0.0
    %265 = vmatprep.subr.mxu0 0.0
    %266 = vmatpush1.msra.mxu0 0.0
    %267 = vmatprep.mubr.f32.mxu0 0.0
    %268 = vmatmul.mubr.f32.gmra.mrb[0].mxu0 %v201
    %v269 = vpop.f32.mrb[0].mxu0
    %v270 = vadd.f32 %v198, %v269
    %v271 = vpop.f32.mrb[0].mxu0
    %272 = vdwg.mxu0
    %v273 = vxor.u32 %v270, 2147483648
    %v274 = vmul.f32 %v273, 1.442695
    %v275 = vpow.pop %v274
    %v276 = vadd.f32 %v275, 1.0
    %v277 = vrcp.pop %v276
    %v278 = vmul.f32 1.0, %v277
    %v279 = vtanh.pop %v270
    %281 = vrot.lane.b32.xlu0 %v44, 32
    %v282 = vpop.permute.xlu0 %281
    %v284 = vmul.f32 %v278, %v282
    %286 = vrot.lane.b32.xlu0 %v279, 64
    %v287 = vpop.permute.xlu0 %286
    %v289 = vmul.f32 %v278, %v287
    %291 = vrot.lane.b32.xlu0 %v289, 32
    %v292 = vpop.permute.xlu0 %291
    %v294 = vadd.f32 %v284, %v292
    %v295 = vtanh.pop %v294
    %297 = vrot.lane.b32.xlu0 %v295, 64
    %v298 = vpop.permute.xlu0 %297
    %v300 = vmul.f32 %v278, %v298
    %v301 = vadd.f32 %v300, 0.0
    %s302 = scalar_lea.vmem %s0, 4
    %v303 = vld [vmem:[%s302] sm:$0xf]
    %304 = vst.msk [vmem:[#allocation2] sm:$0xf] %vm66, %v303
    %305 = vrot.lane.b32.xlu0 %v182, 64
    %v306 = vpop.permute.xlu0 %305
    %308 = vst.msk [vmem:[#allocation2] sm:$0xf] %vm72, %v306
    %v309 = vld [vmem:[#allocation2] sm:$0xf]
    %v311 = vsel %vm81, %v309, 0
    %313 = vmatprep.subr.mxu0 0.0
    %314 = vmatpush1.msra.mxu0 %v45
    %315 = vmatprep.subr.mxu0 0.0
    %316 = vmatpush1.msra.mxu0 %v46
    %317 = vmatprep.subr.mxu0 0.0
    %318 = vmatpush1.msra.mxu0 %v47
    %319 = vmatprep.subr.mxu0 0.0
    %320 = vmatpush1.msra.mxu0 %v48
    %321 = vmatprep.subr.mxu0 0.0
    %322 = vmatpush1.msra.mxu0 %v49
    %323 = vmatprep.subr.mxu0 0.0
    %324 = vmatpush1.msra.mxu0 %v50
    %325 = vmatprep.subr.mxu0 0.0
    %326 = vmatpush1.msra.mxu0 %v51
    %327 = vmatprep.subr.mxu0 0.0
    %328 = vmatpush1.msra.mxu0 %v52
    %329 = vmatprep.subr.mxu0 0.0
    %330 = vmatpush1.msra.mxu0 0.0
    %331 = vmatprep.subr.mxu0 0.0
    %332 = vmatpush1.msra.mxu0 0.0
    %333 = vmatprep.subr.mxu0 0.0
    %334 = vmatpush1.msra.mxu0 0.0
    %335 = vmatprep.subr.mxu0 0.0
    %336 = vmatpush1.msra.mxu0 0.0
    %337 = vmatprep.subr.mxu0 0.0
    %338 = vmatpush1.msra.mxu0 0.0
    %339 = vmatprep.subr.mxu0 0.0
    %340 = vmatpush1.msra.mxu0 0.0
    %341 = vmatprep.subr.mxu0 0.0
    %342 = vmatpush1.msra.mxu0 0.0
    %343 = vmatprep.subr.mxu0 0.0
    %344 = vmatpush1.msra.mxu0 0.0
    %345 = vmatprep.subr.mxu0 0.0
    %346 = vmatpush1.msra.mxu0 0.0
    %347 = vmatprep.subr.mxu0 0.0
    %348 = vmatpush1.msra.mxu0 0.0
    %349 = vmatprep.subr.mxu0 0.0
    %350 = vmatpush1.msra.mxu0 0.0
    %351 = vmatprep.subr.mxu0 0.0
    %352 = vmatpush1.msra.mxu0 0.0
    %353 = vmatprep.subr.mxu0 0.0
    %354 = vmatpush1.msra.mxu0 0.0
    %355 = vmatprep.subr.mxu0 0.0
    %356 = vmatpush1.msra.mxu0 0.0
    %357 = vmatprep.subr.mxu0 0.0
    %358 = vmatpush1.msra.mxu0 0.0
    %359 = vmatprep.subr.mxu0 0.0
    %360 = vmatpush1.msra.mxu0 0.0
    %361 = vmatprep.subr.mxu0 0.0
    %362 = vmatpush1.msra.mxu0 0.0
    %363 = vmatprep.subr.mxu0 0.0
    %364 = vmatpush1.msra.mxu0 0.0
    %365 = vmatprep.subr.mxu0 0.0
    %366 = vmatpush1.msra.mxu0 0.0
    %367 = vmatprep.subr.mxu0 0.0
    %368 = vmatpush1.msra.mxu0 0.0
    %369 = vmatprep.subr.mxu0 0.0
    %370 = vmatpush1.msra.mxu0 0.0
    %371 = vmatprep.subr.mxu0 0.0
    %372 = vmatpush1.msra.mxu0 0.0
    %373 = vmatprep.subr.mxu0 0.0
    %374 = vmatpush1.msra.mxu0 0.0
    %375 = vmatprep.subr.mxu0 0.0
    %376 = vmatpush1.msra.mxu0 0.0
    %377 = vmatprep.mubr.f32.mxu0 0.0
    %378 = vmatmul.mubr.f32.gmra.mrb[0].mxu0 %v311
    %v379 = vpop.f32.mrb[0].mxu0
    %v380 = vadd.f32 %v79, %v379
    %v381 = vpop.f32.mrb[0].mxu0
    %382 = vdwg.mxu0
    %v383 = vxor.u32 %v380, 2147483648
    %v384 = vmul.f32 %v383, 1.442695
    %v385 = vpow.pop %v384
    %v386 = vadd.f32 %v385, 1.0
    %v387 = vrcp.pop %v386
    %v388 = vmul.f32 1.0, %v387
    %v389 = vtanh.pop %v380
    %v390 = vmul.f32 %v388, %v176
    %392 = vrot.lane.b32.xlu0 %v389, 64
    %v393 = vpop.permute.xlu0 %392
    %v395 = vmul.f32 %v388, %v393
    %397 = vrot.lane.b32.xlu0 %v395, 32
    %v398 = vpop.permute.xlu0 %397
    %v400 = vadd.f32 %v390, %v398
    %v401 = vtanh.pop %v400
    %403 = vrot.lane.b32.xlu0 %v401, 64
    %v404 = vpop.permute.xlu0 %403
    %v406 = vmul.f32 %v388, %v404
    %408 = vrot.lane.b32.xlu0 %v406, 32
    %v409 = vpop.permute.xlu0 %408
    %411 = vst.msk [vmem:[#allocation2] sm:$0xf] %vm66, %v409
    %413 = vrot.lane.b32.xlu0 %v300, 64
    %v414 = vpop.permute.xlu0 %413
    %416 = vst.msk [vmem:[#allocation2] sm:$0xf] %vm72, %v414
    %v417 = vld [vmem:[#allocation2] sm:$0xf]
    %v419 = vsel %vm81, %v417, 0
    %421 = vmatprep.subr.mxu0 0.0
    %422 = vmatpush1.msra.mxu0 %v54
    %423 = vmatprep.subr.mxu0 0.0
    %424 = vmatpush1.msra.mxu0 %v55
    %425 = vmatprep.subr.mxu0 0.0
    %426 = vmatpush1.msra.mxu0 %v56
    %427 = vmatprep.subr.mxu0 0.0
    %428 = vmatpush1.msra.mxu0 %v57
    %429 = vmatprep.subr.mxu0 0.0
    %430 = vmatpush1.msra.mxu0 %v58
    %431 = vmatprep.subr.mxu0 0.0
    %432 = vmatpush1.msra.mxu0 %v59
    %433 = vmatprep.subr.mxu0 0.0
    %434 = vmatpush1.msra.mxu0 %v60
    %435 = vmatprep.subr.mxu0 0.0
    %436 = vmatpush1.msra.mxu0 %v61
    %437 = vmatprep.subr.mxu0 0.0
    %438 = vmatpush1.msra.mxu0 0.0
    %439 = vmatprep.subr.mxu0 0.0
    %440 = vmatpush1.msra.mxu0 0.0
    %441 = vmatprep.subr.mxu0 0.0
    %442 = vmatpush1.msra.mxu0 0.0
    %443 = vmatprep.subr.mxu0 0.0
    %444 = vmatpush1.msra.mxu0 0.0
    %445 = vmatprep.subr.mxu0 0.0
    %446 = vmatpush1.msra.mxu0 0.0
    %447 = vmatprep.subr.mxu0 0.0
    %448 = vmatpush1.msra.mxu0 0.0
    %449 = vmatprep.subr.mxu0 0.0
    %450 = vmatpush1.msra.mxu0 0.0
    %451 = vmatprep.subr.mxu0 0.0
    %452 = vmatpush1.msra.mxu0 0.0
    %453 = vmatprep.subr.mxu0 0.0
    %454 = vmatpush1.msra.mxu0 0.0
    %455 = vmatprep.subr.mxu0 0.0
    %456 = vmatpush1.msra.mxu0 0.0
    %457 = vmatprep.subr.mxu0 0.0
    %458 = vmatpush1.msra.mxu0 0.0
    %459 = vmatprep.subr.mxu0 0.0
    %460 = vmatpush1.msra.mxu0 0.0
    %461 = vmatprep.subr.mxu0 0.0
    %462 = vmatpush1.msra.mxu0 0.0
    %463 = vmatprep.subr.mxu0 0.0
    %464 = vmatpush1.msra.mxu0 0.0
    %465 = vmatprep.subr.mxu0 0.0
    %466 = vmatpush1.msra.mxu0 0.0
    %467 = vmatprep.subr.mxu0 0.0
    %468 = vmatpush1.msra.mxu0 0.0
    %469 = vmatprep.subr.mxu0 0.0
    %470 = vmatpush1.msra.mxu0 0.0
    %471 = vmatprep.subr.mxu0 0.0
    %472 = vmatpush1.msra.mxu0 0.0
    %473 = vmatprep.subr.mxu0 0.0
    %474 = vmatpush1.msra.mxu0 0.0
    %475 = vmatprep.subr.mxu0 0.0
    %476 = vmatpush1.msra.mxu0 0.0
    %477 = vmatprep.subr.mxu0 0.0
    %478 = vmatpush1.msra.mxu0 0.0
    %479 = vmatprep.subr.mxu0 0.0
    %480 = vmatpush1.msra.mxu0 0.0
    %481 = vmatprep.subr.mxu0 0.0
    %482 = vmatpush1.msra.mxu0 0.0
    %483 = vmatprep.subr.mxu0 0.0
    %484 = vmatpush1.msra.mxu0 0.0
    %485 = vmatprep.mubr.f32.mxu0 0.0
    %486 = vmatmul.mubr.f32.gmra.mrb[0].mxu0 %v419
    %v487 = vpop.f32.mrb[0].mxu0
    %v488 = vadd.f32 %v198, %v487
    %v489 = vpop.f32.mrb[0].mxu0
    %490 = vdwg.mxu0
    %v491 = vxor.u32 %v488, 2147483648
    %v492 = vmul.f32 %v491, 1.442695
    %v493 = vpow.pop %v492
    %v494 = vadd.f32 %v493, 1.0
    %v495 = vrcp.pop %v494
    %v496 = vmul.f32 1.0, %v495
    %v497 = vtanh.pop %v488
    %v498 = vmul.f32 %v496, %v294
    %500 = vrot.lane.b32.xlu0 %v497, 64
    %v501 = vpop.permute.xlu0 %500
    %v503 = vmul.f32 %v496, %v501
    %505 = vrot.lane.b32.xlu0 %v503, 32
    %v506 = vpop.permute.xlu0 %505
    %v508 = vadd.f32 %v498, %v506
    %v509 = vtanh.pop %v508
    %511 = vrot.lane.b32.xlu0 %v509, 64
    %v512 = vpop.permute.xlu0 %511
    %v514 = vmul.f32 %v496, %v512
    %v515 = vadd.f32 %v301, %v514
    %s516 = scalar_lea.vmem %s0, 8
    %v517 = vld [vmem:[%s516] sm:$0xf]
    %518 = vst.msk [vmem:[#allocation2] sm:$0xf] %vm66, %v517
    %519 = vrot.lane.b32.xlu0 %v406, 64
    %v520 = vpop.permute.xlu0 %519
    %522 = vst.msk [vmem:[#allocation2] sm:$0xf] %vm72, %v520
    %v523 = vld [vmem:[#allocation2] sm:$0xf]
    %v525 = vsel %vm81, %v523, 0
    %527 = vmatprep.subr.mxu0 0.0
    %528 = vmatpush1.msra.mxu0 %v45
    %529 = vmatprep.subr.mxu0 0.0
    %530 = vmatpush1.msra.mxu0 %v46
    %531 = vmatprep.subr.mxu0 0.0
    %532 = vmatpush1.msra.mxu0 %v47
    %533 = vmatprep.subr.mxu0 0.0
    %534 = vmatpush1.msra.mxu0 %v48
    %535 = vmatprep.subr.mxu0 0.0
    %536 = vmatpush1.msra.mxu0 %v49
    %537 = vmatprep.subr.mxu0 0.0
    %538 = vmatpush1.msra.mxu0 %v50
    %539 = vmatprep.subr.mxu0 0.0
    %540 = vmatpush1.msra.mxu0 %v51
    %541 = vmatprep.subr.mxu0 0.0
    %542 = vmatpush1.msra.mxu0 %v52
    %543 = vmatprep.subr.mxu0 0.0
    %544 = vmatpush1.msra.mxu0 0.0
    %545 = vmatprep.subr.mxu0 0.0
    %546 = vmatpush1.msra.mxu0 0.0
    %547 = vmatprep.subr.mxu0 0.0
    %548 = vmatpush1.msra.mxu0 0.0
    %549 = vmatprep.subr.mxu0 0.0
    %550 = vmatpush1.msra.mxu0 0.0
    %551 = vmatprep.subr.mxu0 0.0
    %552 = vmatpush1.msra.mxu0 0.0
    %553 = vmatprep.subr.mxu0 0.0
    %554 = vmatpush1.msra.mxu0 0.0
    %555 = vmatprep.subr.mxu0 0.0
    %556 = vmatpush1.msra.mxu0 0.0
    %557 = vmatprep.subr.mxu0 0.0
    %558 = vmatpush1.msra.mxu0 0.0
    %559 = vmatprep.subr.mxu0 0.0
    %560 = vmatpush1.msra.mxu0 0.0
    %561 = vmatprep.subr.mxu0 0.0
    %562 = vmatpush1.msra.mxu0 0.0
    %563 = vmatprep.subr.mxu0 0.0
    %564 = vmatpush1.msra.mxu0 0.0
    %565 = vmatprep.subr.mxu0 0.0
    %566 = vmatpush1.msra.mxu0 0.0
    %567 = vmatprep.subr.mxu0 0.0
    %568 = vmatpush1.msra.mxu0 0.0
    %569 = vmatprep.subr.mxu0 0.0
    %570 = vmatpush1.msra.mxu0 0.0
    %571 = vmatprep.subr.mxu0 0.0
    %572 = vmatpush1.msra.mxu0 0.0
    %573 = vmatprep.subr.mxu0 0.0
    %574 = vmatpush1.msra.mxu0 0.0
    %575 = vmatprep.subr.mxu0 0.0
    %576 = vmatpush1.msra.mxu0 0.0
    %577 = vmatprep.subr.mxu0 0.0
    %578 = vmatpush1.msra.mxu0 0.0
    %579 = vmatprep.subr.mxu0 0.0
    %580 = vmatpush1.msra.mxu0 0.0
    %581 = vmatprep.subr.mxu0 0.0
    %582 = vmatpush1.msra.mxu0 0.0
    %583 = vmatprep.subr.mxu0 0.0
    %584 = vmatpush1.msra.mxu0 0.0
    %585 = vmatprep.subr.mxu0 0.0
    %586 = vmatpush1.msra.mxu0 0.0
    %587 = vmatprep.subr.mxu0 0.0
    %588 = vmatpush1.msra.mxu0 0.0
    %589 = vmatprep.subr.mxu0 0.0
    %590 = vmatpush1.msra.mxu0 0.0
    %591 = vmatprep.mubr.f32.mxu0 0.0
    %592 = vmatmul.mubr.f32.gmra.mrb[0].mxu0 %v525
    %v593 = vpop.f32.mrb[0].mxu0
    %v594 = vadd.f32 %v79, %v593
    %v595 = vpop.f32.mrb[0].mxu0
    %596 = vdwg.mxu0
    %v597 = vxor.u32 %v594, 2147483648
    %v598 = vmul.f32 %v597, 1.442695
    %v599 = vpow.pop %v598
    %v600 = vadd.f32 %v599, 1.0
    %v601 = vrcp.pop %v600
    %v602 = vmul.f32 1.0, %v601
    %v603 = vtanh.pop %v594
    %v604 = vmul.f32 %v602, %v400
    %606 = vrot.lane.b32.xlu0 %v603, 64
    %v607 = vpop.permute.xlu0 %606
    %v609 = vmul.f32 %v602, %v607
    %611 = vrot.lane.b32.xlu0 %v609, 32
    %v612 = vpop.permute.xlu0 %611
    %v614 = vadd.f32 %v604, %v612
    %v615 = vtanh.pop %v614
    %617 = vrot.lane.b32.xlu0 %v615, 64
    %v618 = vpop.permute.xlu0 %617
    %v620 = vmul.f32 %v602, %v618
    %622 = vrot.lane.b32.xlu0 %v620, 32
    %v623 = vpop.permute.xlu0 %622
    %625 = vst.msk [vmem:[#allocation2] sm:$0xf] %vm66, %v623
    %627 = vrot.lane.b32.xlu0 %v514, 64
    %v628 = vpop.permute.xlu0 %627
    %630 = vst.msk [vmem:[#allocation2] sm:$0xf] %vm72, %v628
    %v631 = vld [vmem:[#allocation2] sm:$0xf]
    %v633 = vsel %vm81, %v631, 0
    %635 = vmatprep.subr.mxu0 0.0
    %636 = vmatpush1.msra.mxu0 %v54
    %637 = vmatprep.subr.mxu0 0.0
    %638 = vmatpush1.msra.mxu0 %v55
    %639 = vmatprep.subr.mxu0 0.0
    %640 = vmatpush1.msra.mxu0 %v56
    %641 = vmatprep.subr.mxu0 0.0
    %642 = vmatpush1.msra.mxu0 %v57
    %643 = vmatprep.subr.mxu0 0.0
    %644 = vmatpush1.msra.mxu0 %v58
    %645 = vmatprep.subr.mxu0 0.0
    %646 = vmatpush1.msra.mxu0 %v59
    %647 = vmatprep.subr.mxu0 0.0
    %648 = vmatpush1.msra.mxu0 %v60
    %649 = vmatprep.subr.mxu0 0.0
    %650 = vmatpush1.msra.mxu0 %v61
    %651 = vmatprep.subr.mxu0 0.0
    %652 = vmatpush1.msra.mxu0 0.0
    %653 = vmatprep.subr.mxu0 0.0
    %654 = vmatpush1.msra.mxu0 0.0
    %655 = vmatprep.subr.mxu0 0.0
    %656 = vmatpush1.msra.mxu0 0.0
    %657 = vmatprep.subr.mxu0 0.0
    %658 = vmatpush1.msra.mxu0 0.0
    %659 = vmatprep.subr.mxu0 0.0
    %660 = vmatpush1.msra.mxu0 0.0
    %661 = vmatprep.subr.mxu0 0.0
    %662 = vmatpush1.msra.mxu0 0.0
    %663 = vmatprep.subr.mxu0 0.0
    %664 = vmatpush1.msra.mxu0 0.0
    %665 = vmatprep.subr.mxu0 0.0
    %666 = vmatpush1.msra.mxu0 0.0
    %667 = vmatprep.subr.mxu0 0.0
    %668 = vmatpush1.msra.mxu0 0.0
    %669 = vmatprep.subr.mxu0 0.0
    %670 = vmatpush1.msra.mxu0 0.0
    %671 = vmatprep.subr.mxu0 0.0
    %672 = vmatpush1.msra.mxu0 0.0
    %673 = vmatprep.subr.mxu0 0.0
    %674 = vmatpush1.msra.mxu0 0.0
    %675 = vmatprep.subr.mxu0 0.0
    %676 = vmatpush1.msra.mxu0 0.0
    %677 = vmatprep.subr.mxu0 0.0
    %678 = vmatpush1.msra.mxu0 0.0
    %679 = vmatprep.subr.mxu0 0.0
    %680 = vmatpush1.msra.mxu0 0.0
    %681 = vmatprep.subr.mxu0 0.0
    %682 = vmatpush1.msra.mxu0 0.0
    %683 = vmatprep.subr.mxu0 0.0
    %684 = vmatpush1.msra.mxu0 0.0
    %685 = vmatprep.subr.mxu0 0.0
    %686 = vmatpush1.msra.mxu0 0.0
    %687 = vmatprep.subr.mxu0 0.0
    %688 = vmatpush1.msra.mxu0 0.0
    %689 = vmatprep.subr.mxu0 0.0
    %690 = vmatpush1.msra.mxu0 0.0
    %691 = vmatprep.subr.mxu0 0.0
    %692 = vmatpush1.msra.mxu0 0.0
    %693 = vmatprep.subr.mxu0 0.0
    %694 = vmatpush1.msra.mxu0 0.0
    %695 = vmatprep.subr.mxu0 0.0
    %696 = vmatpush1.msra.mxu0 0.0
    %697 = vmatprep.subr.mxu0 0.0
    %698 = vmatpush1.msra.mxu0 0.0
    %699 = vmatprep.mubr.f32.mxu0 0.0
    %700 = vmatmul.mubr.f32.gmra.mrb[0].mxu0 %v633
    %v701 = vpop.f32.mrb[0].mxu0
    %v702 = vadd.f32 %v198, %v701
    %v703 = vpop.f32.mrb[0].mxu0
    %704 = vdwg.mxu0
    %v705 = vxor.u32 %v702, 2147483648
    %v706 = vmul.f32 %v705, 1.442695
    %v707 = vpow.pop %v706
    %v708 = vadd.f32 %v707, 1.0
    %v709 = vrcp.pop %v708
    %v710 = vmul.f32 1.0, %v709
    %v711 = vtanh.pop %v702
    %v712 = vmul.f32 %v710, %v508
    %714 = vrot.lane.b32.xlu0 %v711, 64
    %v715 = vpop.permute.xlu0 %714
    %v717 = vmul.f32 %v710, %v715
    %719 = vrot.lane.b32.xlu0 %v717, 32
    %v720 = vpop.permute.xlu0 %719
    %v722 = vadd.f32 %v712, %v720
    %v723 = vtanh.pop %v722
    %725 = vrot.lane.b32.xlu0 %v723, 64
    %v726 = vpop.permute.xlu0 %725
    %v728 = vmul.f32 %v710, %v726
    %v729 = vadd.f32 %v515, %v728
    %s730 = scalar_lea.vmem %s0, 12
    %v731 = vld [vmem:[%s730] sm:$0xf]
    %732 = vst.msk [vmem:[#allocation2] sm:$0xf] %vm66, %v731
    %733 = vrot.lane.b32.xlu0 %v620, 64
    %v734 = vpop.permute.xlu0 %733
    %736 = vst.msk [vmem:[#allocation2] sm:$0xf] %vm72, %v734
    %v737 = vld [vmem:[#allocation2] sm:$0xf]
    %v739 = vsel %vm81, %v737, 0
    %741 = vmatprep.subr.mxu0 0.0
    %742 = vmatpush1.msra.mxu0 %v45
    %743 = vmatprep.subr.mxu0 0.0
    %744 = vmatpush1.msra.mxu0 %v46
    %745 = vmatprep.subr.mxu0 0.0
    %746 = vmatpush1.msra.mxu0 %v47
    %747 = vmatprep.subr.mxu0 0.0
    %748 = vmatpush1.msra.mxu0 %v48
    %749 = vmatprep.subr.mxu0 0.0
    %750 = vmatpush1.msra.mxu0 %v49
    %751 = vmatprep.subr.mxu0 0.0
    %752 = vmatpush1.msra.mxu0 %v50
    %753 = vmatprep.subr.mxu0 0.0
    %754 = vmatpush1.msra.mxu0 %v51
    %755 = vmatprep.subr.mxu0 0.0
    %756 = vmatpush1.msra.mxu0 %v52
    %757 = vmatprep.subr.mxu0 0.0
    %758 = vmatpush1.msra.mxu0 0.0
    %759 = vmatprep.subr.mxu0 0.0
    %760 = vmatpush1.msra.mxu0 0.0
    %761 = vmatprep.subr.mxu0 0.0
    %762 = vmatpush1.msra.mxu0 0.0
    %763 = vmatprep.subr.mxu0 0.0
    %764 = vmatpush1.msra.mxu0 0.0
    %765 = vmatprep.subr.mxu0 0.0
    %766 = vmatpush1.msra.mxu0 0.0
    %767 = vmatprep.subr.mxu0 0.0
    %768 = vmatpush1.msra.mxu0 0.0
    %769 = vmatprep.subr.mxu0 0.0
    %770 = vmatpush1.msra.mxu0 0.0
    %771 = vmatprep.subr.mxu0 0.0
    %772 = vmatpush1.msra.mxu0 0.0
    %773 = vmatprep.subr.mxu0 0.0
    %774 = vmatpush1.msra.mxu0 0.0
    %775 = vmatprep.subr.mxu0 0.0
    %776 = vmatpush1.msra.mxu0 0.0
    %777 = vmatprep.subr.mxu0 0.0
    %778 = vmatpush1.msra.mxu0 0.0
    %779 = vmatprep.subr.mxu0 0.0
    %780 = vmatpush1.msra.mxu0 0.0
    %781 = vmatprep.subr.mxu0 0.0
    %782 = vmatpush1.msra.mxu0 0.0
    %783 = vmatprep.subr.mxu0 0.0
    %784 = vmatpush1.msra.mxu0 0.0
    %785 = vmatprep.subr.mxu0 0.0
    %786 = vmatpush1.msra.mxu0 0.0
    %787 = vmatprep.subr.mxu0 0.0
    %788 = vmatpush1.msra.mxu0 0.0
    %789 = vmatprep.subr.mxu0 0.0
    %790 = vmatpush1.msra.mxu0 0.0
    %791 = vmatprep.subr.mxu0 0.0
    %792 = vmatpush1.msra.mxu0 0.0
    %793 = vmatprep.subr.mxu0 0.0
    %794 = vmatpush1.msra.mxu0 0.0
    %795 = vmatprep.subr.mxu0 0.0
    %796 = vmatpush1.msra.mxu0 0.0
    %797 = vmatprep.subr.mxu0 0.0
    %798 = vmatpush1.msra.mxu0 0.0
    %799 = vmatprep.subr.mxu0 0.0
    %800 = vmatpush1.msra.mxu0 0.0
    %801 = vmatprep.subr.mxu0 0.0
    %802 = vmatpush1.msra.mxu0 0.0
    %803 = vmatprep.subr.mxu0 0.0
    %804 = vmatpush1.msra.mxu0 0.0
    %805 = vmatprep.mubr.f32.mxu0 0.0
    %806 = vmatmul.mubr.f32.gmra.mrb[0].mxu0 %v739
    %v807 = vpop.f32.mrb[0].mxu0
    %v808 = vadd.f32 %v79, %v807
    %v809 = vpop.f32.mrb[0].mxu0
    %810 = vdwg.mxu0
    %v811 = vxor.u32 %v808, 2147483648
    %v812 = vmul.f32 %v811, 1.442695
    %v813 = vpow.pop %v812
    %v814 = vadd.f32 %v813, 1.0
    %v815 = vrcp.pop %v814
    %v816 = vmul.f32 1.0, %v815
    %v817 = vtanh.pop %v808
    %v818 = vmul.f32 %v816, %v614
    %820 = vrot.lane.b32.xlu0 %v817, 64
    %v821 = vpop.permute.xlu0 %820
    %v823 = vmul.f32 %v816, %v821
    %825 = vrot.lane.b32.xlu0 %v823, 32
    %v826 = vpop.permute.xlu0 %825
    %v828 = vadd.f32 %v818, %v826
    %v829 = vtanh.pop %v828
    %831 = vrot.lane.b32.xlu0 %v829, 64
    %v832 = vpop.permute.xlu0 %831
    %v834 = vmul.f32 %v816, %v832
    %836 = vrot.lane.b32.xlu0 %v834, 32
    %v837 = vpop.permute.xlu0 %836
    %839 = vst.msk [vmem:[#allocation2] sm:$0xf] %vm66, %v837
    %841 = vrot.lane.b32.xlu0 %v728, 64
    %v842 = vpop.permute.xlu0 %841
    %844 = vst.msk [vmem:[#allocation2] sm:$0xf] %vm72, %v842
    %v845 = vld [vmem:[#allocation2] sm:$0xf]
    %v847 = vsel %vm81, %v845, 0
    %849 = vmatprep.subr.mxu0 0.0
    %850 = vmatpush1.msra.mxu0 %v54
    %851 = vmatprep.subr.mxu0 0.0
    %852 = vmatpush1.msra.mxu0 %v55
    %853 = vmatprep.subr.mxu0 0.0
    %854 = vmatpush1.msra.mxu0 %v56
    %855 = vmatprep.subr.mxu0 0.0
    %856 = vmatpush1.msra.mxu0 %v57
    %857 = vmatprep.subr.mxu0 0.0
    %858 = vmatpush1.msra.mxu0 %v58
    %859 = vmatprep.subr.mxu0 0.0
    %860 = vmatpush1.msra.mxu0 %v59
    %861 = vmatprep.subr.mxu0 0.0
    %862 = vmatpush1.msra.mxu0 %v60
    %863 = vmatprep.subr.mxu0 0.0
    %864 = vmatpush1.msra.mxu0 %v61
    %865 = vmatprep.subr.mxu0 0.0
    %866 = vmatpush1.msra.mxu0 0.0
    %867 = vmatprep.subr.mxu0 0.0
    %868 = vmatpush1.msra.mxu0 0.0
    %869 = vmatprep.subr.mxu0 0.0
    %870 = vmatpush1.msra.mxu0 0.0
    %871 = vmatprep.subr.mxu0 0.0
    %872 = vmatpush1.msra.mxu0 0.0
    %873 = vmatprep.subr.mxu0 0.0
    %874 = vmatpush1.msra.mxu0 0.0
    %875 = vmatprep.subr.mxu0 0.0
    %876 = vmatpush1.msra.mxu0 0.0
    %877 = vmatprep.subr.mxu0 0.0
    %878 = vmatpush1.msra.mxu0 0.0
    %879 = vmatprep.subr.mxu0 0.0
    %880 = vmatpush1.msra.mxu0 0.0
    %881 = vmatprep.subr.mxu0 0.0
    %882 = vmatpush1.msra.mxu0 0.0
    %883 = vmatprep.subr.mxu0 0.0
    %884 = vmatpush1.msra.mxu0 0.0
    %885 = vmatprep.subr.mxu0 0.0
    %886 = vmatpush1.msra.mxu0 0.0
    %887 = vmatprep.subr.mxu0 0.0
    %888 = vmatpush1.msra.mxu0 0.0
    %889 = vmatprep.subr.mxu0 0.0
    %890 = vmatpush1.msra.mxu0 0.0
    %891 = vmatprep.subr.mxu0 0.0
    %892 = vmatpush1.msra.mxu0 0.0
    %893 = vmatprep.subr.mxu0 0.0
    %894 = vmatpush1.msra.mxu0 0.0
    %895 = vmatprep.subr.mxu0 0.0
    %896 = vmatpush1.msra.mxu0 0.0
    %897 = vmatprep.subr.mxu0 0.0
    %898 = vmatpush1.msra.mxu0 0.0
    %899 = vmatprep.subr.mxu0 0.0
    %900 = vmatpush1.msra.mxu0 0.0
    %901 = vmatprep.subr.mxu0 0.0
    %902 = vmatpush1.msra.mxu0 0.0
    %903 = vmatprep.subr.mxu0 0.0
    %904 = vmatpush1.msra.mxu0 0.0
    %905 = vmatprep.subr.mxu0 0.0
    %906 = vmatpush1.msra.mxu0 0.0
    %907 = vmatprep.subr.mxu0 0.0
    %908 = vmatpush1.msra.mxu0 0.0
    %909 = vmatprep.subr.mxu0 0.0
    %910 = vmatpush1.msra.mxu0 0.0
    %911 = vmatprep.subr.mxu0 0.0
    %912 = vmatpush1.msra.mxu0 0.0
    %913 = vmatprep.mubr.f32.mxu0 0.0
    %914 = vmatmul.mubr.f32.gmra.mrb[0].mxu0 %v847
    %v915 = vpop.f32.mrb[0].mxu0
    %v916 = vadd.f32 %v198, %v915
    %v917 = vpop.f32.mrb[0].mxu0
    %918 = vdwg.mxu0
    %v919 = vxor.u32 %v916, 2147483648
    %v920 = vmul.f32 %v919, 1.442695
    %v921 = vpow.pop %v920
    %v922 = vadd.f32 %v921, 1.0
    %v923 = vrcp.pop %v922
    %v924 = vmul.f32 1.0, %v923
    %v925 = vtanh.pop %v916
    %v926 = vmul.f32 %v924, %v722
    %928 = vrot.lane.b32.xlu0 %v925, 64
    %v929 = vpop.permute.xlu0 %928
    %v931 = vmul.f32 %v924, %v929
    %933 = vrot.lane.b32.xlu0 %v931, 32
    %v934 = vpop.permute.xlu0 %933
    %v936 = vadd.f32 %v926, %v934
    %v937 = vtanh.pop %v936
    %939 = vrot.lane.b32.xlu0 %v937, 64
    %v940 = vpop.permute.xlu0 %939
    %v942 = vmul.f32 %v924, %v940
    %v943 = vadd.f32 %v729, %v942
    %s944 = scalar_lea.vmem %s0, 16
    %v945 = vld [vmem:[%s944] sm:$0xf]
    %946 = vst.msk [vmem:[#allocation2] sm:$0xf] %vm66, %v945
    %947 = vrot.lane.b32.xlu0 %v834, 64
    %v948 = vpop.permute.xlu0 %947
    %950 = vst.msk [vmem:[#allocation2] sm:$0xf] %vm72, %v948
    %v951 = vld [vmem:[#allocation2] sm:$0xf]
    %v953 = vsel %vm81, %v951, 0
    %955 = vmatprep.subr.mxu0 0.0
    %956 = vmatpush1.msra.mxu0 %v45
    %957 = vmatprep.subr.mxu0 0.0
    %958 = vmatpush1.msra.mxu0 %v46
    %959 = vmatprep.subr.mxu0 0.0
    %960 = vmatpush1.msra.mxu0 %v47
    %961 = vmatprep.subr.mxu0 0.0
    %962 = vmatpush1.msra.mxu0 %v48
    %963 = vmatprep.subr.mxu0 0.0
    %964 = vmatpush1.msra.mxu0 %v49
    %965 = vmatprep.subr.mxu0 0.0
    %966 = vmatpush1.msra.mxu0 %v50
    %967 = vmatprep.subr.mxu0 0.0
    %968 = vmatpush1.msra.mxu0 %v51
    %969 = vmatprep.subr.mxu0 0.0
    %970 = vmatpush1.msra.mxu0 %v52
    %971 = vmatprep.subr.mxu0 0.0
    %972 = vmatpush1.msra.mxu0 0.0
    %973 = vmatprep.subr.mxu0 0.0
    %974 = vmatpush1.msra.mxu0 0.0
    %975 = vmatprep.subr.mxu0 0.0
    %976 = vmatpush1.msra.mxu0 0.0
    %977 = vmatprep.subr.mxu0 0.0
    %978 = vmatpush1.msra.mxu0 0.0
    %979 = vmatprep.subr.mxu0 0.0
    %980 = vmatpush1.msra.mxu0 0.0
    %981 = vmatprep.subr.mxu0 0.0
    %982 = vmatpush1.msra.mxu0 0.0
    %983 = vmatprep.subr.mxu0 0.0
    %984 = vmatpush1.msra.mxu0 0.0
    %985 = vmatprep.subr.mxu0 0.0
    %986 = vmatpush1.msra.mxu0 0.0
    %987 = vmatprep.subr.mxu0 0.0
    %988 = vmatpush1.msra.mxu0 0.0
    %989 = vmatprep.subr.mxu0 0.0
    %990 = vmatpush1.msra.mxu0 0.0
    %991 = vmatprep.subr.mxu0 0.0
    %992 = vmatpush1.msra.mxu0 0.0
    %993 = vmatprep.subr.mxu0 0.0
    %994 = vmatpush1.msra.mxu0 0.0
    %995 = vmatprep.subr.mxu0 0.0
    %996 = vmatpush1.msra.mxu0 0.0
    %997 = vmatprep.subr.mxu0 0.0
    %998 = vmatpush1.msra.mxu0 0.0
    %999 = vmatprep.subr.mxu0 0.0
    %1000 = vmatpush1.msra.mxu0 0.0
    %1001 = vmatprep.subr.mxu0 0.0
    %1002 = vmatpush1.msra.mxu0 0.0
    %1003 = vmatprep.subr.mxu0 0.0
    %1004 = vmatpush1.msra.mxu0 0.0
    %1005 = vmatprep.subr.mxu0 0.0
    %1006 = vmatpush1.msra.mxu0 0.0
    %1007 = vmatprep.subr.mxu0 0.0
    %1008 = vmatpush1.msra.mxu0 0.0
    %1009 = vmatprep.subr.mxu0 0.0
    %1010 = vmatpush1.msra.mxu0 0.0
    %1011 = vmatprep.subr.mxu0 0.0
    %1012 = vmatpush1.msra.mxu0 0.0
    %1013 = vmatprep.subr.mxu0 0.0
    %1014 = vmatpush1.msra.mxu0 0.0
    %1015 = vmatprep.subr.mxu0 0.0
    %1016 = vmatpush1.msra.mxu0 0.0
    %1017 = vmatprep.subr.mxu0 0.0
    %1018 = vmatpush1.msra.mxu0 0.0
    %1019 = vmatprep.mubr.f32.mxu0 0.0
    %1020 = vmatmul.mubr.f32.gmra.mrb[0].mxu0 %v953
    %v1021 = vpop.f32.mrb[0].mxu0
    %v1022 = vadd.f32 %v79, %v1021
    %v1023 = vpop.f32.mrb[0].mxu0
    %1024 = vdwg.mxu0
    %v1025 = vxor.u32 %v1022, 2147483648
    %v1026 = vmul.f32 %v1025, 1.442695
    %v1027 = vpow.pop %v1026
    %v1028 = vadd.f32 %v1027, 1.0
    %v1029 = vrcp.pop %v1028
    %v1030 = vmul.f32 1.0, %v1029
    %v1031 = vtanh.pop %v1022
    %v1032 = vmul.f32 %v1030, %v828
    %1034 = vrot.lane.b32.xlu0 %v1031, 64
    %v1035 = vpop.permute.xlu0 %1034
    %v1037 = vmul.f32 %v1030, %v1035
    %1039 = vrot.lane.b32.xlu0 %v1037, 32
    %v1040 = vpop.permute.xlu0 %1039
    %v1042 = vadd.f32 %v1032, %v1040
    %v1043 = vtanh.pop %v1042
    %1045 = vrot.lane.b32.xlu0 %v1043, 64
    %v1046 = vpop.permute.xlu0 %1045
    %v1048 = vmul.f32 %v1030, %v1046
    %1050 = vrot.lane.b32.xlu0 %v1048, 32
    %v1051 = vpop.permute.xlu0 %1050
    %1053 = vst.msk [vmem:[#allocation2] sm:$0xf] %vm66, %v1051
    %1055 = vrot.lane.b32.xlu0 %v942, 64
    %v1056 = vpop.permute.xlu0 %1055
    %1058 = vst.msk [vmem:[#allocation2] sm:$0xf] %vm72, %v1056
    %v1059 = vld [vmem:[#allocation2] sm:$0xf]
    %v1061 = vsel %vm81, %v1059, 0
    %1063 = vmatprep.subr.mxu0 0.0
    %1064 = vmatpush1.msra.mxu0 %v54
    %1065 = vmatprep.subr.mxu0 0.0
    %1066 = vmatpush1.msra.mxu0 %v55
    %1067 = vmatprep.subr.mxu0 0.0
    %1068 = vmatpush1.msra.mxu0 %v56
    %1069 = vmatprep.subr.mxu0 0.0
    %1070 = vmatpush1.msra.mxu0 %v57
    %1071 = vmatprep.subr.mxu0 0.0
    %1072 = vmatpush1.msra.mxu0 %v58
    %1073 = vmatprep.subr.mxu0 0.0
    %1074 = vmatpush1.msra.mxu0 %v59
    %1075 = vmatprep.subr.mxu0 0.0
    %1076 = vmatpush1.msra.mxu0 %v60
    %1077 = vmatprep.subr.mxu0 0.0
    %1078 = vmatpush1.msra.mxu0 %v61
    %1079 = vmatprep.subr.mxu0 0.0
    %1080 = vmatpush1.msra.mxu0 0.0
    %1081 = vmatprep.subr.mxu0 0.0
    %1082 = vmatpush1.msra.mxu0 0.0
    %1083 = vmatprep.subr.mxu0 0.0
    %1084 = vmatpush1.msra.mxu0 0.0
    %1085 = vmatprep.subr.mxu0 0.0
    %1086 = vmatpush1.msra.mxu0 0.0
    %1087 = vmatprep.subr.mxu0 0.0
    %1088 = vmatpush1.msra.mxu0 0.0
    %1089 = vmatprep.subr.mxu0 0.0
    %1090 = vmatpush1.msra.mxu0 0.0
    %1091 = vmatprep.subr.mxu0 0.0
    %1092 = vmatpush1.msra.mxu0 0.0
    %1093 = vmatprep.subr.mxu0 0.0
    %1094 = vmatpush1.msra.mxu0 0.0
    %1095 = vmatprep.subr.mxu0 0.0
    %1096 = vmatpush1.msra.mxu0 0.0
    %1097 = vmatprep.subr.mxu0 0.0
    %1098 = vmatpush1.msra.mxu0 0.0
    %1099 = vmatprep.subr.mxu0 0.0
    %1100 = vmatpush1.msra.mxu0 0.0
    %1101 = vmatprep.subr.mxu0 0.0
    %1102 = vmatpush1.msra.mxu0 0.0
    %1103 = vmatprep.subr.mxu0 0.0
    %1104 = vmatpush1.msra.mxu0 0.0
    %1105 = vmatprep.subr.mxu0 0.0
    %1106 = vmatpush1.msra.mxu0 0.0
    %1107 = vmatprep.subr.mxu0 0.0
    %1108 = vmatpush1.msra.mxu0 0.0
    %1109 = vmatprep.subr.mxu0 0.0
    %1110 = vmatpush1.msra.mxu0 0.0
    %1111 = vmatprep.subr.mxu0 0.0
    %1112 = vmatpush1.msra.mxu0 0.0
    %1113 = vmatprep.subr.mxu0 0.0
    %1114 = vmatpush1.msra.mxu0 0.0
    %1115 = vmatprep.subr.mxu0 0.0
    %1116 = vmatpush1.msra.mxu0 0.0
    %1117 = vmatprep.subr.mxu0 0.0
    %1118 = vmatpush1.msra.mxu0 0.0
    %1119 = vmatprep.subr.mxu0 0.0
    %1120 = vmatpush1.msra.mxu0 0.0
    %1121 = vmatprep.subr.mxu0 0.0
    %1122 = vmatpush1.msra.mxu0 0.0
    %1123 = vmatprep.subr.mxu0 0.0
    %1124 = vmatpush1.msra.mxu0 0.0
    %1125 = vmatprep.subr.mxu0 0.0
    %1126 = vmatpush1.msra.mxu0 0.0
    %1127 = vmatprep.mubr.f32.mxu0 0.0
    %1128 = vmatmul.mubr.f32.gmra.mrb[0].mxu0 %v1061
    %v1129 = vpop.f32.mrb[0].mxu0
    %v1130 = vadd.f32 %v198, %v1129
    %v1131 = vpop.f32.mrb[0].mxu0
    %1132 = vdwg.mxu0
    %v1133 = vxor.u32 %v1130, 2147483648
    %v1134 = vmul.f32 %v1133, 1.442695
    %v1135 = vpow.pop %v1134
    %v1136 = vadd.f32 %v1135, 1.0
    %v1137 = vrcp.pop %v1136
    %v1138 = vmul.f32 1.0, %v1137
    %v1139 = vtanh.pop %v1130
    %v1140 = vmul.f32 %v1138, %v936
    %1142 = vrot.lane.b32.xlu0 %v1139, 64
    %v1143 = vpop.permute.xlu0 %1142
    %v1145 = vmul.f32 %v1138, %v1143
    %1147 = vrot.lane.b32.xlu0 %v1145, 32
    %v1148 = vpop.permute.xlu0 %1147
    %v1150 = vadd.f32 %v1140, %v1148
    %v1151 = vtanh.pop %v1150
    %1153 = vrot.lane.b32.xlu0 %v1151, 64
    %v1154 = vpop.permute.xlu0 %1153
    %v1156 = vmul.f32 %v1138, %v1154
    %v1157 = vadd.f32 %v943, %v1156
    %s1158 = scalar_lea.vmem %s0, 20
    %v1159 = vld [vmem:[%s1158] sm:$0xf]
    %1160 = vst.msk [vmem:[#allocation2] sm:$0xf] %vm66, %v1159
    %1161 = vrot.lane.b32.xlu0 %v1048, 64
    %v1162 = vpop.permute.xlu0 %1161
    %1164 = vst.msk [vmem:[#allocation2] sm:$0xf] %vm72, %v1162
    %v1165 = vld [vmem:[#allocation2] sm:$0xf]
    %v1167 = vsel %vm81, %v1165, 0
    %1169 = vmatprep.subr.mxu0 0.0
    %1170 = vmatpush1.msra.mxu0 %v45
    %1171 = vmatprep.subr.mxu0 0.0
    %1172 = vmatpush1.msra.mxu0 %v46
    %1173 = vmatprep.subr.mxu0 0.0
    %1174 = vmatpush1.msra.mxu0 %v47
    %1175 = vmatprep.subr.mxu0 0.0
    %1176 = vmatpush1.msra.mxu0 %v48
    %1177 = vmatprep.subr.mxu0 0.0
    %1178 = vmatpush1.msra.mxu0 %v49
    %1179 = vmatprep.subr.mxu0 0.0
    %1180 = vmatpush1.msra.mxu0 %v50
    %1181 = vmatprep.subr.mxu0 0.0
    %1182 = vmatpush1.msra.mxu0 %v51
    %1183 = vmatprep.subr.mxu0 0.0
    %1184 = vmatpush1.msra.mxu0 %v52
    %1185 = vmatprep.subr.mxu0 0.0
    %1186 = vmatpush1.msra.mxu0 0.0
    %1187 = vmatprep.subr.mxu0 0.0
    %1188 = vmatpush1.msra.mxu0 0.0
    %1189 = vmatprep.subr.mxu0 0.0
    %1190 = vmatpush1.msra.mxu0 0.0
    %1191 = vmatprep.subr.mxu0 0.0
    %1192 = vmatpush1.msra.mxu0 0.0
    %1193 = vmatprep.subr.mxu0 0.0
    %1194 = vmatpush1.msra.mxu0 0.0
    %1195 = vmatprep.subr.mxu0 0.0
    %1196 = vmatpush1.msra.mxu0 0.0
    %1197 = vmatprep.subr.mxu0 0.0
    %1198 = vmatpush1.msra.mxu0 0.0
    %1199 = vmatprep.subr.mxu0 0.0
    %1200 = vmatpush1.msra.mxu0 0.0
    %1201 = vmatprep.subr.mxu0 0.0
    %1202 = vmatpush1.msra.mxu0 0.0
    %1203 = vmatprep.subr.mxu0 0.0
    %1204 = vmatpush1.msra.mxu0 0.0
    %1205 = vmatprep.subr.mxu0 0.0
    %1206 = vmatpush1.msra.mxu0 0.0
    %1207 = vmatprep.subr.mxu0 0.0
    %1208 = vmatpush1.msra.mxu0 0.0
    %1209 = vmatprep.subr.mxu0 0.0
    %1210 = vmatpush1.msra.mxu0 0.0
    %1211 = vmatprep.subr.mxu0 0.0
    %1212 = vmatpush1.msra.mxu0 0.0
    %1213 = vmatprep.subr.mxu0 0.0
    %1214 = vmatpush1.msra.mxu0 0.0
    %1215 = vmatprep.subr.mxu0 0.0
    %1216 = vmatpush1.msra.mxu0 0.0
    %1217 = vmatprep.subr.mxu0 0.0
    %1218 = vmatpush1.msra.mxu0 0.0
    %1219 = vmatprep.subr.mxu0 0.0
    %1220 = vmatpush1.msra.mxu0 0.0
    %1221 = vmatprep.subr.mxu0 0.0
    %1222 = vmatpush1.msra.mxu0 0.0
    %1223 = vmatprep.subr.mxu0 0.0
    %1224 = vmatpush1.msra.mxu0 0.0
    %1225 = vmatprep.subr.mxu0 0.0
    %1226 = vmatpush1.msra.mxu0 0.0
    %1227 = vmatprep.subr.mxu0 0.0
    %1228 = vmatpush1.msra.mxu0 0.0
    %1229 = vmatprep.subr.mxu0 0.0
    %1230 = vmatpush1.msra.mxu0 0.0
    %1231 = vmatprep.subr.mxu0 0.0
    %1232 = vmatpush1.msra.mxu0 0.0
    %1233 = vmatprep.mubr.f32.mxu0 0.0
    %1234 = vmatmul.mubr.f32.gmra.mrb[0].mxu0 %v1167
    %v1235 = vpop.f32.mrb[0].mxu0
    %v1236 = vadd.f32 %v79, %v1235
    %v1237 = vpop.f32.mrb[0].mxu0
    %1238 = vdwg.mxu0
    %v1239 = vxor.u32 %v1236, 2147483648
    %v1240 = vmul.f32 %v1239, 1.442695
    %v1241 = vpow.pop %v1240
    %v1242 = vadd.f32 %v1241, 1.0
    %v1243 = vrcp.pop %v1242
    %v1244 = vmul.f32 1.0, %v1243
    %v1245 = vtanh.pop %v1236
    %v1246 = vmul.f32 %v1244, %v1042
    %1248 = vrot.lane.b32.xlu0 %v1245, 64
    %v1249 = vpop.permute.xlu0 %1248
    %v1251 = vmul.f32 %v1244, %v1249
    %1253 = vrot.lane.b32.xlu0 %v1251, 32
    %v1254 = vpop.permute.xlu0 %1253
    %v1256 = vadd.f32 %v1246, %v1254
    %v1257 = vtanh.pop %v1256
    %1259 = vrot.lane.b32.xlu0 %v1257, 64
    %v1260 = vpop.permute.xlu0 %1259
    %v1262 = vmul.f32 %v1244, %v1260
    %1264 = vrot.lane.b32.xlu0 %v1262, 32
    %v1265 = vpop.permute.xlu0 %1264
    %1267 = vst.msk [vmem:[#allocation2] sm:$0xf] %vm66, %v1265
    %1269 = vrot.lane.b32.xlu0 %v1156, 64
    %v1270 = vpop.permute.xlu0 %1269
    %1272 = vst.msk [vmem:[#allocation2] sm:$0xf] %vm72, %v1270
    %v1273 = vld [vmem:[#allocation2] sm:$0xf]
    %v1275 = vsel %vm81, %v1273, 0
    %1277 = vmatprep.subr.mxu0 0.0
    %1278 = vmatpush1.msra.mxu0 %v54
    %1279 = vmatprep.subr.mxu0 0.0
    %1280 = vmatpush1.msra.mxu0 %v55
    %1281 = vmatprep.subr.mxu0 0.0
    %1282 = vmatpush1.msra.mxu0 %v56
    %1283 = vmatprep.subr.mxu0 0.0
    %1284 = vmatpush1.msra.mxu0 %v57
    %1285 = vmatprep.subr.mxu0 0.0
    %1286 = vmatpush1.msra.mxu0 %v58
    %1287 = vmatprep.subr.mxu0 0.0
    %1288 = vmatpush1.msra.mxu0 %v59
    %1289 = vmatprep.subr.mxu0 0.0
    %1290 = vmatpush1.msra.mxu0 %v60
    %1291 = vmatprep.subr.mxu0 0.0
    %1292 = vmatpush1.msra.mxu0 %v61
    %1293 = vmatprep.subr.mxu0 0.0
    %1294 = vmatpush1.msra.mxu0 0.0
    %1295 = vmatprep.subr.mxu0 0.0
    %1296 = vmatpush1.msra.mxu0 0.0
    %1297 = vmatprep.subr.mxu0 0.0
    %1298 = vmatpush1.msra.mxu0 0.0
    %1299 = vmatprep.subr.mxu0 0.0
    %1300 = vmatpush1.msra.mxu0 0.0
    %1301 = vmatprep.subr.mxu0 0.0
    %1302 = vmatpush1.msra.mxu0 0.0
    %1303 = vmatprep.subr.mxu0 0.0
    %1304 = vmatpush1.msra.mxu0 0.0
    %1305 = vmatprep.subr.mxu0 0.0
    %1306 = vmatpush1.msra.mxu0 0.0
    %1307 = vmatprep.subr.mxu0 0.0
    %1308 = vmatpush1.msra.mxu0 0.0
    %1309 = vmatprep.subr.mxu0 0.0
    %1310 = vmatpush1.msra.mxu0 0.0
    %1311 = vmatprep.subr.mxu0 0.0
    %1312 = vmatpush1.msra.mxu0 0.0
    %1313 = vmatprep.subr.mxu0 0.0
    %1314 = vmatpush1.msra.mxu0 0.0
    %1315 = vmatprep.subr.mxu0 0.0
    %1316 = vmatpush1.msra.mxu0 0.0
    %1317 = vmatprep.subr.mxu0 0.0
    %1318 = vmatpush1.msra.mxu0 0.0
    %1319 = vmatprep.subr.mxu0 0.0
    %1320 = vmatpush1.msra.mxu0 0.0
    %1321 = vmatprep.subr.mxu0 0.0
    %1322 = vmatpush1.msra.mxu0 0.0
    %1323 = vmatprep.subr.mxu0 0.0
    %1324 = vmatpush1.msra.mxu0 0.0
    %1325 = vmatprep.subr.mxu0 0.0
    %1326 = vmatpush1.msra.mxu0 0.0
    %1327 = vmatprep.subr.mxu0 0.0
    %1328 = vmatpush1.msra.mxu0 0.0
    %1329 = vmatprep.subr.mxu0 0.0
    %1330 = vmatpush1.msra.mxu0 0.0
    %1331 = vmatprep.subr.mxu0 0.0
    %1332 = vmatpush1.msra.mxu0 0.0
    %1333 = vmatprep.subr.mxu0 0.0
    %1334 = vmatpush1.msra.mxu0 0.0
    %1335 = vmatprep.subr.mxu0 0.0
    %1336 = vmatpush1.msra.mxu0 0.0
    %1337 = vmatprep.subr.mxu0 0.0
    %1338 = vmatpush1.msra.mxu0 0.0
    %1339 = vmatprep.subr.mxu0 0.0
    %1340 = vmatpush1.msra.mxu0 0.0
    %1341 = vmatprep.mubr.f32.mxu0 0.0
    %1342 = vmatmul.mubr.f32.gmra.mrb[0].mxu0 %v1275
    %v1343 = vpop.f32.mrb[0].mxu0
    %v1344 = vadd.f32 %v198, %v1343
    %v1345 = vpop.f32.mrb[0].mxu0
    %1346 = vdwg.mxu0
    %v1347 = vxor.u32 %v1344, 2147483648
    %v1348 = vmul.f32 %v1347, 1.442695
    %v1349 = vpow.pop %v1348
    %v1350 = vadd.f32 %v1349, 1.0
    %v1351 = vrcp.pop %v1350
    %v1352 = vmul.f32 1.0, %v1351
    %v1353 = vtanh.pop %v1344
    %v1354 = vmul.f32 %v1352, %v1150
    %1356 = vrot.lane.b32.xlu0 %v1353, 64
    %v1357 = vpop.permute.xlu0 %1356
    %v1359 = vmul.f32 %v1352, %v1357
    %1361 = vrot.lane.b32.xlu0 %v1359, 32
    %v1362 = vpop.permute.xlu0 %1361
    %v1364 = vadd.f32 %v1354, %v1362
    %v1365 = vtanh.pop %v1364
    %1367 = vrot.lane.b32.xlu0 %v1365, 64
    %v1368 = vpop.permute.xlu0 %1367
    %v1370 = vmul.f32 %v1352, %v1368
    %v1371 = vadd.f32 %v1157, %v1370
    %s1372 = scalar_lea.vmem %s0, 24
    %v1373 = vld [vmem:[%s1372] sm:$0xf]
    %1374 = vst.msk [vmem:[#allocation2] sm:$0xf] %vm66, %v1373
    %1375 = vrot.lane.b32.xlu0 %v1262, 64
    %v1376 = vpop.permute.xlu0 %1375
    %1378 = vst.msk [vmem:[#allocation2] sm:$0xf] %vm72, %v1376
    %v1379 = vld [vmem:[#allocation2] sm:$0xf]
    %v1381 = vsel %vm81, %v1379, 0
    %1383 = vmatprep.subr.mxu0 0.0
    %1384 = vmatpush1.msra.mxu0 %v45
    %1385 = vmatprep.subr.mxu0 0.0
    %1386 = vmatpush1.msra.mxu0 %v46
    %1387 = vmatprep.subr.mxu0 0.0
    %1388 = vmatpush1.msra.mxu0 %v47
    %1389 = vmatprep.subr.mxu0 0.0
    %1390 = vmatpush1.msra.mxu0 %v48
    %1391 = vmatprep.subr.mxu0 0.0
    %1392 = vmatpush1.msra.mxu0 %v49
    %1393 = vmatprep.subr.mxu0 0.0
    %1394 = vmatpush1.msra.mxu0 %v50
    %1395 = vmatprep.subr.mxu0 0.0
    %1396 = vmatpush1.msra.mxu0 %v51
    %1397 = vmatprep.subr.mxu0 0.0
    %1398 = vmatpush1.msra.mxu0 %v52
    %1399 = vmatprep.subr.mxu0 0.0
    %1400 = vmatpush1.msra.mxu0 0.0
    %1401 = vmatprep.subr.mxu0 0.0
    %1402 = vmatpush1.msra.mxu0 0.0
    %1403 = vmatprep.subr.mxu0 0.0
    %1404 = vmatpush1.msra.mxu0 0.0
    %1405 = vmatprep.subr.mxu0 0.0
    %1406 = vmatpush1.msra.mxu0 0.0
    %1407 = vmatprep.subr.mxu0 0.0
    %1408 = vmatpush1.msra.mxu0 0.0
    %1409 = vmatprep.subr.mxu0 0.0
    %1410 = vmatpush1.msra.mxu0 0.0
    %1411 = vmatprep.subr.mxu0 0.0
    %1412 = vmatpush1.msra.mxu0 0.0
    %1413 = vmatprep.subr.mxu0 0.0
    %1414 = vmatpush1.msra.mxu0 0.0
    %1415 = vmatprep.subr.mxu0 0.0
    %1416 = vmatpush1.msra.mxu0 0.0
    %1417 = vmatprep.subr.mxu0 0.0
    %1418 = vmatpush1.msra.mxu0 0.0
    %1419 = vmatprep.subr.mxu0 0.0
    %1420 = vmatpush1.msra.mxu0 0.0
    %1421 = vmatprep.subr.mxu0 0.0
    %1422 = vmatpush1.msra.mxu0 0.0
    %1423 = vmatprep.subr.mxu0 0.0
    %1424 = vmatpush1.msra.mxu0 0.0
    %1425 = vmatprep.subr.mxu0 0.0
    %1426 = vmatpush1.msra.mxu0 0.0
    %1427 = vmatprep.subr.mxu0 0.0
    %1428 = vmatpush1.msra.mxu0 0.0
    %1429 = vmatprep.subr.mxu0 0.0
    %1430 = vmatpush1.msra.mxu0 0.0
    %1431 = vmatprep.subr.mxu0 0.0
    %1432 = vmatpush1.msra.mxu0 0.0
    %1433 = vmatprep.subr.mxu0 0.0
    %1434 = vmatpush1.msra.mxu0 0.0
    %1435 = vmatprep.subr.mxu0 0.0
    %1436 = vmatpush1.msra.mxu0 0.0
    %1437 = vmatprep.subr.mxu0 0.0
    %1438 = vmatpush1.msra.mxu0 0.0
    %1439 = vmatprep.subr.mxu0 0.0
    %1440 = vmatpush1.msra.mxu0 0.0
    %1441 = vmatprep.subr.mxu0 0.0
    %1442 = vmatpush1.msra.mxu0 0.0
    %1443 = vmatprep.subr.mxu0 0.0
    %1444 = vmatpush1.msra.mxu0 0.0
    %1445 = vmatprep.subr.mxu0 0.0
    %1446 = vmatpush1.msra.mxu0 0.0
    %1447 = vmatprep.mubr.f32.mxu0 0.0
    %1448 = vmatmul.mubr.f32.gmra.mrb[0].mxu0 %v1381
    %v1449 = vpop.f32.mrb[0].mxu0
    %v1450 = vadd.f32 %v79, %v1449
    %v1451 = vpop.f32.mrb[0].mxu0
    %1452 = vdwg.mxu0
    %v1453 = vxor.u32 %v1450, 2147483648
    %v1454 = vmul.f32 %v1453, 1.442695
    %v1455 = vpow.pop %v1454
    %v1456 = vadd.f32 %v1455, 1.0
    %v1457 = vrcp.pop %v1456
    %v1458 = vmul.f32 1.0, %v1457
    %v1459 = vtanh.pop %v1450
    %v1460 = vmul.f32 %v1458, %v1256
    %1462 = vrot.lane.b32.xlu0 %v1459, 64
    %v1463 = vpop.permute.xlu0 %1462
    %v1465 = vmul.f32 %v1458, %v1463
    %1467 = vrot.lane.b32.xlu0 %v1465, 32
    %v1468 = vpop.permute.xlu0 %1467
    %v1470 = vadd.f32 %v1460, %v1468
    %v1471 = vtanh.pop %v1470
    %1473 = vrot.lane.b32.xlu0 %v1471, 64
    %v1474 = vpop.permute.xlu0 %1473
    %v1476 = vmul.f32 %v1458, %v1474
    %1478 = vrot.lane.b32.xlu0 %v1476, 32
    %v1479 = vpop.permute.xlu0 %1478
    %1481 = vst.msk [vmem:[#allocation2] sm:$0xf] %vm66, %v1479
    %1483 = vrot.lane.b32.xlu0 %v1370, 64
    %v1484 = vpop.permute.xlu0 %1483
    %1486 = vst.msk [vmem:[#allocation2] sm:$0xf] %vm72, %v1484
    %v1487 = vld [vmem:[#allocation2] sm:$0xf]
    %v1489 = vsel %vm81, %v1487, 0
    %1491 = vmatprep.subr.mxu0 0.0
    %1492 = vmatpush1.msra.mxu0 %v54
    %1493 = vmatprep.subr.mxu0 0.0
    %1494 = vmatpush1.msra.mxu0 %v55
    %1495 = vmatprep.subr.mxu0 0.0
    %1496 = vmatpush1.msra.mxu0 %v56
    %1497 = vmatprep.subr.mxu0 0.0
    %1498 = vmatpush1.msra.mxu0 %v57
    %1499 = vmatprep.subr.mxu0 0.0
    %1500 = vmatpush1.msra.mxu0 %v58
    %1501 = vmatprep.subr.mxu0 0.0
    %1502 = vmatpush1.msra.mxu0 %v59
    %1503 = vmatprep.subr.mxu0 0.0
    %1504 = vmatpush1.msra.mxu0 %v60
    %1505 = vmatprep.subr.mxu0 0.0
    %1506 = vmatpush1.msra.mxu0 %v61
    %1507 = vmatprep.subr.mxu0 0.0
    %1508 = vmatpush1.msra.mxu0 0.0
    %1509 = vmatprep.subr.mxu0 0.0
    %1510 = vmatpush1.msra.mxu0 0.0
    %1511 = vmatprep.subr.mxu0 0.0
    %1512 = vmatpush1.msra.mxu0 0.0
    %1513 = vmatprep.subr.mxu0 0.0
    %1514 = vmatpush1.msra.mxu0 0.0
    %1515 = vmatprep.subr.mxu0 0.0
    %1516 = vmatpush1.msra.mxu0 0.0
    %1517 = vmatprep.subr.mxu0 0.0
    %1518 = vmatpush1.msra.mxu0 0.0
    %1519 = vmatprep.subr.mxu0 0.0
    %1520 = vmatpush1.msra.mxu0 0.0
    %1521 = vmatprep.subr.mxu0 0.0
    %1522 = vmatpush1.msra.mxu0 0.0
    %1523 = vmatprep.subr.mxu0 0.0
    %1524 = vmatpush1.msra.mxu0 0.0
    %1525 = vmatprep.subr.mxu0 0.0
    %1526 = vmatpush1.msra.mxu0 0.0
    %1527 = vmatprep.subr.mxu0 0.0
    %1528 = vmatpush1.msra.mxu0 0.0
    %1529 = vmatprep.subr.mxu0 0.0
    %1530 = vmatpush1.msra.mxu0 0.0
    %1531 = vmatprep.subr.mxu0 0.0
    %1532 = vmatpush1.msra.mxu0 0.0
    %1533 = vmatprep.subr.mxu0 0.0
    %1534 = vmatpush1.msra.mxu0 0.0
    %1535 = vmatprep.subr.mxu0 0.0
    %1536 = vmatpush1.msra.mxu0 0.0
    %1537 = vmatprep.subr.mxu0 0.0
    %1538 = vmatpush1.msra.mxu0 0.0
    %1539 = vmatprep.subr.mxu0 0.0
    %1540 = vmatpush1.msra.mxu0 0.0
    %1541 = vmatprep.subr.mxu0 0.0
    %1542 = vmatpush1.msra.mxu0 0.0
    %1543 = vmatprep.subr.mxu0 0.0
    %1544 = vmatpush1.msra.mxu0 0.0
    %1545 = vmatprep.subr.mxu0 0.0
    %1546 = vmatpush1.msra.mxu0 0.0
    %1547 = vmatprep.subr.mxu0 0.0
    %1548 = vmatpush1.msra.mxu0 0.0
    %1549 = vmatprep.subr.mxu0 0.0
    %1550 = vmatpush1.msra.mxu0 0.0
    %1551 = vmatprep.subr.mxu0 0.0
    %1552 = vmatpush1.msra.mxu0 0.0
    %1553 = vmatprep.subr.mxu0 0.0
    %1554 = vmatpush1.msra.mxu0 0.0
    %1555 = vmatprep.mubr.f32.mxu0 0.0
    %1556 = vmatmul.mubr.f32.gmra.mrb[0].mxu0 %v1489
    %v1557 = vpop.f32.mrb[0].mxu0
    %v1558 = vadd.f32 %v198, %v1557
    %v1559 = vpop.f32.mrb[0].mxu0
    %1560 = vdwg.mxu0
    %v1561 = vxor.u32 %v1558, 2147483648
    %v1562 = vmul.f32 %v1561, 1.442695
    %v1563 = vpow.pop %v1562
    %v1564 = vadd.f32 %v1563, 1.0
    %v1565 = vrcp.pop %v1564
    %v1566 = vmul.f32 1.0, %v1565
    %v1567 = vtanh.pop %v1558
    %v1568 = vmul.f32 %v1566, %v1364
    %1570 = vrot.lane.b32.xlu0 %v1567, 64
    %v1571 = vpop.permute.xlu0 %1570
    %v1573 = vmul.f32 %v1566, %v1571
    %1575 = vrot.lane.b32.xlu0 %v1573, 32
    %v1576 = vpop.permute.xlu0 %1575
    %v1578 = vadd.f32 %v1568, %v1576
    %v1579 = vtanh.pop %v1578
    %1581 = vrot.lane.b32.xlu0 %v1579, 64
    %v1582 = vpop.permute.xlu0 %1581
    %v1584 = vmul.f32 %v1566, %v1582
    %v1585 = vadd.f32 %v1371, %v1584
    %s1586 = scalar_lea.vmem %s0, 28
    %v1587 = vld [vmem:[%s1586] sm:$0xf]
    %1588 = vst.msk [vmem:[#allocation2] sm:$0xf] %vm66, %v1587
    %1589 = vrot.lane.b32.xlu0 %v1476, 64
    %v1590 = vpop.permute.xlu0 %1589
    %1592 = vst.msk [vmem:[#allocation2] sm:$0xf] %vm72, %v1590
    %v1593 = vld [vmem:[#allocation2] sm:$0xf]
    %v1595 = vsel %vm81, %v1593, 0
    %1597 = vmatprep.subr.mxu0 0.0
    %1598 = vmatpush1.msra.mxu0 %v45
    %1599 = vmatprep.subr.mxu0 0.0
    %1600 = vmatpush1.msra.mxu0 %v46
    %1601 = vmatprep.subr.mxu0 0.0
    %1602 = vmatpush1.msra.mxu0 %v47
    %1603 = vmatprep.subr.mxu0 0.0
    %1604 = vmatpush1.msra.mxu0 %v48
    %1605 = vmatprep.subr.mxu0 0.0
    %1606 = vmatpush1.msra.mxu0 %v49
    %1607 = vmatprep.subr.mxu0 0.0
    %1608 = vmatpush1.msra.mxu0 %v50
    %1609 = vmatprep.subr.mxu0 0.0
    %1610 = vmatpush1.msra.mxu0 %v51
    %1611 = vmatprep.subr.mxu0 0.0
    %1612 = vmatpush1.msra.mxu0 %v52
    %1613 = vmatprep.subr.mxu0 0.0
    %1614 = vmatpush1.msra.mxu0 0.0
    %1615 = vmatprep.subr.mxu0 0.0
    %1616 = vmatpush1.msra.mxu0 0.0
    %1617 = vmatprep.subr.mxu0 0.0
    %1618 = vmatpush1.msra.mxu0 0.0
    %1619 = vmatprep.subr.mxu0 0.0
    %1620 = vmatpush1.msra.mxu0 0.0
    %1621 = vmatprep.subr.mxu0 0.0
    %1622 = vmatpush1.msra.mxu0 0.0
    %1623 = vmatprep.subr.mxu0 0.0
    %1624 = vmatpush1.msra.mxu0 0.0
    %1625 = vmatprep.subr.mxu0 0.0
    %1626 = vmatpush1.msra.mxu0 0.0
    %1627 = vmatprep.subr.mxu0 0.0
    %1628 = vmatpush1.msra.mxu0 0.0
    %1629 = vmatprep.subr.mxu0 0.0
    %1630 = vmatpush1.msra.mxu0 0.0
    %1631 = vmatprep.subr.mxu0 0.0
    %1632 = vmatpush1.msra.mxu0 0.0
    %1633 = vmatprep.subr.mxu0 0.0
    %1634 = vmatpush1.msra.mxu0 0.0
    %1635 = vmatprep.subr.mxu0 0.0
    %1636 = vmatpush1.msra.mxu0 0.0
    %1637 = vmatprep.subr.mxu0 0.0
    %1638 = vmatpush1.msra.mxu0 0.0
    %1639 = vmatprep.subr.mxu0 0.0
    %1640 = vmatpush1.msra.mxu0 0.0
    %1641 = vmatprep.subr.mxu0 0.0
    %1642 = vmatpush1.msra.mxu0 0.0
    %1643 = vmatprep.subr.mxu0 0.0
    %1644 = vmatpush1.msra.mxu0 0.0
    %1645 = vmatprep.subr.mxu0 0.0
    %1646 = vmatpush1.msra.mxu0 0.0
    %1647 = vmatprep.subr.mxu0 0.0
    %1648 = vmatpush1.msra.mxu0 0.0
    %1649 = vmatprep.subr.mxu0 0.0
    %1650 = vmatpush1.msra.mxu0 0.0
    %1651 = vmatprep.subr.mxu0 0.0
    %1652 = vmatpush1.msra.mxu0 0.0
    %1653 = vmatprep.subr.mxu0 0.0
    %1654 = vmatpush1.msra.mxu0 0.0
    %1655 = vmatprep.subr.mxu0 0.0
    %1656 = vmatpush1.msra.mxu0 0.0
    %1657 = vmatprep.subr.mxu0 0.0
    %1658 = vmatpush1.msra.mxu0 0.0
    %1659 = vmatprep.subr.mxu0 0.0
    %1660 = vmatpush1.msra.mxu0 0.0
    %1661 = vmatprep.mubr.f32.mxu0 0.0
    %1662 = vmatmul.mubr.f32.gmra.mrb[0].mxu0 %v1595
    %v1663 = vpop.f32.mrb[0].mxu0
    %v1664 = vadd.f32 %v79, %v1663
    %v1665 = vpop.f32.mrb[0].mxu0
    %1666 = vdwg.mxu0
    %v1667 = vxor.u32 %v1664, 2147483648
    %v1668 = vmul.f32 %v1667, 1.442695
    %v1669 = vpow.pop %v1668
    %v1670 = vadd.f32 %v1669, 1.0
    %v1671 = vrcp.pop %v1670
    %v1672 = vmul.f32 1.0, %v1671
    %v1673 = vtanh.pop %v1664
    %v1674 = vmul.f32 %v1672, %v1470
    %1676 = vrot.lane.b32.xlu0 %v1673, 64
    %v1677 = vpop.permute.xlu0 %1676
    %v1679 = vmul.f32 %v1672, %v1677
    %1681 = vrot.lane.b32.xlu0 %v1679, 32
    %v1682 = vpop.permute.xlu0 %1681
    %v1684 = vadd.f32 %v1674, %v1682
    %v1685 = vtanh.pop %v1684
    %1687 = vrot.lane.b32.xlu0 %v1685, 64
    %v1688 = vpop.permute.xlu0 %1687
    %v1690 = vmul.f32 %v1672, %v1688
    %1692 = vrot.lane.b32.xlu0 %v1690, 32
    %v1693 = vpop.permute.xlu0 %1692
    %1695 = vst.msk [vmem:[#allocation2] sm:$0xf] %vm66, %v1693
    %1697 = vrot.lane.b32.xlu0 %v1584, 64
    %v1698 = vpop.permute.xlu0 %1697
    %1700 = vst.msk [vmem:[#allocation2] sm:$0xf] %vm72, %v1698
    %v1701 = vld [vmem:[#allocation2] sm:$0xf]
    %v1703 = vsel %vm81, %v1701, 0
    %1705 = vmatprep.subr.mxu0 0.0
    %1706 = vmatpush1.msra.mxu0 %v54
    %1707 = vmatprep.subr.mxu0 0.0
    %1708 = vmatpush1.msra.mxu0 %v55
    %1709 = vmatprep.subr.mxu0 0.0
    %1710 = vmatpush1.msra.mxu0 %v56
    %1711 = vmatprep.subr.mxu0 0.0
    %1712 = vmatpush1.msra.mxu0 %v57
    %1713 = vmatprep.subr.mxu0 0.0
    %1714 = vmatpush1.msra.mxu0 %v58
    %1715 = vmatprep.subr.mxu0 0.0
    %1716 = vmatpush1.msra.mxu0 %v59
    %1717 = vmatprep.subr.mxu0 0.0
    %1718 = vmatpush1.msra.mxu0 %v60
    %1719 = vmatprep.subr.mxu0 0.0
    %1720 = vmatpush1.msra.mxu0 %v61
    %1721 = vmatprep.subr.mxu0 0.0
    %1722 = vmatpush1.msra.mxu0 0.0
    %1723 = vmatprep.subr.mxu0 0.0
    %1724 = vmatpush1.msra.mxu0 0.0
    %1725 = vmatprep.subr.mxu0 0.0
    %1726 = vmatpush1.msra.mxu0 0.0
    %1727 = vmatprep.subr.mxu0 0.0
    %1728 = vmatpush1.msra.mxu0 0.0
    %1729 = vmatprep.subr.mxu0 0.0
    %1730 = vmatpush1.msra.mxu0 0.0
    %1731 = vmatprep.subr.mxu0 0.0
    %1732 = vmatpush1.msra.mxu0 0.0
    %1733 = vmatprep.subr.mxu0 0.0
    %1734 = vmatpush1.msra.mxu0 0.0
    %1735 = vmatprep.subr.mxu0 0.0
    %1736 = vmatpush1.msra.mxu0 0.0
    %1737 = vmatprep.subr.mxu0 0.0
    %1738 = vmatpush1.msra.mxu0 0.0
    %1739 = vmatprep.subr.mxu0 0.0
    %1740 = vmatpush1.msra.mxu0 0.0
    %1741 = vmatprep.subr.mxu0 0.0
    %1742 = vmatpush1.msra.mxu0 0.0
    %1743 = vmatprep.subr.mxu0 0.0
    %1744 = vmatpush1.msra.mxu0 0.0
    %1745 = vmatprep.subr.mxu0 0.0
    %1746 = vmatpush1.msra.mxu0 0.0
    %1747 = vmatprep.subr.mxu0 0.0
    %1748 = vmatpush1.msra.mxu0 0.0
    %1749 = vmatprep.subr.mxu0 0.0
    %1750 = vmatpush1.msra.mxu0 0.0
    %1751 = vmatprep.subr.mxu0 0.0
    %1752 = vmatpush1.msra.mxu0 0.0
    %1753 = vmatprep.subr.mxu0 0.0
    %1754 = vmatpush1.msra.mxu0 0.0
    %1755 = vmatprep.subr.mxu0 0.0
    %1756 = vmatpush1.msra.mxu0 0.0
    %1757 = vmatprep.subr.mxu0 0.0
    %1758 = vmatpush1.msra.mxu0 0.0
    %1759 = vmatprep.subr.mxu0 0.0
    %1760 = vmatpush1.msra.mxu0 0.0
    %1761 = vmatprep.subr.mxu0 0.0
    %1762 = vmatpush1.msra.mxu0 0.0
    %1763 = vmatprep.subr.mxu0 0.0
    %1764 = vmatpush1.msra.mxu0 0.0
    %1765 = vmatprep.subr.mxu0 0.0
    %1766 = vmatpush1.msra.mxu0 0.0
    %1767 = vmatprep.subr.mxu0 0.0
    %1768 = vmatpush1.msra.mxu0 0.0
    %1769 = vmatprep.mubr.f32.mxu0 0.0
    %1770 = vmatmul.mubr.f32.gmra.mrb[0].mxu0 %v1703
    %v1771 = vpop.f32.mrb[0].mxu0
    %v1772 = vadd.f32 %v198, %v1771
    %v1773 = vpop.f32.mrb[0].mxu0
    %1774 = vdwg.mxu0
    %v1775 = vxor.u32 %v1772, 2147483648
    %v1776 = vmul.f32 %v1775, 1.442695
    %v1777 = vpow.pop %v1776
    %v1778 = vadd.f32 %v1777, 1.0
    %v1779 = vrcp.pop %v1778
    %v1780 = vmul.f32 1.0, %v1779
    %v1781 = vtanh.pop %v1772
    %v1782 = vmul.f32 %v1780, %v1578
    %1784 = vrot.lane.b32.xlu0 %v1781, 64
    %v1785 = vpop.permute.xlu0 %1784
    %v1787 = vmul.f32 %v1780, %v1785
    %1789 = vrot.lane.b32.xlu0 %v1787, 32
    %v1790 = vpop.permute.xlu0 %1789
    %v1792 = vadd.f32 %v1782, %v1790
    %v1793 = vtanh.pop %v1792
    %1795 = vrot.lane.b32.xlu0 %v1793, 64
    %v1796 = vpop.permute.xlu0 %1795
    %v1798 = vmul.f32 %v1780, %v1796
    %v1799 = vadd.f32 %v1585, %v1798
    %v1800 = vld [vmem:[%s7] sm:$0xff]
    %v1801 = vld [vmem:[%s7 + $0x8] sm:$0xff]
    %v1802 = vld [vmem:[%s7 + $0x10] sm:$0xff]
    %v1803 = vld [vmem:[%s7 + $0x18] sm:$0xff]
    %v1804 = vld [vmem:[%s8] sm:$0x1]
    %v1806 = vlaneseq
    %v1807 = vshrl.u32 %v1806, 7
    %v1808 = vsub.s32 0, %v1807
    %v1809 = vrot.slane %v1804, %v1808
    %1812 = vrot.lane.b32.xlu0 %v1799, 32
    %v1813 = vpop.permute.xlu0 %1812
    %vm1814 = vcmask 261120
    %v1815 = vsel %vm1814, %v1813, 0
    %1817 = vmatprep.subr.mxu0 0.0
    %1818 = vmatpush1.msra.mxu0 %v1800
    %1819 = vmatprep.subr.mxu0 0.0
    %1820 = vmatpush1.msra.mxu0 %v1801
    %1821 = vmatprep.subr.mxu0 0.0
    %1822 = vmatpush1.msra.mxu0 %v1802
    %1823 = vmatprep.subr.mxu0 0.0
    %1824 = vmatpush1.msra.mxu0 %v1803
    %1825 = vmatprep.subr.mxu0 0.0
    %1826 = vmatpush1.msra.mxu0 0.0
    %1827 = vmatprep.subr.mxu0 0.0
    %1828 = vmatpush1.msra.mxu0 0.0
    %1829 = vmatprep.subr.mxu0 0.0
    %1830 = vmatpush1.msra.mxu0 0.0
    %1831 = vmatprep.subr.mxu0 0.0
    %1832 = vmatpush1.msra.mxu0 0.0
    %1833 = vmatprep.subr.mxu0 0.0
    %1834 = vmatpush1.msra.mxu0 0.0
    %1835 = vmatprep.subr.mxu0 0.0
    %1836 = vmatpush1.msra.mxu0 0.0
    %1837 = vmatprep.subr.mxu0 0.0
    %1838 = vmatpush1.msra.mxu0 0.0
    %1839 = vmatprep.subr.mxu0 0.0
    %1840 = vmatpush1.msra.mxu0 0.0
    %1841 = vmatprep.subr.mxu0 0.0
    %1842 = vmatpush1.msra.mxu0 0.0
    %1843 = vmatprep.subr.mxu0 0.0
    %1844 = vmatpush1.msra.mxu0 0.0
    %1845 = vmatprep.subr.mxu0 0.0
    %1846 = vmatpush1.msra.mxu0 0.0
    %1847 = vmatprep.subr.mxu0 0.0
    %1848 = vmatpush1.msra.mxu0 0.0
    %1849 = vmatprep.subr.mxu0 0.0
    %1850 = vmatpush1.msra.mxu0 0.0
    %1851 = vmatprep.subr.mxu0 0.0
    %1852 = vmatpush1.msra.mxu0 0.0
    %1853 = vmatprep.subr.mxu0 0.0
    %1854 = vmatpush1.msra.mxu0 0.0
    %1855 = vmatprep.subr.mxu0 0.0
    %1856 = vmatpush1.msra.mxu0 0.0
    %1857 = vmatprep.subr.mxu0 0.0
    %1858 = vmatpush1.msra.mxu0 0.0
    %1859 = vmatprep.subr.mxu0 0.0
    %1860 = vmatpush1.msra.mxu0 0.0
    %1861 = vmatprep.subr.mxu0 0.0
    %1862 = vmatpush1.msra.mxu0 0.0
    %1863 = vmatprep.subr.mxu0 0.0
    %1864 = vmatpush1.msra.mxu0 0.0
    %1865 = vmatprep.subr.mxu0 0.0
    %1866 = vmatpush1.msra.mxu0 0.0
    %1867 = vmatprep.subr.mxu0 0.0
    %1868 = vmatpush1.msra.mxu0 0.0
    %1869 = vmatprep.subr.mxu0 0.0
    %1870 = vmatpush1.msra.mxu0 0.0
    %1871 = vmatprep.subr.mxu0 0.0
    %1872 = vmatpush1.msra.mxu0 0.0
    %1873 = vmatprep.subr.mxu0 0.0
    %1874 = vmatpush1.msra.mxu0 0.0
    %1875 = vmatprep.subr.mxu0 0.0
    %1876 = vmatpush1.msra.mxu0 0.0
    %1877 = vmatprep.subr.mxu0 0.0
    %1878 = vmatpush1.msra.mxu0 0.0
    %1879 = vmatprep.subr.mxu0 0.0
    %1880 = vmatpush1.msra.mxu0 0.0
    %1881 = vmatprep.mubr.f32.mxu0 0.0
    %1882 = vmatmul.mubr.f32.gmra.mrb[0].mxu0 %v1815
    %v1883 = vpop.f32.mrb[0].mxu0
    %v1884 = vadd.f32 %v1809, %v1883
    %v1885 = vpop.f32.mrb[0].mxu0
    %1886 = vdwg.mxu0
    %v1887 = vld [vmem:[%s9] sm:$0xff]
    %v1888 = vld [vmem:[%s9 + $0x8] sm:$0xff]
    %v1889 = vld [vmem:[%s9 + $0x10] sm:$0xff]
    %v1890 = vld [vmem:[%s9 + $0x18] sm:$0xff]
    %v1891 = vld [vmem:[%s9 + $0x20] sm:$0xff]
    %v1892 = vld [vmem:[%s9 + $0x28] sm:$0xff]
    %v1893 = vld [vmem:[%s9 + $0x30] sm:$0xff]
    %v1894 = vld [vmem:[%s9 + $0x38] sm:$0xff]
    %s1895 = scalar_lea.vmem %s9, 64
    %v1896 = vld [vmem:[%s1895] sm:$0xff]
    %v1897 = vld [vmem:[%s1895 + $0x8] sm:$0xff]
    %v1898 = vld [vmem:[%s1895 + $0x10] sm:$0xff]
    %v1899 = vld [vmem:[%s1895 + $0x18] sm:$0xff]
    %v1900 = vld [vmem:[%s1895 + $0x20] sm:$0xff]
    %v1901 = vld [vmem:[%s1895 + $0x28] sm:$0xff]
    %v1902 = vld [vmem:[%s1895 + $0x30] sm:$0xff]
    %v1903 = vld [vmem:[%s1895 + $0x38] sm:$0xff]
    %v1904 = vld [vmem:[%s10] sm:$0x1]
    %s1905 = scalar_lea.vmem %s10, 1
    %v1906 = vld [vmem:[%s1905] sm:$0x1]
    %1907 = vst.msk [vmem:[#allocation3] sm:$0xf] %vm66, 0.0
    %v1908 = vld [vmem:[%s5] sm:$0xf]
    %v1909 = vld [vmem:[%s6] sm:$0xff]
    %v1910 = vld [vmem:[%s6 + $0x8] sm:$0xff]
    %v1911 = vld [vmem:[%s6 + $0x10] sm:$0xff]
    %v1912 = vld [vmem:[%s6 + $0x18] sm:$0xff]
    %v1914 = vsel %vm1814, %v1908, 0
    %1916 = vmatprep.subr.mxu0 0.0
    %1917 = vmatpush1.msra.mxu0 %v1909
    %1918 = vmatprep.subr.mxu0 0.0
    %1919 = vmatpush1.msra.mxu0 %v1910
    %1920 = vmatprep.subr.mxu0 0.0
    %1921 = vmatpush1.msra.mxu0 %v1911
    %1922 = vmatprep.subr.mxu0 0.0
    %1923 = vmatpush1.msra.mxu0 %v1912
    %1924 = vmatprep.subr.mxu0 0.0
    %1925 = vmatpush1.msra.mxu0 0.0
    %1926 = vmatprep.subr.mxu0 0.0
    %1927 = vmatpush1.msra.mxu0 0.0
    %1928 = vmatprep.subr.mxu0 0.0
    %1929 = vmatpush1.msra.mxu0 0.0
    %1930 = vmatprep.subr.mxu0 0.0
    %1931 = vmatpush1.msra.mxu0 0.0
    %1932 = vmatprep.subr.mxu0 0.0
    %1933 = vmatpush1.msra.mxu0 0.0
    %1934 = vmatprep.subr.mxu0 0.0
    %1935 = vmatpush1.msra.mxu0 0.0
    %1936 = vmatprep.subr.mxu0 0.0
    %1937 = vmatpush1.msra.mxu0 0.0
    %1938 = vmatprep.subr.mxu0 0.0
    %1939 = vmatpush1.msra.mxu0 0.0
    %1940 = vmatprep.subr.mxu0 0.0
    %1941 = vmatpush1.msra.mxu0 0.0
    %1942 = vmatprep.subr.mxu0 0.0
    %1943 = vmatpush1.msra.mxu0 0.0
    %1944 = vmatprep.subr.mxu0 0.0
    %1945 = vmatpush1.msra.mxu0 0.0
    %1946 = vmatprep.subr.mxu0 0.0
    %1947 = vmatpush1.msra.mxu0 0.0
    %1948 = vmatprep.subr.mxu0 0.0
    %1949 = vmatpush1.msra.mxu0 0.0
    %1950 = vmatprep.subr.mxu0 0.0
    %1951 = vmatpush1.msra.mxu0 0.0
    %1952 = vmatprep.subr.mxu0 0.0
    %1953 = vmatpush1.msra.mxu0 0.0
    %1954 = vmatprep.subr.mxu0 0.0
    %1955 = vmatpush1.msra.mxu0 0.0
    %1956 = vmatprep.subr.mxu0 0.0
    %1957 = vmatpush1.msra.mxu0 0.0
    %1958 = vmatprep.subr.mxu0 0.0
    %1959 = vmatpush1.msra.mxu0 0.0
    %1960 = vmatprep.subr.mxu0 0.0
    %1961 = vmatpush1.msra.mxu0 0.0
    %1962 = vmatprep.subr.mxu0 0.0
    %1963 = vmatpush1.msra.mxu0 0.0
    %1964 = vmatprep.subr.mxu0 0.0
    %1965 = vmatpush1.msra.mxu0 0.0
    %1966 = vmatprep.subr.mxu0 0.0
    %1967 = vmatpush1.msra.mxu0 0.0
    %1968 = vmatprep.subr.mxu0 0.0
    %1969 = vmatpush1.msra.mxu0 0.0
    %1970 = vmatprep.subr.mxu0 0.0
    %1971 = vmatpush1.msra.mxu0 0.0
    %1972 = vmatprep.subr.mxu0 0.0
    %1973 = vmatpush1.msra.mxu0 0.0
    %1974 = vmatprep.subr.mxu0 0.0
    %1975 = vmatpush1.msra.mxu0 0.0
    %1976 = vmatprep.subr.mxu0 0.0
    %1977 = vmatpush1.msra.mxu0 0.0
    %1978 = vmatprep.subr.mxu0 0.0
    %1979 = vmatpush1.msra.mxu0 0.0
    %1980 = vmatprep.mubr.f32.mxu0 0.0
    %1981 = vmatmul.mubr.f32.gmra.mrb[0].mxu0 %v1914
    %v1982 = vpop.f32.mrb[0].mxu0
    %v1983 = vadd.f32 %v1884, %v1982
    %v1984 = vpop.f32.mrb[0].mxu0
    %1985 = vdwg.mxu0
    %v1986 = vmax.f32 %v1983, 0.0
    %1987 = vst.msk [vmem:[#allocation2] sm:$0xf] %vm66, %v1986
    %1988 = vrot.lane.b32.xlu0 %v1690, 64
    %v1989 = vpop.permute.xlu0 %1988
    %1991 = vst.msk [vmem:[#allocation2] sm:$0xf] %vm72, %v1989
    %v1992 = vld [vmem:[#allocation2] sm:$0xf]
    %v1994 = vlaneseq
    %v1995 = vshrl.u32 %v1994, 7
    %v1996 = vsub.s32 0, %v1995
    %v1997 = vrot.slane %v1904, %v1996
    %v2000 = vsel %vm81, %v1992, 0
    %2002 = vmatprep.subr.mxu0 0.0
    %2003 = vmatpush1.msra.mxu0 %v1887
    %2004 = vmatprep.subr.mxu0 0.0
    %2005 = vmatpush1.msra.mxu0 %v1888
    %2006 = vmatprep.subr.mxu0 0.0
    %2007 = vmatpush1.msra.mxu0 %v1889
    %2008 = vmatprep.subr.mxu0 0.0
    %2009 = vmatpush1.msra.mxu0 %v1890
    %2010 = vmatprep.subr.mxu0 0.0
    %2011 = vmatpush1.msra.mxu0 %v1891
    %2012 = vmatprep.subr.mxu0 0.0
    %2013 = vmatpush1.msra.mxu0 %v1892
    %2014 = vmatprep.subr.mxu0 0.0
    %2015 = vmatpush1.msra.mxu0 %v1893
    %2016 = vmatprep.subr.mxu0 0.0
    %2017 = vmatpush1.msra.mxu0 %v1894
    %2018 = vmatprep.subr.mxu0 0.0
    %2019 = vmatpush1.msra.mxu0 0.0
    %2020 = vmatprep.subr.mxu0 0.0
    %2021 = vmatpush1.msra.mxu0 0.0
    %2022 = vmatprep.subr.mxu0 0.0
    %2023 = vmatpush1.msra.mxu0 0.0
    %2024 = vmatprep.subr.mxu0 0.0
    %2025 = vmatpush1.msra.mxu0 0.0
    %2026 = vmatprep.subr.mxu0 0.0
    %2027 = vmatpush1.msra.mxu0 0.0
    %2028 = vmatprep.subr.mxu0 0.0
    %2029 = vmatpush1.msra.mxu0 0.0
    %2030 = vmatprep.subr.mxu0 0.0
    %2031 = vmatpush1.msra.mxu0 0.0
    %2032 = vmatprep.subr.mxu0 0.0
    %2033 = vmatpush1.msra.mxu0 0.0
    %2034 = vmatprep.subr.mxu0 0.0
    %2035 = vmatpush1.msra.mxu0 0.0
    %2036 = vmatprep.subr.mxu0 0.0
    %2037 = vmatpush1.msra.mxu0 0.0
    %2038 = vmatprep.subr.mxu0 0.0
    %2039 = vmatpush1.msra.mxu0 0.0
    %2040 = vmatprep.subr.mxu0 0.0
    %2041 = vmatpush1.msra.mxu0 0.0
    %2042 = vmatprep.subr.mxu0 0.0
    %2043 = vmatpush1.msra.mxu0 0.0
    %2044 = vmatprep.subr.mxu0 0.0
    %2045 = vmatpush1.msra.mxu0 0.0
    %2046 = vmatprep.subr.mxu0 0.0
    %2047 = vmatpush1.msra.mxu0 0.0
    %2048 = vmatprep.subr.mxu0 0.0
    %2049 = vmatpush1.msra.mxu0 0.0
    %2050 = vmatprep.subr.mxu0 0.0
    %2051 = vmatpush1.msra.mxu0 0.0
    %2052 = vmatprep.subr.mxu0 0.0
    %2053 = vmatpush1.msra.mxu0 0.0
    %2054 = vmatprep.subr.mxu0 0.0
    %2055 = vmatpush1.msra.mxu0 0.0
    %2056 = vmatprep.subr.mxu0 0.0
    %2057 = vmatpush1.msra.mxu0 0.0
    %2058 = vmatprep.subr.mxu0 0.0
    %2059 = vmatpush1.msra.mxu0 0.0
    %2060 = vmatprep.subr.mxu0 0.0
    %2061 = vmatpush1.msra.mxu0 0.0
    %2062 = vmatprep.subr.mxu0 0.0
    %2063 = vmatpush1.msra.mxu0 0.0
    %2064 = vmatprep.subr.mxu0 0.0
    %2065 = vmatpush1.msra.mxu0 0.0
    %2066 = vmatprep.mubr.f32.mxu0 0.0
    %2067 = vmatmul.mubr.f32.gmra.mrb[0].mxu0 %v2000
    %v2068 = vpop.f32.mrb[0].mxu0
    %v2069 = vadd.f32 %v1997, %v2068
    %v2070 = vpop.f32.mrb[0].mxu0
    %2071 = vdwg.mxu0
    %v2072 = vxor.u32 %v2069, 2147483648
    %v2073 = vmul.f32 %v2072, 1.442695
    %v2074 = vpow.pop %v2073
    %v2075 = vadd.f32 %v2074, 1.0
    %v2076 = vrcp.pop %v2075
    %v2077 = vmul.f32 1.0, %v2076
    %v2078 = vtanh.pop %v2069
    %v2079 = vmul.f32 %v2077, %v1989
    %2081 = vrot.lane.b32.xlu0 %v2078, 64
    %v2082 = vpop.permute.xlu0 %2081
    %v2084 = vmul.f32 %v2077, %v2082
    %2086 = vrot.lane.b32.xlu0 %v2084, 32
    %v2087 = vpop.permute.xlu0 %2086
    %v2089 = vadd.f32 %v2079, %v2087
    %v2090 = vtanh.pop %v2089
    %2092 = vrot.lane.b32.xlu0 %v2090, 64
    %v2093 = vpop.permute.xlu0 %2092
    %v2095 = vmul.f32 %v2077, %v2093
    %2097 = vrot.lane.b32.xlu0 %v2095, 32
    %v2098 = vpop.permute.xlu0 %2097
    %2100 = vst.msk [vmem:[#allocation2] sm:$0xf] %vm66, %v2098
    %2102 = vrot.lane.b32.xlu0 %v1798, 64
    %v2103 = vpop.permute.xlu0 %2102
    %2105 = vst.msk [vmem:[#allocation2] sm:$0xf] %vm72, %v2103
    %v2106 = vld [vmem:[#allocation2] sm:$0xf]
    %v2108 = vlaneseq
    %v2109 = vshrl.u32 %v2108, 7
    %v2110 = vsub.s32 0, %v2109
    %v2111 = vrot.slane %v1906, %v2110
    %v2114 = vsel %vm81, %v2106, 0
    %2116 = vmatprep.subr.mxu0 0.0
    %2117 = vmatpush1.msra.mxu0 %v1896
    %2118 = vmatprep.subr.mxu0 0.0
    %2119 = vmatpush1.msra.mxu0 %v1897
    %2120 = vmatprep.subr.mxu0 0.0
    %2121 = vmatpush1.msra.mxu0 %v1898
    %2122 = vmatprep.subr.mxu0 0.0
    %2123 = vmatpush1.msra.mxu0 %v1899
    %2124 = vmatprep.subr.mxu0 0.0
    %2125 = vmatpush1.msra.mxu0 %v1900
    %2126 = vmatprep.subr.mxu0 0.0
    %2127 = vmatpush1.msra.mxu0 %v1901
    %2128 = vmatprep.subr.mxu0 0.0
    %2129 = vmatpush1.msra.mxu0 %v1902
    %2130 = vmatprep.subr.mxu0 0.0
    %2131 = vmatpush1.msra.mxu0 %v1903
    %2132 = vmatprep.subr.mxu0 0.0
    %2133 = vmatpush1.msra.mxu0 0.0
    %2134 = vmatprep.subr.mxu0 0.0
    %2135 = vmatpush1.msra.mxu0 0.0
    %2136 = vmatprep.subr.mxu0 0.0
    %2137 = vmatpush1.msra.mxu0 0.0
    %2138 = vmatprep.subr.mxu0 0.0
    %2139 = vmatpush1.msra.mxu0 0.0
    %2140 = vmatprep.subr.mxu0 0.0
    %2141 = vmatpush1.msra.mxu0 0.0
    %2142 = vmatprep.subr.mxu0 0.0
    %2143 = vmatpush1.msra.mxu0 0.0
    %2144 = vmatprep.subr.mxu0 0.0
    %2145 = vmatpush1.msra.mxu0 0.0
    %2146 = vmatprep.subr.mxu0 0.0
    %2147 = vmatpush1.msra.mxu0 0.0
    %2148 = vmatprep.subr.mxu0 0.0
    %2149 = vmatpush1.msra.mxu0 0.0
    %2150 = vmatprep.subr.mxu0 0.0
    %2151 = vmatpush1.msra.mxu0 0.0
    %2152 = vmatprep.subr.mxu0 0.0
    %2153 = vmatpush1.msra.mxu0 0.0
    %2154 = vmatprep.subr.mxu0 0.0
    %2155 = vmatpush1.msra.mxu0 0.0
    %2156 = vmatprep.subr.mxu0 0.0
    %2157 = vmatpush1.msra.mxu0 0.0
    %2158 = vmatprep.subr.mxu0 0.0
    %2159 = vmatpush1.msra.mxu0 0.0
    %2160 = vmatprep.subr.mxu0 0.0
    %2161 = vmatpush1.msra.mxu0 0.0
    %2162 = vmatprep.subr.mxu0 0.0
    %2163 = vmatpush1.msra.mxu0 0.0
    %2164 = vmatprep.subr.mxu0 0.0
    %2165 = vmatpush1.msra.mxu0 0.0
    %2166 = vmatprep.subr.mxu0 0.0
    %2167 = vmatpush1.msra.mxu0 0.0
    %2168 = vmatprep.subr.mxu0 0.0
    %2169 = vmatpush1.msra.mxu0 0.0
    %2170 = vmatprep.subr.mxu0 0.0
    %2171 = vmatpush1.msra.mxu0 0.0
    %2172 = vmatprep.subr.mxu0 0.0
    %2173 = vmatpush1.msra.mxu0 0.0
    %2174 = vmatprep.subr.mxu0 0.0
    %2175 = vmatpush1.msra.mxu0 0.0
    %2176 = vmatprep.subr.mxu0 0.0
    %2177 = vmatpush1.msra.mxu0 0.0
    %2178 = vmatprep.subr.mxu0 0.0
    %2179 = vmatpush1.msra.mxu0 0.0
    %2180 = vmatprep.mubr.f32.mxu0 0.0
    %2181 = vmatmul.mubr.f32.gmra.mrb[0].mxu0 %v2114
    %v2182 = vpop.f32.mrb[0].mxu0
    %v2183 = vadd.f32 %v2111, %v2182
    %v2184 = vpop.f32.mrb[0].mxu0
    %2185 = vdwg.mxu0
    %v2186 = vxor.u32 %v2183, 2147483648
    %v2187 = vmul.f32 %v2186, 1.442695
    %v2188 = vpow.pop %v2187
    %v2189 = vadd.f32 %v2188, 1.0
    %v2190 = vrcp.pop %v2189
    %v2191 = vmul.f32 1.0, %v2190
    %v2192 = vtanh.pop %v2183
    %v2193 = vmul.f32 %v2191, %v2103
    %2195 = vrot.lane.b32.xlu0 %v2192, 64
    %v2196 = vpop.permute.xlu0 %2195
    %v2198 = vmul.f32 %v2191, %v2196
    %2200 = vrot.lane.b32.xlu0 %v2198, 32
    %v2201 = vpop.permute.xlu0 %2200
    %v2203 = vadd.f32 %v2193, %v2201
    %v2204 = vtanh.pop %v2203
    %2206 = vrot.lane.b32.xlu0 %v2204, 64
    %v2207 = vpop.permute.xlu0 %2206
    %v2209 = vmul.f32 %v2191, %v2207
    %2211 = vrot.lane.b32.xlu0 %v2209, 32
    %v2212 = vpop.permute.xlu0 %2211
    %s2214 = scalar_lea.vmem [#allocation3], 4
    %2215 = vst.msk [vmem:[%s2214] sm:$0xf] %vm66, %v2212
    %v2216 = vld [vmem:[%s6] sm:$0xff]
    %v2217 = vld [vmem:[%s6 + $0x8] sm:$0xff]
    %v2218 = vld [vmem:[%s6 + $0x10] sm:$0xff]
    %v2219 = vld [vmem:[%s6 + $0x18] sm:$0xff]
    %v2220 = vsel %vm1814, %v2212, 0
    %2222 = vmatprep.subr.mxu0 0.0
    %2223 = vmatpush1.msra.mxu0 %v2216
    %2224 = vmatprep.subr.mxu0 0.0
    %2225 = vmatpush1.msra.mxu0 %v2217
    %2226 = vmatprep.subr.mxu0 0.0
    %2227 = vmatpush1.msra.mxu0 %v2218
    %2228 = vmatprep.subr.mxu0 0.0
    %2229 = vmatpush1.msra.mxu0 %v2219
    %2230 = vmatprep.subr.mxu0 0.0
    %2231 = vmatpush1.msra.mxu0 0.0
    %2232 = vmatprep.subr.mxu0 0.0
    %2233 = vmatpush1.msra.mxu0 0.0
    %2234 = vmatprep.subr.mxu0 0.0
    %2235 = vmatpush1.msra.mxu0 0.0
    %2236 = vmatprep.subr.mxu0 0.0
    %2237 = vmatpush1.msra.mxu0 0.0
    %2238 = vmatprep.subr.mxu0 0.0
    %2239 = vmatpush1.msra.mxu0 0.0
    %2240 = vmatprep.subr.mxu0 0.0
    %2241 = vmatpush1.msra.mxu0 0.0
    %2242 = vmatprep.subr.mxu0 0.0
    %2243 = vmatpush1.msra.mxu0 0.0
    %2244 = vmatprep.subr.mxu0 0.0
    %2245 = vmatpush1.msra.mxu0 0.0
    %2246 = vmatprep.subr.mxu0 0.0
    %2247 = vmatpush1.msra.mxu0 0.0
    %2248 = vmatprep.subr.mxu0 0.0
    %2249 = vmatpush1.msra.mxu0 0.0
    %2250 = vmatprep.subr.mxu0 0.0
    %2251 = vmatpush1.msra.mxu0 0.0
    %2252 = vmatprep.subr.mxu0 0.0
    %2253 = vmatpush1.msra.mxu0 0.0
    %2254 = vmatprep.subr.mxu0 0.0
    %2255 = vmatpush1.msra.mxu0 0.0
    %2256 = vmatprep.subr.mxu0 0.0
    %2257 = vmatpush1.msra.mxu0 0.0
    %2258 = vmatprep.subr.mxu0 0.0
    %2259 = vmatpush1.msra.mxu0 0.0
    %2260 = vmatprep.subr.mxu0 0.0
    %2261 = vmatpush1.msra.mxu0 0.0
    %2262 = vmatprep.subr.mxu0 0.0
    %2263 = vmatpush1.msra.mxu0 0.0
    %2264 = vmatprep.subr.mxu0 0.0
    %2265 = vmatpush1.msra.mxu0 0.0
    %2266 = vmatprep.subr.mxu0 0.0
    %2267 = vmatpush1.msra.mxu0 0.0
    %2268 = vmatprep.subr.mxu0 0.0
    %2269 = vmatpush1.msra.mxu0 0.0
    %2270 = vmatprep.subr.mxu0 0.0
    %2271 = vmatpush1.msra.mxu0 0.0
    %2272 = vmatprep.subr.mxu0 0.0
    %2273 = vmatpush1.msra.mxu0 0.0
    %2274 = vmatprep.subr.mxu0 0.0
    %2275 = vmatpush1.msra.mxu0 0.0
    %2276 = vmatprep.subr.mxu0 0.0
    %2277 = vmatpush1.msra.mxu0 0.0
    %2278 = vmatprep.subr.mxu0 0.0
    %2279 = vmatpush1.msra.mxu0 0.0
    %2280 = vmatprep.subr.mxu0 0.0
    %2281 = vmatpush1.msra.mxu0 0.0
    %2282 = vmatprep.subr.mxu0 0.0
    %2283 = vmatpush1.msra.mxu0 0.0
    %2284 = vmatprep.subr.mxu0 0.0
    %2285 = vmatpush1.msra.mxu0 0.0
    %2286 = vmatprep.mubr.f32.mxu0 0.0
    %2287 = vmatmul.mubr.f32.gmra.mrb[0].mxu0 %v2220
    %v2288 = vpop.f32.mrb[0].mxu0
    %v2289 = vadd.f32 %v1884, %v2288
    %v2290 = vpop.f32.mrb[0].mxu0
    %2291 = vdwg.mxu0
    %v2292 = vmax.f32 %v2289, 0.0
    %2293 = vst.msk [vmem:[#allocation2] sm:$0xf] %vm66, %v2292
    %2294 = vrot.lane.b32.xlu0 %v2095, 64
    %v2295 = vpop.permute.xlu0 %2294
    %2297 = vst.msk [vmem:[#allocation2] sm:$0xf] %vm72, %v2295
    %v2298 = vld [vmem:[#allocation2] sm:$0xf]
    %v2300 = vsel %vm81, %v2298, 0
    %2302 = vmatprep.subr.mxu0 0.0
    %2303 = vmatpush1.msra.mxu0 %v1887
    %2304 = vmatprep.subr.mxu0 0.0
    %2305 = vmatpush1.msra.mxu0 %v1888
    %2306 = vmatprep.subr.mxu0 0.0
    %2307 = vmatpush1.msra.mxu0 %v1889
    %2308 = vmatprep.subr.mxu0 0.0
    %2309 = vmatpush1.msra.mxu0 %v1890
    %2310 = vmatprep.subr.mxu0 0.0
    %2311 = vmatpush1.msra.mxu0 %v1891
    %2312 = vmatprep.subr.mxu0 0.0
    %2313 = vmatpush1.msra.mxu0 %v1892
    %2314 = vmatprep.subr.mxu0 0.0
    %2315 = vmatpush1.msra.mxu0 %v1893
    %2316 = vmatprep.subr.mxu0 0.0
    %2317 = vmatpush1.msra.mxu0 %v1894
    %2318 = vmatprep.subr.mxu0 0.0
    %2319 = vmatpush1.msra.mxu0 0.0
    %2320 = vmatprep.subr.mxu0 0.0
    %2321 = vmatpush1.msra.mxu0 0.0
    %2322 = vmatprep.subr.mxu0 0.0
    %2323 = vmatpush1.msra.mxu0 0.0
    %2324 = vmatprep.subr.mxu0 0.0
    %2325 = vmatpush1.msra.mxu0 0.0
    %2326 = vmatprep.subr.mxu0 0.0
    %2327 = vmatpush1.msra.mxu0 0.0
    %2328 = vmatprep.subr.mxu0 0.0
    %2329 = vmatpush1.msra.mxu0 0.0
    %2330 = vmatprep.subr.mxu0 0.0
    %2331 = vmatpush1.msra.mxu0 0.0
    %2332 = vmatprep.subr.mxu0 0.0
    %2333 = vmatpush1.msra.mxu0 0.0
    %2334 = vmatprep.subr.mxu0 0.0
    %2335 = vmatpush1.msra.mxu0 0.0
    %2336 = vmatprep.subr.mxu0 0.0
    %2337 = vmatpush1.msra.mxu0 0.0
    %2338 = vmatprep.subr.mxu0 0.0
    %2339 = vmatpush1.msra.mxu0 0.0
    %2340 = vmatprep.subr.mxu0 0.0
    %2341 = vmatpush1.msra.mxu0 0.0
    %2342 = vmatprep.subr.mxu0 0.0
    %2343 = vmatpush1.msra.mxu0 0.0
    %2344 = vmatprep.subr.mxu0 0.0
    %2345 = vmatpush1.msra.mxu0 0.0
    %2346 = vmatprep.subr.mxu0 0.0
    %2347 = vmatpush1.msra.mxu0 0.0
    %2348 = vmatprep.subr.mxu0 0.0
    %2349 = vmatpush1.msra.mxu0 0.0
    %2350 = vmatprep.subr.mxu0 0.0
    %2351 = vmatpush1.msra.mxu0 0.0
    %2352 = vmatprep.subr.mxu0 0.0
    %2353 = vmatpush1.msra.mxu0 0.0
    %2354 = vmatprep.subr.mxu0 0.0
    %2355 = vmatpush1.msra.mxu0 0.0
    %2356 = vmatprep.subr.mxu0 0.0
    %2357 = vmatpush1.msra.mxu0 0.0
    %2358 = vmatprep.subr.mxu0 0.0
    %2359 = vmatpush1.msra.mxu0 0.0
    %2360 = vmatprep.subr.mxu0 0.0
    %2361 = vmatpush1.msra.mxu0 0.0
    %2362 = vmatprep.subr.mxu0 0.0
    %2363 = vmatpush1.msra.mxu0 0.0
    %2364 = vmatprep.subr.mxu0 0.0
    %2365 = vmatpush1.msra.mxu0 0.0
    %2366 = vmatprep.mubr.f32.mxu0 0.0
    %2367 = vmatmul.mubr.f32.gmra.mrb[0].mxu0 %v2300
    %v2368 = vpop.f32.mrb[0].mxu0
    %v2369 = vadd.f32 %v1997, %v2368
    %v2370 = vpop.f32.mrb[0].mxu0
    %2371 = vdwg.mxu0
    %v2372 = vxor.u32 %v2369, 2147483648
    %v2373 = vmul.f32 %v2372, 1.442695
    %v2374 = vpow.pop %v2373
    %v2375 = vadd.f32 %v2374, 1.0
    %v2376 = vrcp.pop %v2375
    %v2377 = vmul.f32 1.0, %v2376
    %v2378 = vtanh.pop %v2369
    %v2379 = vmul.f32 %v2377, %v2089
    %2381 = vrot.lane.b32.xlu0 %v2378, 64
    %v2382 = vpop.permute.xlu0 %2381
    %v2384 = vmul.f32 %v2377, %v2382
    %2386 = vrot.lane.b32.xlu0 %v2384, 32
    %v2387 = vpop.permute.xlu0 %2386
    %v2389 = vadd.f32 %v2379, %v2387
    %v2390 = vtanh.pop %v2389
    %2392 = vrot.lane.b32.xlu0 %v2390, 64
    %v2393 = vpop.permute.xlu0 %2392
    %v2395 = vmul.f32 %v2377, %v2393
    %2397 = vrot.lane.b32.xlu0 %v2395, 32
    %v2398 = vpop.permute.xlu0 %2397
    %2400 = vst.msk [vmem:[#allocation2] sm:$0xf] %vm66, %v2398
    %2401 = vrot.lane.b32.xlu0 %v2209, 64
    %v2402 = vpop.permute.xlu0 %2401
    %2404 = vst.msk [vmem:[#allocation2] sm:$0xf] %vm72, %v2402
    %v2405 = vld [vmem:[#allocation2] sm:$0xf]
    %v2407 = vsel %vm81, %v2405, 0
    %2409 = vmatprep.subr.mxu0 0.0
    %2410 = vmatpush1.msra.mxu0 %v1896
    %2411 = vmatprep.subr.mxu0 0.0
    %2412 = vmatpush1.msra.mxu0 %v1897
    %2413 = vmatprep.subr.mxu0 0.0
    %2414 = vmatpush1.msra.mxu0 %v1898
    %2415 = vmatprep.subr.mxu0 0.0
    %2416 = vmatpush1.msra.mxu0 %v1899
    %2417 = vmatprep.subr.mxu0 0.0
    %2418 = vmatpush1.msra.mxu0 %v1900
    %2419 = vmatprep.subr.mxu0 0.0
    %2420 = vmatpush1.msra.mxu0 %v1901
    %2421 = vmatprep.subr.mxu0 0.0
    %2422 = vmatpush1.msra.mxu0 %v1902
    %2423 = vmatprep.subr.mxu0 0.0
    %2424 = vmatpush1.msra.mxu0 %v1903
    %2425 = vmatprep.subr.mxu0 0.0
    %2426 = vmatpush1.msra.mxu0 0.0
    %2427 = vmatprep.subr.mxu0 0.0
    %2428 = vmatpush1.msra.mxu0 0.0
    %2429 = vmatprep.subr.mxu0 0.0
    %2430 = vmatpush1.msra.mxu0 0.0
    %2431 = vmatprep.subr.mxu0 0.0
    %2432 = vmatpush1.msra.mxu0 0.0
    %2433 = vmatprep.subr.mxu0 0.0
    %2434 = vmatpush1.msra.mxu0 0.0
    %2435 = vmatprep.subr.mxu0 0.0
    %2436 = vmatpush1.msra.mxu0 0.0
    %2437 = vmatprep.subr.mxu0 0.0
    %2438 = vmatpush1.msra.mxu0 0.0
    %2439 = vmatprep.subr.mxu0 0.0
    %2440 = vmatpush1.msra.mxu0 0.0
    %2441 = vmatprep.subr.mxu0 0.0
    %2442 = vmatpush1.msra.mxu0 0.0
    %2443 = vmatprep.subr.mxu0 0.0
    %2444 = vmatpush1.msra.mxu0 0.0
    %2445 = vmatprep.subr.mxu0 0.0
    %2446 = vmatpush1.msra.mxu0 0.0
    %2447 = vmatprep.subr.mxu0 0.0
    %2448 = vmatpush1.msra.mxu0 0.0
    %2449 = vmatprep.subr.mxu0 0.0
    %2450 = vmatpush1.msra.mxu0 0.0
    %2451 = vmatprep.subr.mxu0 0.0
    %2452 = vmatpush1.msra.mxu0 0.0
    %2453 = vmatprep.subr.mxu0 0.0
    %2454 = vmatpush1.msra.mxu0 0.0
    %2455 = vmatprep.subr.mxu0 0.0
    %2456 = vmatpush1.msra.mxu0 0.0
    %2457 = vmatprep.subr.mxu0 0.0
    %2458 = vmatpush1.msra.mxu0 0.0
    %2459 = vmatprep.subr.mxu0 0.0
    %2460 = vmatpush1.msra.mxu0 0.0
    %2461 = vmatprep.subr.mxu0 0.0
    %2462 = vmatpush1.msra.mxu0 0.0
    %2463 = vmatprep.subr.mxu0 0.0
    %2464 = vmatpush1.msra.mxu0 0.0
    %2465 = vmatprep.subr.mxu0 0.0
    %2466 = vmatpush1.msra.mxu0 0.0
    %2467 = vmatprep.subr.mxu0 0.0
    %2468 = vmatpush1.msra.mxu0 0.0
    %2469 = vmatprep.subr.mxu0 0.0
    %2470 = vmatpush1.msra.mxu0 0.0
    %2471 = vmatprep.subr.mxu0 0.0
    %2472 = vmatpush1.msra.mxu0 0.0
    %2473 = vmatprep.mubr.f32.mxu0 0.0
    %2474 = vmatmul.mubr.f32.gmra.mrb[0].mxu0 %v2407
    %v2475 = vpop.f32.mrb[0].mxu0
    %v2476 = vadd.f32 %v2111, %v2475
    %v2477 = vpop.f32.mrb[0].mxu0
    %2478 = vdwg.mxu0
    %v2479 = vxor.u32 %v2476, 2147483648
    %v2480 = vmul.f32 %v2479, 1.442695
    %v2481 = vpow.pop %v2480
    %v2482 = vadd.f32 %v2481, 1.0
    %v2483 = vrcp.pop %v2482
    %v2484 = vmul.f32 1.0, %v2483
    %v2485 = vtanh.pop %v2476
    %v2486 = vmul.f32 %v2484, %v2203
    %2488 = vrot.lane.b32.xlu0 %v2485, 64
    %v2489 = vpop.permute.xlu0 %2488
    %v2491 = vmul.f32 %v2484, %v2489
    %2493 = vrot.lane.b32.xlu0 %v2491, 32
    %v2494 = vpop.permute.xlu0 %2493
    %v2496 = vadd.f32 %v2486, %v2494
    %v2497 = vtanh.pop %v2496
    %2499 = vrot.lane.b32.xlu0 %v2497, 64
    %v2500 = vpop.permute.xlu0 %2499
    %v2502 = vmul.f32 %v2484, %v2500
    %2504 = vrot.lane.b32.xlu0 %v2502, 32
    %v2505 = vpop.permute.xlu0 %2504
    %s2507 = scalar_lea.vmem [#allocation3], 8
    %2508 = vst.msk [vmem:[%s2507] sm:$0xf] %vm66, %v2505
    %v2509 = vld [vmem:[%s6] sm:$0xff]
    %v2510 = vld [vmem:[%s6 + $0x8] sm:$0xff]
    %v2511 = vld [vmem:[%s6 + $0x10] sm:$0xff]
    %v2512 = vld [vmem:[%s6 + $0x18] sm:$0xff]
    %v2513 = vsel %vm1814, %v2505, 0
    %2515 = vmatprep.subr.mxu0 0.0
    %2516 = vmatpush1.msra.mxu0 %v2509
    %2517 = vmatprep.subr.mxu0 0.0
    %2518 = vmatpush1.msra.mxu0 %v2510
    %2519 = vmatprep.subr.mxu0 0.0
    %2520 = vmatpush1.msra.mxu0 %v2511
    %2521 = vmatprep.subr.mxu0 0.0
    %2522 = vmatpush1.msra.mxu0 %v2512
    %2523 = vmatprep.subr.mxu0 0.0
    %2524 = vmatpush1.msra.mxu0 0.0
    %2525 = vmatprep.subr.mxu0 0.0
    %2526 = vmatpush1.msra.mxu0 0.0
    %2527 = vmatprep.subr.mxu0 0.0
    %2528 = vmatpush1.msra.mxu0 0.0
    %2529 = vmatprep.subr.mxu0 0.0
    %2530 = vmatpush1.msra.mxu0 0.0
    %2531 = vmatprep.subr.mxu0 0.0
    %2532 = vmatpush1.msra.mxu0 0.0
    %2533 = vmatprep.subr.mxu0 0.0
    %2534 = vmatpush1.msra.mxu0 0.0
    %2535 = vmatprep.subr.mxu0 0.0
    %2536 = vmatpush1.msra.mxu0 0.0
    %2537 = vmatprep.subr.mxu0 0.0
    %2538 = vmatpush1.msra.mxu0 0.0
    %2539 = vmatprep.subr.mxu0 0.0
    %2540 = vmatpush1.msra.mxu0 0.0
    %2541 = vmatprep.subr.mxu0 0.0
    %2542 = vmatpush1.msra.mxu0 0.0
    %2543 = vmatprep.subr.mxu0 0.0
    %2544 = vmatpush1.msra.mxu0 0.0
    %2545 = vmatprep.subr.mxu0 0.0
    %2546 = vmatpush1.msra.mxu0 0.0
    %2547 = vmatprep.subr.mxu0 0.0
    %2548 = vmatpush1.msra.mxu0 0.0
    %2549 = vmatprep.subr.mxu0 0.0
    %2550 = vmatpush1.msra.mxu0 0.0
    %2551 = vmatprep.subr.mxu0 0.0
    %2552 = vmatpush1.msra.mxu0 0.0
    %2553 = vmatprep.subr.mxu0 0.0
    %2554 = vmatpush1.msra.mxu0 0.0
    %2555 = vmatprep.subr.mxu0 0.0
    %2556 = vmatpush1.msra.mxu0 0.0
    %2557 = vmatprep.subr.mxu0 0.0
    %2558 = vmatpush1.msra.mxu0 0.0
    %2559 = vmatprep.subr.mxu0 0.0
    %2560 = vmatpush1.msra.mxu0 0.0
    %2561 = vmatprep.subr.mxu0 0.0
    %2562 = vmatpush1.msra.mxu0 0.0
    %2563 = vmatprep.subr.mxu0 0.0
    %2564 = vmatpush1.msra.mxu0 0.0
    %2565 = vmatprep.subr.mxu0 0.0
    %2566 = vmatpush1.msra.mxu0 0.0
    %2567 = vmatprep.subr.mxu0 0.0
    %2568 = vmatpush1.msra.mxu0 0.0
    %2569 = vmatprep.subr.mxu0 0.0
    %2570 = vmatpush1.msra.mxu0 0.0
    %2571 = vmatprep.subr.mxu0 0.0
    %2572 = vmatpush1.msra.mxu0 0.0
    %2573 = vmatprep.subr.mxu0 0.0
    %2574 = vmatpush1.msra.mxu0 0.0
    %2575 = vmatprep.subr.mxu0 0.0
    %2576 = vmatpush1.msra.mxu0 0.0
    %2577 = vmatprep.subr.mxu0 0.0
    %2578 = vmatpush1.msra.mxu0 0.0
    %2579 = vmatprep.mubr.f32.mxu0 0.0
    %2580 = vmatmul.mubr.f32.gmra.mrb[0].mxu0 %v2513
    %v2581 = vpop.f32.mrb[0].mxu0
    %v2582 = vadd.f32 %v1884, %v2581
    %v2583 = vpop.f32.mrb[0].mxu0
    %2584 = vdwg.mxu0
    %v2585 = vmax.f32 %v2582, 0.0
    %2586 = vst.msk [vmem:[#allocation2] sm:$0xf] %vm66, %v2585
    %2587 = vrot.lane.b32.xlu0 %v2395, 64
    %v2588 = vpop.permute.xlu0 %2587
    %2590 = vst.msk [vmem:[#allocation2] sm:$0xf] %vm72, %v2588
    %v2591 = vld [vmem:[#allocation2] sm:$0xf]
    %v2593 = vsel %vm81, %v2591, 0
    %2595 = vmatprep.subr.mxu0 0.0
    %2596 = vmatpush1.msra.mxu0 %v1887
    %2597 = vmatprep.subr.mxu0 0.0
    %2598 = vmatpush1.msra.mxu0 %v1888
    %2599 = vmatprep.subr.mxu0 0.0
    %2600 = vmatpush1.msra.mxu0 %v1889
    %2601 = vmatprep.subr.mxu0 0.0
    %2602 = vmatpush1.msra.mxu0 %v1890
    %2603 = vmatprep.subr.mxu0 0.0
    %2604 = vmatpush1.msra.mxu0 %v1891
    %2605 = vmatprep.subr.mxu0 0.0
    %2606 = vmatpush1.msra.mxu0 %v1892
    %2607 = vmatprep.subr.mxu0 0.0
    %2608 = vmatpush1.msra.mxu0 %v1893
    %2609 = vmatprep.subr.mxu0 0.0
    %2610 = vmatpush1.msra.mxu0 %v1894
    %2611 = vmatprep.subr.mxu0 0.0
    %2612 = vmatpush1.msra.mxu0 0.0
    %2613 = vmatprep.subr.mxu0 0.0
    %2614 = vmatpush1.msra.mxu0 0.0
    %2615 = vmatprep.subr.mxu0 0.0
    %2616 = vmatpush1.msra.mxu0 0.0
    %2617 = vmatprep.subr.mxu0 0.0
    %2618 = vmatpush1.msra.mxu0 0.0
    %2619 = vmatprep.subr.mxu0 0.0
    %2620 = vmatpush1.msra.mxu0 0.0
    %2621 = vmatprep.subr.mxu0 0.0
    %2622 = vmatpush1.msra.mxu0 0.0
    %2623 = vmatprep.subr.mxu0 0.0
    %2624 = vmatpush1.msra.mxu0 0.0
    %2625 = vmatprep.subr.mxu0 0.0
    %2626 = vmatpush1.msra.mxu0 0.0
    %2627 = vmatprep.subr.mxu0 0.0
    %2628 = vmatpush1.msra.mxu0 0.0
    %2629 = vmatprep.subr.mxu0 0.0
    %2630 = vmatpush1.msra.mxu0 0.0
    %2631 = vmatprep.subr.mxu0 0.0
    %2632 = vmatpush1.msra.mxu0 0.0
    %2633 = vmatprep.subr.mxu0 0.0
    %2634 = vmatpush1.msra.mxu0 0.0
    %2635 = vmatprep.subr.mxu0 0.0
    %2636 = vmatpush1.msra.mxu0 0.0
    %2637 = vmatprep.subr.mxu0 0.0
    %2638 = vmatpush1.msra.mxu0 0.0
    %2639 = vmatprep.subr.mxu0 0.0
    %2640 = vmatpush1.msra.mxu0 0.0
    %2641 = vmatprep.subr.mxu0 0.0
    %2642 = vmatpush1.msra.mxu0 0.0
    %2643 = vmatprep.subr.mxu0 0.0
    %2644 = vmatpush1.msra.mxu0 0.0
    %2645 = vmatprep.subr.mxu0 0.0
    %2646 = vmatpush1.msra.mxu0 0.0
    %2647 = vmatprep.subr.mxu0 0.0
    %2648 = vmatpush1.msra.mxu0 0.0
    %2649 = vmatprep.subr.mxu0 0.0
    %2650 = vmatpush1.msra.mxu0 0.0
    %2651 = vmatprep.subr.mxu0 0.0
    %2652 = vmatpush1.msra.mxu0 0.0
    %2653 = vmatprep.subr.mxu0 0.0
    %2654 = vmatpush1.msra.mxu0 0.0
    %2655 = vmatprep.subr.mxu0 0.0
    %2656 = vmatpush1.msra.mxu0 0.0
    %2657 = vmatprep.subr.mxu0 0.0
    %2658 = vmatpush1.msra.mxu0 0.0
    %2659 = vmatprep.mubr.f32.mxu0 0.0
    %2660 = vmatmul.mubr.f32.gmra.mrb[0].mxu0 %v2593
    %v2661 = vpop.f32.mrb[0].mxu0
    %v2662 = vadd.f32 %v1997, %v2661
    %v2663 = vpop.f32.mrb[0].mxu0
    %2664 = vdwg.mxu0
    %v2665 = vxor.u32 %v2662, 2147483648
    %v2666 = vmul.f32 %v2665, 1.442695
    %v2667 = vpow.pop %v2666
    %v2668 = vadd.f32 %v2667, 1.0
    %v2669 = vrcp.pop %v2668
    %v2670 = vmul.f32 1.0, %v2669
    %v2671 = vtanh.pop %v2662
    %v2672 = vmul.f32 %v2670, %v2389
    %2674 = vrot.lane.b32.xlu0 %v2671, 64
    %v2675 = vpop.permute.xlu0 %2674
    %v2677 = vmul.f32 %v2670, %v2675
    %2679 = vrot.lane.b32.xlu0 %v2677, 32
    %v2680 = vpop.permute.xlu0 %2679
    %v2682 = vadd.f32 %v2672, %v2680
    %v2683 = vtanh.pop %v2682
    %2685 = vrot.lane.b32.xlu0 %v2683, 64
    %v2686 = vpop.permute.xlu0 %2685
    %v2688 = vmul.f32 %v2670, %v2686
    %2690 = vrot.lane.b32.xlu0 %v2688, 32
    %v2691 = vpop.permute.xlu0 %2690
    %2693 = vst.msk [vmem:[#allocation2] sm:$0xf] %vm66, %v2691
    %2694 = vrot.lane.b32.xlu0 %v2502, 64
    %v2695 = vpop.permute.xlu0 %2694
    %2697 = vst.msk [vmem:[#allocation2] sm:$0xf] %vm72, %v2695
    %v2698 = vld [vmem:[#allocation2] sm:$0xf]
    %v2700 = vsel %vm81, %v2698, 0
    %2702 = vmatprep.subr.mxu0 0.0
    %2703 = vmatpush1.msra.mxu0 %v1896
    %2704 = vmatprep.subr.mxu0 0.0
    %2705 = vmatpush1.msra.mxu0 %v1897
    %2706 = vmatprep.subr.mxu0 0.0
    %2707 = vmatpush1.msra.mxu0 %v1898
    %2708 = vmatprep.subr.mxu0 0.0
    %2709 = vmatpush1.msra.mxu0 %v1899
    %2710 = vmatprep.subr.mxu0 0.0
    %2711 = vmatpush1.msra.mxu0 %v1900
    %2712 = vmatprep.subr.mxu0 0.0
    %2713 = vmatpush1.msra.mxu0 %v1901
    %2714 = vmatprep.subr.mxu0 0.0
    %2715 = vmatpush1.msra.mxu0 %v1902
    %2716 = vmatprep.subr.mxu0 0.0
    %2717 = vmatpush1.msra.mxu0 %v1903
    %2718 = vmatprep.subr.mxu0 0.0
    %2719 = vmatpush1.msra.mxu0 0.0
    %2720 = vmatprep.subr.mxu0 0.0
    %2721 = vmatpush1.msra.mxu0 0.0
    %2722 = vmatprep.subr.mxu0 0.0
    %2723 = vmatpush1.msra.mxu0 0.0
    %2724 = vmatprep.subr.mxu0 0.0
    %2725 = vmatpush1.msra.mxu0 0.0
    %2726 = vmatprep.subr.mxu0 0.0
    %2727 = vmatpush1.msra.mxu0 0.0
    %2728 = vmatprep.subr.mxu0 0.0
    %2729 = vmatpush1.msra.mxu0 0.0
    %2730 = vmatprep.subr.mxu0 0.0
    %2731 = vmatpush1.msra.mxu0 0.0
    %2732 = vmatprep.subr.mxu0 0.0
    %2733 = vmatpush1.msra.mxu0 0.0
    %2734 = vmatprep.subr.mxu0 0.0
    %2735 = vmatpush1.msra.mxu0 0.0
    %2736 = vmatprep.subr.mxu0 0.0
    %2737 = vmatpush1.msra.mxu0 0.0
    %2738 = vmatprep.subr.mxu0 0.0
    %2739 = vmatpush1.msra.mxu0 0.0
    %2740 = vmatprep.subr.mxu0 0.0
    %2741 = vmatpush1.msra.mxu0 0.0
    %2742 = vmatprep.subr.mxu0 0.0
    %2743 = vmatpush1.msra.mxu0 0.0
    %2744 = vmatprep.subr.mxu0 0.0
    %2745 = vmatpush1.msra.mxu0 0.0
    %2746 = vmatprep.subr.mxu0 0.0
    %2747 = vmatpush1.msra.mxu0 0.0
    %2748 = vmatprep.subr.mxu0 0.0
    %2749 = vmatpush1.msra.mxu0 0.0
    %2750 = vmatprep.subr.mxu0 0.0
    %2751 = vmatpush1.msra.mxu0 0.0
    %2752 = vmatprep.subr.mxu0 0.0
    %2753 = vmatpush1.msra.mxu0 0.0
    %2754 = vmatprep.subr.mxu0 0.0
    %2755 = vmatpush1.msra.mxu0 0.0
    %2756 = vmatprep.subr.mxu0 0.0
    %2757 = vmatpush1.msra.mxu0 0.0
    %2758 = vmatprep.subr.mxu0 0.0
    %2759 = vmatpush1.msra.mxu0 0.0
    %2760 = vmatprep.subr.mxu0 0.0
    %2761 = vmatpush1.msra.mxu0 0.0
    %2762 = vmatprep.subr.mxu0 0.0
    %2763 = vmatpush1.msra.mxu0 0.0
    %2764 = vmatprep.subr.mxu0 0.0
    %2765 = vmatpush1.msra.mxu0 0.0
    %2766 = vmatprep.mubr.f32.mxu0 0.0
    %2767 = vmatmul.mubr.f32.gmra.mrb[0].mxu0 %v2700
    %v2768 = vpop.f32.mrb[0].mxu0
    %v2769 = vadd.f32 %v2111, %v2768
    %v2770 = vpop.f32.mrb[0].mxu0
    %2771 = vdwg.mxu0
    %v2772 = vxor.u32 %v2769, 2147483648
    %v2773 = vmul.f32 %v2772, 1.442695
    %v2774 = vpow.pop %v2773
    %v2775 = vadd.f32 %v2774, 1.0
    %v2776 = vrcp.pop %v2775
    %v2777 = vmul.f32 1.0, %v2776
    %v2778 = vtanh.pop %v2769
    %v2779 = vmul.f32 %v2777, %v2496
    %2781 = vrot.lane.b32.xlu0 %v2778, 64
    %v2782 = vpop.permute.xlu0 %2781
    %v2784 = vmul.f32 %v2777, %v2782
    %2786 = vrot.lane.b32.xlu0 %v2784, 32
    %v2787 = vpop.permute.xlu0 %2786
    %v2789 = vadd.f32 %v2779, %v2787
    %v2790 = vtanh.pop %v2789
    %2792 = vrot.lane.b32.xlu0 %v2790, 64
    %v2793 = vpop.permute.xlu0 %2792
    %v2795 = vmul.f32 %v2777, %v2793
    %2797 = vrot.lane.b32.xlu0 %v2795, 32
    %v2798 = vpop.permute.xlu0 %2797
    %s2800 = scalar_lea.vmem [#allocation3], 12
    %2801 = vst.msk [vmem:[%s2800] sm:$0xf] %vm66, %v2798
    %v2802 = vld [vmem:[%s6] sm:$0xff]
    %v2803 = vld [vmem:[%s6 + $0x8] sm:$0xff]
    %v2804 = vld [vmem:[%s6 + $0x10] sm:$0xff]
    %v2805 = vld [vmem:[%s6 + $0x18] sm:$0xff]
    %v2806 = vsel %vm1814, %v2798, 0
    %2808 = vmatprep.subr.mxu0 0.0
    %2809 = vmatpush1.msra.mxu0 %v2802
    %2810 = vmatprep.subr.mxu0 0.0
    %2811 = vmatpush1.msra.mxu0 %v2803
    %2812 = vmatprep.subr.mxu0 0.0
    %2813 = vmatpush1.msra.mxu0 %v2804
    %2814 = vmatprep.subr.mxu0 0.0
    %2815 = vmatpush1.msra.mxu0 %v2805
    %2816 = vmatprep.subr.mxu0 0.0
    %2817 = vmatpush1.msra.mxu0 0.0
    %2818 = vmatprep.subr.mxu0 0.0
    %2819 = vmatpush1.msra.mxu0 0.0
    %2820 = vmatprep.subr.mxu0 0.0
    %2821 = vmatpush1.msra.mxu0 0.0
    %2822 = vmatprep.subr.mxu0 0.0
    %2823 = vmatpush1.msra.mxu0 0.0
    %2824 = vmatprep.subr.mxu0 0.0
    %2825 = vmatpush1.msra.mxu0 0.0
    %2826 = vmatprep.subr.mxu0 0.0
    %2827 = vmatpush1.msra.mxu0 0.0
    %2828 = vmatprep.subr.mxu0 0.0
    %2829 = vmatpush1.msra.mxu0 0.0
    %2830 = vmatprep.subr.mxu0 0.0
    %2831 = vmatpush1.msra.mxu0 0.0
    %2832 = vmatprep.subr.mxu0 0.0
    %2833 = vmatpush1.msra.mxu0 0.0
    %2834 = vmatprep.subr.mxu0 0.0
    %2835 = vmatpush1.msra.mxu0 0.0
    %2836 = vmatprep.subr.mxu0 0.0
    %2837 = vmatpush1.msra.mxu0 0.0
    %2838 = vmatprep.subr.mxu0 0.0
    %2839 = vmatpush1.msra.mxu0 0.0
    %2840 = vmatprep.subr.mxu0 0.0
    %2841 = vmatpush1.msra.mxu0 0.0
    %2842 = vmatprep.subr.mxu0 0.0
    %2843 = vmatpush1.msra.mxu0 0.0
    %2844 = vmatprep.subr.mxu0 0.0
    %2845 = vmatpush1.msra.mxu0 0.0
    %2846 = vmatprep.subr.mxu0 0.0
    %2847 = vmatpush1.msra.mxu0 0.0
    %2848 = vmatprep.subr.mxu0 0.0
    %2849 = vmatpush1.msra.mxu0 0.0
    %2850 = vmatprep.subr.mxu0 0.0
    %2851 = vmatpush1.msra.mxu0 0.0
    %2852 = vmatprep.subr.mxu0 0.0
    %2853 = vmatpush1.msra.mxu0 0.0
    %2854 = vmatprep.subr.mxu0 0.0
    %2855 = vmatpush1.msra.mxu0 0.0
    %2856 = vmatprep.subr.mxu0 0.0
    %2857 = vmatpush1.msra.mxu0 0.0
    %2858 = vmatprep.subr.mxu0 0.0
    %2859 = vmatpush1.msra.mxu0 0.0
    %2860 = vmatprep.subr.mxu0 0.0
    %2861 = vmatpush1.msra.mxu0 0.0
    %2862 = vmatprep.subr.mxu0 0.0
    %2863 = vmatpush1.msra.mxu0 0.0
    %2864 = vmatprep.subr.mxu0 0.0
    %2865 = vmatpush1.msra.mxu0 0.0
    %2866 = vmatprep.subr.mxu0 0.0
    %2867 = vmatpush1.msra.mxu0 0.0
    %2868 = vmatprep.subr.mxu0 0.0
    %2869 = vmatpush1.msra.mxu0 0.0
    %2870 = vmatprep.subr.mxu0 0.0
    %2871 = vmatpush1.msra.mxu0 0.0
    %2872 = vmatprep.mubr.f32.mxu0 0.0
    %2873 = vmatmul.mubr.f32.gmra.mrb[0].mxu0 %v2806
    %v2874 = vpop.f32.mrb[0].mxu0
    %v2875 = vadd.f32 %v1884, %v2874
    %v2876 = vpop.f32.mrb[0].mxu0
    %2877 = vdwg.mxu0
    %v2878 = vmax.f32 %v2875, 0.0
    %2879 = vst.msk [vmem:[#allocation2] sm:$0xf] %vm66, %v2878
    %2880 = vrot.lane.b32.xlu0 %v2688, 64
    %v2881 = vpop.permute.xlu0 %2880
    %2883 = vst.msk [vmem:[#allocation2] sm:$0xf] %vm72, %v2881
    %v2884 = vld [vmem:[#allocation2] sm:$0xf]
    %v2886 = vsel %vm81, %v2884, 0
    %2888 = vmatprep.subr.mxu0 0.0
    %2889 = vmatpush1.msra.mxu0 %v1887
    %2890 = vmatprep.subr.mxu0 0.0
    %2891 = vmatpush1.msra.mxu0 %v1888
    %2892 = vmatprep.subr.mxu0 0.0
    %2893 = vmatpush1.msra.mxu0 %v1889
    %2894 = vmatprep.subr.mxu0 0.0
    %2895 = vmatpush1.msra.mxu0 %v1890
    %2896 = vmatprep.subr.mxu0 0.0
    %2897 = vmatpush1.msra.mxu0 %v1891
    %2898 = vmatprep.subr.mxu0 0.0
    %2899 = vmatpush1.msra.mxu0 %v1892
    %2900 = vmatprep.subr.mxu0 0.0
    %2901 = vmatpush1.msra.mxu0 %v1893
    %2902 = vmatprep.subr.mxu0 0.0
    %2903 = vmatpush1.msra.mxu0 %v1894
    %2904 = vmatprep.subr.mxu0 0.0
    %2905 = vmatpush1.msra.mxu0 0.0
    %2906 = vmatprep.subr.mxu0 0.0
    %2907 = vmatpush1.msra.mxu0 0.0
    %2908 = vmatprep.subr.mxu0 0.0
    %2909 = vmatpush1.msra.mxu0 0.0
    %2910 = vmatprep.subr.mxu0 0.0
    %2911 = vmatpush1.msra.mxu0 0.0
    %2912 = vmatprep.subr.mxu0 0.0
    %2913 = vmatpush1.msra.mxu0 0.0
    %2914 = vmatprep.subr.mxu0 0.0
    %2915 = vmatpush1.msra.mxu0 0.0
    %2916 = vmatprep.subr.mxu0 0.0
    %2917 = vmatpush1.msra.mxu0 0.0
    %2918 = vmatprep.subr.mxu0 0.0
    %2919 = vmatpush1.msra.mxu0 0.0
    %2920 = vmatprep.subr.mxu0 0.0
    %2921 = vmatpush1.msra.mxu0 0.0
    %2922 = vmatprep.subr.mxu0 0.0
    %2923 = vmatpush1.msra.mxu0 0.0
    %2924 = vmatprep.subr.mxu0 0.0
    %2925 = vmatpush1.msra.mxu0 0.0
    %2926 = vmatprep.subr.mxu0 0.0
    %2927 = vmatpush1.msra.mxu0 0.0
    %2928 = vmatprep.subr.mxu0 0.0
    %2929 = vmatpush1.msra.mxu0 0.0
    %2930 = vmatprep.subr.mxu0 0.0
    %2931 = vmatpush1.msra.mxu0 0.0
    %2932 = vmatprep.subr.mxu0 0.0
    %2933 = vmatpush1.msra.mxu0 0.0
    %2934 = vmatprep.subr.mxu0 0.0
    %2935 = vmatpush1.msra.mxu0 0.0
    %2936 = vmatprep.subr.mxu0 0.0
    %2937 = vmatpush1.msra.mxu0 0.0
    %2938 = vmatprep.subr.mxu0 0.0
    %2939 = vmatpush1.msra.mxu0 0.0
    %2940 = vmatprep.subr.mxu0 0.0
    %2941 = vmatpush1.msra.mxu0 0.0
    %2942 = vmatprep.subr.mxu0 0.0
    %2943 = vmatpush1.msra.mxu0 0.0
    %2944 = vmatprep.subr.mxu0 0.0
    %2945 = vmatpush1.msra.mxu0 0.0
    %2946 = vmatprep.subr.mxu0 0.0
    %2947 = vmatpush1.msra.mxu0 0.0
    %2948 = vmatprep.subr.mxu0 0.0
    %2949 = vmatpush1.msra.mxu0 0.0
    %2950 = vmatprep.subr.mxu0 0.0
    %2951 = vmatpush1.msra.mxu0 0.0
    %2952 = vmatprep.mubr.f32.mxu0 0.0
    %2953 = vmatmul.mubr.f32.gmra.mrb[0].mxu0 %v2886
    %v2954 = vpop.f32.mrb[0].mxu0
    %v2955 = vadd.f32 %v1997, %v2954
    %v2956 = vpop.f32.mrb[0].mxu0
    %2957 = vdwg.mxu0
    %v2958 = vxor.u32 %v2955, 2147483648
    %v2959 = vmul.f32 %v2958, 1.442695
    %v2960 = vpow.pop %v2959
    %v2961 = vadd.f32 %v2960, 1.0
    %v2962 = vrcp.pop %v2961
    %v2963 = vmul.f32 1.0, %v2962
    %v2964 = vtanh.pop %v2955
    %v2965 = vmul.f32 %v2963, %v2682
    %2967 = vrot.lane.b32.xlu0 %v2964, 64
    %v2968 = vpop.permute.xlu0 %2967
    %v2970 = vmul.f32 %v2963, %v2968
    %2972 = vrot.lane.b32.xlu0 %v2970, 32
    %v2973 = vpop.permute.xlu0 %2972
    %v2975 = vadd.f32 %v2965, %v2973
    %v2976 = vtanh.pop %v2975
    %2978 = vrot.lane.b32.xlu0 %v2976, 64
    %v2979 = vpop.permute.xlu0 %2978
    %v2981 = vmul.f32 %v2963, %v2979
    %2983 = vrot.lane.b32.xlu0 %v2981, 32
    %v2984 = vpop.permute.xlu0 %2983
    %2986 = vst.msk [vmem:[#allocation2] sm:$0xf] %vm66, %v2984
    %2987 = vrot.lane.b32.xlu0 %v2795, 64
    %v2988 = vpop.permute.xlu0 %2987
    %2990 = vst.msk [vmem:[#allocation2] sm:$0xf] %vm72, %v2988
    %v2991 = vld [vmem:[#allocation2] sm:$0xf]
    %v2993 = vsel %vm81, %v2991, 0
    %2995 = vmatprep.subr.mxu0 0.0
    %2996 = vmatpush1.msra.mxu0 %v1896
    %2997 = vmatprep.subr.mxu0 0.0
    %2998 = vmatpush1.msra.mxu0 %v1897
    %2999 = vmatprep.subr.mxu0 0.0
    %3000 = vmatpush1.msra.mxu0 %v1898
    %3001 = vmatprep.subr.mxu0 0.0
    %3002 = vmatpush1.msra.mxu0 %v1899
    %3003 = vmatprep.subr.mxu0 0.0
    %3004 = vmatpush1.msra.mxu0 %v1900
    %3005 = vmatprep.subr.mxu0 0.0
    %3006 = vmatpush1.msra.mxu0 %v1901
    %3007 = vmatprep.subr.mxu0 0.0
    %3008 = vmatpush1.msra.mxu0 %v1902
    %3009 = vmatprep.subr.mxu0 0.0
    %3010 = vmatpush1.msra.mxu0 %v1903
    %3011 = vmatprep.subr.mxu0 0.0
    %3012 = vmatpush1.msra.mxu0 0.0
    %3013 = vmatprep.subr.mxu0 0.0
    %3014 = vmatpush1.msra.mxu0 0.0
    %3015 = vmatprep.subr.mxu0 0.0
    %3016 = vmatpush1.msra.mxu0 0.0
    %3017 = vmatprep.subr.mxu0 0.0
    %3018 = vmatpush1.msra.mxu0 0.0
    %3019 = vmatprep.subr.mxu0 0.0
    %3020 = vmatpush1.msra.mxu0 0.0
    %3021 = vmatprep.subr.mxu0 0.0
    %3022 = vmatpush1.msra.mxu0 0.0
    %3023 = vmatprep.subr.mxu0 0.0
    %3024 = vmatpush1.msra.mxu0 0.0
    %3025 = vmatprep.subr.mxu0 0.0
    %3026 = vmatpush1.msra.mxu0 0.0
    %3027 = vmatprep.subr.mxu0 0.0
    %3028 = vmatpush1.msra.mxu0 0.0
    %3029 = vmatprep.subr.mxu0 0.0
    %3030 = vmatpush1.msra.mxu0 0.0
    %3031 = vmatprep.subr.mxu0 0.0
    %3032 = vmatpush1.msra.mxu0 0.0
    %3033 = vmatprep.subr.mxu0 0.0
    %3034 = vmatpush1.msra.mxu0 0.0
    %3035 = vmatprep.subr.mxu0 0.0
    %3036 = vmatpush1.msra.mxu0 0.0
    %3037 = vmatprep.subr.mxu0 0.0
    %3038 = vmatpush1.msra.mxu0 0.0
    %3039 = vmatprep.subr.mxu0 0.0
    %3040 = vmatpush1.msra.mxu0 0.0
    %3041 = vmatprep.subr.mxu0 0.0
    %3042 = vmatpush1.msra.mxu0 0.0
    %3043 = vmatprep.subr.mxu0 0.0
    %3044 = vmatpush1.msra.mxu0 0.0
    %3045 = vmatprep.subr.mxu0 0.0
    %3046 = vmatpush1.msra.mxu0 0.0
    %3047 = vmatprep.subr.mxu0 0.0
    %3048 = vmatpush1.msra.mxu0 0.0
    %3049 = vmatprep.subr.mxu0 0.0
    %3050 = vmatpush1.msra.mxu0 0.0
    %3051 = vmatprep.subr.mxu0 0.0
    %3052 = vmatpush1.msra.mxu0 0.0
    %3053 = vmatprep.subr.mxu0 0.0
    %3054 = vmatpush1.msra.mxu0 0.0
    %3055 = vmatprep.subr.mxu0 0.0
    %3056 = vmatpush1.msra.mxu0 0.0
    %3057 = vmatprep.subr.mxu0 0.0
    %3058 = vmatpush1.msra.mxu0 0.0
    %3059 = vmatprep.mubr.f32.mxu0 0.0
    %3060 = vmatmul.mubr.f32.gmra.mrb[0].mxu0 %v2993
    %v3061 = vpop.f32.mrb[0].mxu0
    %v3062 = vadd.f32 %v2111, %v3061
    %v3063 = vpop.f32.mrb[0].mxu0
    %3064 = vdwg.mxu0
    %v3065 = vxor.u32 %v3062, 2147483648
    %v3066 = vmul.f32 %v3065, 1.442695
    %v3067 = vpow.pop %v3066
    %v3068 = vadd.f32 %v3067, 1.0
    %v3069 = vrcp.pop %v3068
    %v3070 = vmul.f32 1.0, %v3069
    %v3071 = vtanh.pop %v3062
    %v3072 = vmul.f32 %v3070, %v2789
    %3074 = vrot.lane.b32.xlu0 %v3071, 64
    %v3075 = vpop.permute.xlu0 %3074
    %v3077 = vmul.f32 %v3070, %v3075
    %3079 = vrot.lane.b32.xlu0 %v3077, 32
    %v3080 = vpop.permute.xlu0 %3079
    %v3082 = vadd.f32 %v3072, %v3080
    %v3083 = vtanh.pop %v3082
    %3085 = vrot.lane.b32.xlu0 %v3083, 64
    %v3086 = vpop.permute.xlu0 %3085
    %v3088 = vmul.f32 %v3070, %v3086
    %3090 = vrot.lane.b32.xlu0 %v3088, 32
    %v3091 = vpop.permute.xlu0 %3090
    %s3093 = scalar_lea.vmem [#allocation3], 16
    %3094 = vst.msk [vmem:[%s3093] sm:$0xf] %vm66, %v3091
    %v3095 = vld [vmem:[%s6] sm:$0xff]
    %v3096 = vld [vmem:[%s6 + $0x8] sm:$0xff]
    %v3097 = vld [vmem:[%s6 + $0x10] sm:$0xff]
    %v3098 = vld [vmem:[%s6 + $0x18] sm:$0xff]
    %v3099 = vsel %vm1814, %v3091, 0
    %3101 = vmatprep.subr.mxu0 0.0
    %3102 = vmatpush1.msra.mxu0 %v3095
    %3103 = vmatprep.subr.mxu0 0.0
    %3104 = vmatpush1.msra.mxu0 %v3096
    %3105 = vmatprep.subr.mxu0 0.0
    %3106 = vmatpush1.msra.mxu0 %v3097
    %3107 = vmatprep.subr.mxu0 0.0
    %3108 = vmatpush1.msra.mxu0 %v3098
    %3109 = vmatprep.subr.mxu0 0.0
    %3110 = vmatpush1.msra.mxu0 0.0
    %3111 = vmatprep.subr.mxu0 0.0
    %3112 = vmatpush1.msra.mxu0 0.0
    %3113 = vmatprep.subr.mxu0 0.0
    %3114 = vmatpush1.msra.mxu0 0.0
    %3115 = vmatprep.subr.mxu0 0.0
    %3116 = vmatpush1.msra.mxu0 0.0
    %3117 = vmatprep.subr.mxu0 0.0
    %3118 = vmatpush1.msra.mxu0 0.0
    %3119 = vmatprep.subr.mxu0 0.0
    %3120 = vmatpush1.msra.mxu0 0.0
    %3121 = vmatprep.subr.mxu0 0.0
    %3122 = vmatpush1.msra.mxu0 0.0
    %3123 = vmatprep.subr.mxu0 0.0
    %3124 = vmatpush1.msra.mxu0 0.0
    %3125 = vmatprep.subr.mxu0 0.0
    %3126 = vmatpush1.msra.mxu0 0.0
    %3127 = vmatprep.subr.mxu0 0.0
    %3128 = vmatpush1.msra.mxu0 0.0
    %3129 = vmatprep.subr.mxu0 0.0
    %3130 = vmatpush1.msra.mxu0 0.0
    %3131 = vmatprep.subr.mxu0 0.0
    %3132 = vmatpush1.msra.mxu0 0.0
    %3133 = vmatprep.subr.mxu0 0.0
    %3134 = vmatpush1.msra.mxu0 0.0
    %3135 = vmatprep.subr.mxu0 0.0
    %3136 = vmatpush1.msra.mxu0 0.0
    %3137 = vmatprep.subr.mxu0 0.0
    %3138 = vmatpush1.msra.mxu0 0.0
    %3139 = vmatprep.subr.mxu0 0.0
    %3140 = vmatpush1.msra.mxu0 0.0
    %3141 = vmatprep.subr.mxu0 0.0
    %3142 = vmatpush1.msra.mxu0 0.0
    %3143 = vmatprep.subr.mxu0 0.0
    %3144 = vmatpush1.msra.mxu0 0.0
    %3145 = vmatprep.subr.mxu0 0.0
    %3146 = vmatpush1.msra.mxu0 0.0
    %3147 = vmatprep.subr.mxu0 0.0
    %3148 = vmatpush1.msra.mxu0 0.0
    %3149 = vmatprep.subr.mxu0 0.0
    %3150 = vmatpush1.msra.mxu0 0.0
    %3151 = vmatprep.subr.mxu0 0.0
    %3152 = vmatpush1.msra.mxu0 0.0
    %3153 = vmatprep.subr.mxu0 0.0
    %3154 = vmatpush1.msra.mxu0 0.0
    %3155 = vmatprep.subr.mxu0 0.0
    %3156 = vmatpush1.msra.mxu0 0.0
    %3157 = vmatprep.subr.mxu0 0.0
    %3158 = vmatpush1.msra.mxu0 0.0
    %3159 = vmatprep.subr.mxu0 0.0
    %3160 = vmatpush1.msra.mxu0 0.0
    %3161 = vmatprep.subr.mxu0 0.0
    %3162 = vmatpush1.msra.mxu0 0.0
    %3163 = vmatprep.subr.mxu0 0.0
    %3164 = vmatpush1.msra.mxu0 0.0
    %3165 = vmatprep.mubr.f32.mxu0 0.0
    %3166 = vmatmul.mubr.f32.gmra.mrb[0].mxu0 %v3099
    %v3167 = vpop.f32.mrb[0].mxu0
    %v3168 = vadd.f32 %v1884, %v3167
    %v3169 = vpop.f32.mrb[0].mxu0
    %3170 = vdwg.mxu0
    %v3171 = vmax.f32 %v3168, 0.0
    %3172 = vst.msk [vmem:[#allocation2] sm:$0xf] %vm66, %v3171
    %3173 = vrot.lane.b32.xlu0 %v2981, 64
    %v3174 = vpop.permute.xlu0 %3173
    %3176 = vst.msk [vmem:[#allocation2] sm:$0xf] %vm72, %v3174
    %v3177 = vld [vmem:[#allocation2] sm:$0xf]
    %v3179 = vsel %vm81, %v3177, 0
    %3181 = vmatprep.subr.mxu0 0.0
    %3182 = vmatpush1.msra.mxu0 %v1887
    %3183 = vmatprep.subr.mxu0 0.0
    %3184 = vmatpush1.msra.mxu0 %v1888
    %3185 = vmatprep.subr.mxu0 0.0
    %3186 = vmatpush1.msra.mxu0 %v1889
    %3187 = vmatprep.subr.mxu0 0.0
    %3188 = vmatpush1.msra.mxu0 %v1890
    %3189 = vmatprep.subr.mxu0 0.0
    %3190 = vmatpush1.msra.mxu0 %v1891
    %3191 = vmatprep.subr.mxu0 0.0
    %3192 = vmatpush1.msra.mxu0 %v1892
    %3193 = vmatprep.subr.mxu0 0.0
    %3194 = vmatpush1.msra.mxu0 %v1893
    %3195 = vmatprep.subr.mxu0 0.0
    %3196 = vmatpush1.msra.mxu0 %v1894
    %3197 = vmatprep.subr.mxu0 0.0
    %3198 = vmatpush1.msra.mxu0 0.0
    %3199 = vmatprep.subr.mxu0 0.0
    %3200 = vmatpush1.msra.mxu0 0.0
    %3201 = vmatprep.subr.mxu0 0.0
    %3202 = vmatpush1.msra.mxu0 0.0
    %3203 = vmatprep.subr.mxu0 0.0
    %3204 = vmatpush1.msra.mxu0 0.0
    %3205 = vmatprep.subr.mxu0 0.0
    %3206 = vmatpush1.msra.mxu0 0.0
    %3207 = vmatprep.subr.mxu0 0.0
    %3208 = vmatpush1.msra.mxu0 0.0
    %3209 = vmatprep.subr.mxu0 0.0
    %3210 = vmatpush1.msra.mxu0 0.0
    %3211 = vmatprep.subr.mxu0 0.0
    %3212 = vmatpush1.msra.mxu0 0.0
    %3213 = vmatprep.subr.mxu0 0.0
    %3214 = vmatpush1.msra.mxu0 0.0
    %3215 = vmatprep.subr.mxu0 0.0
    %3216 = vmatpush1.msra.mxu0 0.0
    %3217 = vmatprep.subr.mxu0 0.0
    %3218 = vmatpush1.msra.mxu0 0.0
    %3219 = vmatprep.subr.mxu0 0.0
    %3220 = vmatpush1.msra.mxu0 0.0
    %3221 = vmatprep.subr.mxu0 0.0
    %3222 = vmatpush1.msra.mxu0 0.0
    %3223 = vmatprep.subr.mxu0 0.0
    %3224 = vmatpush1.msra.mxu0 0.0
    %3225 = vmatprep.subr.mxu0 0.0
    %3226 = vmatpush1.msra.mxu0 0.0
    %3227 = vmatprep.subr.mxu0 0.0
    %3228 = vmatpush1.msra.mxu0 0.0
    %3229 = vmatprep.subr.mxu0 0.0
    %3230 = vmatpush1.msra.mxu0 0.0
    %3231 = vmatprep.subr.mxu0 0.0
    %3232 = vmatpush1.msra.mxu0 0.0
    %3233 = vmatprep.subr.mxu0 0.0
    %3234 = vmatpush1.msra.mxu0 0.0
    %3235 = vmatprep.subr.mxu0 0.0
    %3236 = vmatpush1.msra.mxu0 0.0
    %3237 = vmatprep.subr.mxu0 0.0
    %3238 = vmatpush1.msra.mxu0 0.0
    %3239 = vmatprep.subr.mxu0 0.0
    %3240 = vmatpush1.msra.mxu0 0.0
    %3241 = vmatprep.subr.mxu0 0.0
    %3242 = vmatpush1.msra.mxu0 0.0
    %3243 = vmatprep.subr.mxu0 0.0
    %3244 = vmatpush1.msra.mxu0 0.0
    %3245 = vmatprep.mubr.f32.mxu0 0.0
    %3246 = vmatmul.mubr.f32.gmra.mrb[0].mxu0 %v3179
    %v3247 = vpop.f32.mrb[0].mxu0
    %v3248 = vadd.f32 %v1997, %v3247
    %v3249 = vpop.f32.mrb[0].mxu0
    %3250 = vdwg.mxu0
    %v3251 = vxor.u32 %v3248, 2147483648
    %v3252 = vmul.f32 %v3251, 1.442695
    %v3253 = vpow.pop %v3252
    %v3254 = vadd.f32 %v3253, 1.0
    %v3255 = vrcp.pop %v3254
    %v3256 = vmul.f32 1.0, %v3255
    %v3257 = vtanh.pop %v3248
    %v3258 = vmul.f32 %v3256, %v2975
    %3260 = vrot.lane.b32.xlu0 %v3257, 64
    %v3261 = vpop.permute.xlu0 %3260
    %v3263 = vmul.f32 %v3256, %v3261
    %3265 = vrot.lane.b32.xlu0 %v3263, 32
    %v3266 = vpop.permute.xlu0 %3265
    %v3268 = vadd.f32 %v3258, %v3266
    %v3269 = vtanh.pop %v3268
    %3271 = vrot.lane.b32.xlu0 %v3269, 64
    %v3272 = vpop.permute.xlu0 %3271
    %v3274 = vmul.f32 %v3256, %v3272
    %3276 = vrot.lane.b32.xlu0 %v3274, 32
    %v3277 = vpop.permute.xlu0 %3276
    %3279 = vst.msk [vmem:[#allocation2] sm:$0xf] %vm66, %v3277
    %3280 = vrot.lane.b32.xlu0 %v3088, 64
    %v3281 = vpop.permute.xlu0 %3280
    %3283 = vst.msk [vmem:[#allocation2] sm:$0xf] %vm72, %v3281
    %v3284 = vld [vmem:[#allocation2] sm:$0xf]
    %v3286 = vsel %vm81, %v3284, 0
    %3288 = vmatprep.subr.mxu0 0.0
    %3289 = vmatpush1.msra.mxu0 %v1896
    %3290 = vmatprep.subr.mxu0 0.0
    %3291 = vmatpush1.msra.mxu0 %v1897
    %3292 = vmatprep.subr.mxu0 0.0
    %3293 = vmatpush1.msra.mxu0 %v1898
    %3294 = vmatprep.subr.mxu0 0.0
    %3295 = vmatpush1.msra.mxu0 %v1899
    %3296 = vmatprep.subr.mxu0 0.0
    %3297 = vmatpush1.msra.mxu0 %v1900
    %3298 = vmatprep.subr.mxu0 0.0
    %3299 = vmatpush1.msra.mxu0 %v1901
    %3300 = vmatprep.subr.mxu0 0.0
    %3301 = vmatpush1.msra.mxu0 %v1902
    %3302 = vmatprep.subr.mxu0 0.0
    %3303 = vmatpush1.msra.mxu0 %v1903
    %3304 = vmatprep.subr.mxu0 0.0
    %3305 = vmatpush1.msra.mxu0 0.0
    %3306 = vmatprep.subr.mxu0 0.0
    %3307 = vmatpush1.msra.mxu0 0.0
    %3308 = vmatprep.subr.mxu0 0.0
    %3309 = vmatpush1.msra.mxu0 0.0
    %3310 = vmatprep.subr.mxu0 0.0
    %3311 = vmatpush1.msra.mxu0 0.0
    %3312 = vmatprep.subr.mxu0 0.0
    %3313 = vmatpush1.msra.mxu0 0.0
    %3314 = vmatprep.subr.mxu0 0.0
    %3315 = vmatpush1.msra.mxu0 0.0
    %3316 = vmatprep.subr.mxu0 0.0
    %3317 = vmatpush1.msra.mxu0 0.0
    %3318 = vmatprep.subr.mxu0 0.0
    %3319 = vmatpush1.msra.mxu0 0.0
    %3320 = vmatprep.subr.mxu0 0.0
    %3321 = vmatpush1.msra.mxu0 0.0
    %3322 = vmatprep.subr.mxu0 0.0
    %3323 = vmatpush1.msra.mxu0 0.0
    %3324 = vmatprep.subr.mxu0 0.0
    %3325 = vmatpush1.msra.mxu0 0.0
    %3326 = vmatprep.subr.mxu0 0.0
    %3327 = vmatpush1.msra.mxu0 0.0
    %3328 = vmatprep.subr.mxu0 0.0
    %3329 = vmatpush1.msra.mxu0 0.0
    %3330 = vmatprep.subr.mxu0 0.0
    %3331 = vmatpush1.msra.mxu0 0.0
    %3332 = vmatprep.subr.mxu0 0.0
    %3333 = vmatpush1.msra.mxu0 0.0
    %3334 = vmatprep.subr.mxu0 0.0
    %3335 = vmatpush1.msra.mxu0 0.0
    %3336 = vmatprep.subr.mxu0 0.0
    %3337 = vmatpush1.msra.mxu0 0.0
    %3338 = vmatprep.subr.mxu0 0.0
    %3339 = vmatpush1.msra.mxu0 0.0
    %3340 = vmatprep.subr.mxu0 0.0
    %3341 = vmatpush1.msra.mxu0 0.0
    %3342 = vmatprep.subr.mxu0 0.0
    %3343 = vmatpush1.msra.mxu0 0.0
    %3344 = vmatprep.subr.mxu0 0.0
    %3345 = vmatpush1.msra.mxu0 0.0
    %3346 = vmatprep.subr.mxu0 0.0
    %3347 = vmatpush1.msra.mxu0 0.0
    %3348 = vmatprep.subr.mxu0 0.0
    %3349 = vmatpush1.msra.mxu0 0.0
    %3350 = vmatprep.subr.mxu0 0.0
    %3351 = vmatpush1.msra.mxu0 0.0
    %3352 = vmatprep.mubr.f32.mxu0 0.0
    %3353 = vmatmul.mubr.f32.gmra.mrb[0].mxu0 %v3286
    %v3354 = vpop.f32.mrb[0].mxu0
    %v3355 = vadd.f32 %v2111, %v3354
    %v3356 = vpop.f32.mrb[0].mxu0
    %3357 = vdwg.mxu0
    %v3358 = vxor.u32 %v3355, 2147483648
    %v3359 = vmul.f32 %v3358, 1.442695
    %v3360 = vpow.pop %v3359
    %v3361 = vadd.f32 %v3360, 1.0
    %v3362 = vrcp.pop %v3361
    %v3363 = vmul.f32 1.0, %v3362
    %v3364 = vtanh.pop %v3355
    %v3365 = vmul.f32 %v3363, %v3082
    %3367 = vrot.lane.b32.xlu0 %v3364, 64
    %v3368 = vpop.permute.xlu0 %3367
    %v3370 = vmul.f32 %v3363, %v3368
    %3372 = vrot.lane.b32.xlu0 %v3370, 32
    %v3373 = vpop.permute.xlu0 %3372
    %v3375 = vadd.f32 %v3365, %v3373
    %v3376 = vtanh.pop %v3375
    %3378 = vrot.lane.b32.xlu0 %v3376, 64
    %v3379 = vpop.permute.xlu0 %3378
    %v3381 = vmul.f32 %v3363, %v3379
    %3383 = vrot.lane.b32.xlu0 %v3381, 32
    %v3384 = vpop.permute.xlu0 %3383
    %s3386 = scalar_lea.vmem [#allocation3], 20
    %3387 = vst.msk [vmem:[%s3386] sm:$0xf] %vm66, %v3384
    // Predicated region
    $region46: #{seq2seq_forward.1} parent=1 // pred_check
      _
    $region47: #{seq2seq_forward.1} parent=1 // pred_check_branch
      %3389 = sbr.rel (0) target = $region49
    $region48: #{seq2seq_forward.1} parent=1 // pred_region
      %s3391 = ssub.s32 384, 384
      %3392 = vsyncadd [#allocation4], %s3391
      %s3393 = sshll.u32 [#allocation3], 4
      %s3394 = int_to_ptr.vmem [resolvable:$true] %s3393
      %3399 = dma.vmem_to_hbm [thread:$0]  %s3394, 384, %s11, [#allocation4], 64, 64, 4
    $region49: #{seq2seq_forward.1} parent=1 // pred_fallthru
      _
    // Predicated region
    $region50: #{seq2seq_forward.1} parent=1 // pred_check
      _
    $region51: #{seq2seq_forward.1} parent=1 // pred_check_branch
      %3401 = sbr.rel (0) target = $region53
    $region52: #{seq2seq_forward.1} parent=1 // pred_region
      %3402 = dma.done [#allocation4], 384
    $region53: #{seq2seq_forward.1} parent=1 // pred_fallthru
      _
    %3403 = vsyncpa [#allocation4], 1

</llo_original>
